<compile_context>
chip_gen: v7x
topology: tpu7x:2x2x1
jax: 0.10.0
libtpu: 0.0.40
codegen_flags: <defaults>
</compile_context>

<pallas_src>
import functools

import jax
import jax.numpy as jnp
from jax.experimental import pallas as pl
from jax.experimental.pallas import tpu as pltpu


def _layer_norm(x, gamma, beta, eps=1e-5):
    mu = jnp.mean(x, axis=-1, keepdims=True)
    var = jnp.mean((x - mu) ** 2, axis=-1, keepdims=True)
    return (x - mu) * jax.lax.rsqrt(var + eps) * gamma + beta


# ---------------------------------------------------------------------------
# Fused encoder kernel: all layers, attention + FFN + LayerNorms, one block
# of TB batch elements per grid step.
# ---------------------------------------------------------------------------
def encoder_kernel(h_ref, wq_ref, wk_ref, wv_ref, wo_ref, ab_ref,
                   w1_ref, b1_ref, w2_ref, vecs_ref, o_ref,
                   *, nb_heads, nb_layers, use_bf16_matmul):
    f32 = jnp.float32
    mm_dtype = jnp.bfloat16 if use_bf16_matmul else f32

    def mm(x, w):                      # 2-D dense matmul, f32 accumulate
        return jnp.dot(x.astype(mm_dtype), w.astype(mm_dtype),
                       preferred_element_type=f32)

    def bmm(eq, a, b):                 # batched (over TB) 3-D contraction
        return jnp.einsum(eq, a.astype(mm_dtype), b.astype(mm_dtype),
                          preferred_element_type=f32)

    tb, L, D = h_ref.shape
    hd = D // nb_heads
    scale = 1.0 / float(hd) ** 0.5

    # Shared attention weights: loaded once, reused by every layer.
    wq = wq_ref[...]
    wk = wk_ref[...]
    wv = wv_ref[...]
    wo = wo_ref[...]
    ab = ab_ref[...].astype(f32)                 # (4, D): [bq, bk, bv, bo]
    bq, bk, bv, bo = ab[0], ab[1], ab[2], ab[3]

    # Carry activations as a lane-parallel 2-D slab (TB*L, D).
    x2 = h_ref[...].astype(f32).reshape(tb * L, D)

    for l in range(nb_layers):
        vec = vecs_ref[l].astype(f32)            # (5, D): [b2, g1, b1n, g2, b2n]

        # ----- multi-head self-attention + residual + LayerNorm -----
        q = (mm(x2, wq) + bq) * scale            # scale folded into q once
        k = mm(x2, wk) + bk
        v = mm(x2, wv) + bv
        q3 = q.reshape(tb, L, D)
        k3 = k.reshape(tb, L, D)
        v3 = v.reshape(tb, L, D)

        # TODO(synk): SampledAtten's query-sampling approximation and its
        # attention_dropout (eval-mode identity) are not reproducible from the
        # given source; exact softmax attention (its target) is computed.
        proj = jnp.zeros((tb * L, D), f32)
        for hh in range(nb_heads):
            sl = slice(hh * hd, (hh + 1) * hd)
            qh, kh, vh = q3[:, :, sl], k3[:, :, sl], v3[:, :, sl]
            s = bmm('ble,bme->blm', qh, kh)                      # (tb, L, L)
            s = s - jnp.max(s, axis=-1, keepdims=True)
            p = jnp.exp(s)
            p = p * pl.reciprocal(jnp.sum(p, axis=-1, keepdims=True),
                                  approx=True)
            oh = bmm('blm,bme->ble', p, vh)                      # (tb, L, hd)
            # accumulate the output projection per head (== concat @ Wo)
            proj = proj + mm(oh.reshape(tb * L, hd), wo[sl, :])
        x2 = _layer_norm(x2 + proj + bo, vec[1], vec[2])

        # ----- FFN (linear2(relu(linear1))) + residual + LayerNorm -----
        z = jnp.maximum(mm(x2, w1_ref[l]) + b1_ref[l].astype(f32), 0.0)
        z = mm(z, w2_ref[l]) + vec[0]
        x2 = _layer_norm(x2 + z, vec[3], vec[4])

    o_ref[...] = x2.reshape(tb, L, D).astype(o_ref.dtype)


# ---------------------------------------------------------------------------
# Wrapper: single pallas_call, grid over batch blocks, weights VMEM-resident.
# ---------------------------------------------------------------------------
def tspformer_encoder(h, params, nb_heads, *, block_b=8, use_bf16_matmul=False):
    B, L, D = h.shape
    nb_layers = params["w1"].shape[0]
    tb = min(B, block_b)
    grid = (pl.cdiv(B, tb),)

    def full_spec(shape):
        nd = len(shape)
        return pl.BlockSpec(shape, lambda b, _nd=nd: (0,) * _nd)

    kern = functools.partial(encoder_kernel, nb_heads=nb_heads,
                             nb_layers=nb_layers,
                             use_bf16_matmul=use_bf16_matmul)

    weight_args = (params["wq"], params["wk"], params["wv"], params["wo"],
                   params["attn_b"], params["w1"], params["b1"],
                   params["w2"], params["vecs"])
    in_specs = [pl.BlockSpec((tb, L, D), lambda b: (b, 0, 0))]
    in_specs += [full_spec(a.shape) for a in weight_args]

    return pl.pallas_call(
        kern,
        out_shape=jax.ShapeDtypeStruct((B, L, D), h.dtype),
        grid=grid,
        in_specs=in_specs,
        out_specs=pl.BlockSpec((tb, L, D), lambda b: (b, 0, 0)),
        compiler_params=pltpu.CompilerParams(
            dimension_semantics=("parallel",)),
    )(h, *weight_args)


# ---------------------------------------------------------------------------
# Deterministic parameter construction + demo
# ---------------------------------------------------------------------------
def make_params(key, nb_layers, dim_emb, dim_ff):
    def lin(k, fan_in, fan_out):
        kw, kb = jax.random.split(k)
        w = jax.random.normal(kw, (fan_in, fan_out), jnp.float32) * (1.0 / fan_in) ** 0.5
        b = jax.random.normal(kb, (fan_out,), jnp.float32) * 0.02
        return w, b

    keys = jax.random.split(key, 4 + 2 * nb_layers)
    # Shared attention layer (same instance reused for every encoder layer).
    wq, bq = lin(keys[0], dim_emb, dim_emb)
    wk, bk = lin(keys[1], dim_emb, dim_emb)
    wv, bv = lin(keys[2], dim_emb, dim_emb)
    wo, bo = lin(keys[3], dim_emb, dim_emb)
    attn_b = jnp.stack([bq, bk, bv, bo], axis=0)              # (4, D)

    ones = jnp.ones((dim_emb,), jnp.float32)
    zeros = jnp.zeros((dim_emb,), jnp.float32)
    w1s, b1s, w2s, vecs = [], [], [], []
    for i in range(nb_layers):
        w1, b1 = lin(keys[4 + 2 * i], dim_emb, dim_ff)
        w2, b2 = lin(keys[5 + 2 * i], dim_ff, dim_emb)
        w1s.append(w1)
        b1s.append(b1[None, :])                               # (1, FF)
        w2s.append(w2)
        # [b2, ln1_gamma, ln1_beta, ln2_gamma, ln2_beta]
        vecs.append(jnp.stack([b2, ones, zeros, ones, zeros], axis=0))

    return dict(
        wq=wq, wk=wk, wv=wv, wo=wo, attn_b=attn_b,
        w1=jnp.stack(w1s),          # (NL, D, FF)
        b1=jnp.stack(b1s),          # (NL, 1, FF)
        w2=jnp.stack(w2s),          # (NL, FF, D)
        vecs=jnp.stack(vecs),       # (NL, 5, D)
    )


if __name__ == "__main__":
    nb_layers, dim_emb, nb_heads, dim_ff = 2, 32, 4, 64
    B, L = 2, 8

    key = jax.random.PRNGKey(0)
    k_h, k_p = jax.random.split(key)
    h = jax.random.normal(k_h, (B, L, dim_emb), jnp.float32)
    params = make_params(k_p, nb_layers, dim_emb, dim_ff)

    out = tspformer_encoder(h, params, nb_heads)
    out = jax.block_until_ready(out)
    assert out.shape == (B, L, dim_emb) and out.dtype == jnp.float32
    assert bool(jnp.all(jnp.isfinite(out)))
    print("KERNEL_OK")
</pallas_src>

<mosaic_0001>
module attributes {stable_mosaic.version = 11 : i64} {
  func.func @encoder_kernel(%arg0: i32, %arg1: memref<2x8x32xf32, #tpu.memory_space<vmem>>, %arg2: memref<32x32xf32, #tpu.memory_space<vmem>>, %arg3: memref<32x32xf32, #tpu.memory_space<vmem>>, %arg4: memref<32x32xf32, #tpu.memory_space<vmem>>, %arg5: memref<32x32xf32, #tpu.memory_space<vmem>>, %arg6: memref<4x32xf32, #tpu.memory_space<vmem>>, %arg7: memref<2x32x64xf32, #tpu.memory_space<vmem>>, %arg8: memref<2x1x64xf32, #tpu.memory_space<vmem>>, %arg9: memref<2x64x32xf32, #tpu.memory_space<vmem>>, %arg10: memref<2x5x32xf32, #tpu.memory_space<vmem>>, %arg11: memref<2x8x32xf32, #tpu.memory_space<vmem>>) attributes {dimension_semantics = [#tpu.dimension_semantics<parallel>], iteration_bounds = array<i64: 1>, scalar_prefetch = 0 : i64, scratch_operands = 0 : i64, tpu.core_type = #tpu.core_type<tc>, window_params = [{transform_indices = @transform_0, window_bounds = array<i64: 2, 8, 32>}, {pipeline_mode = #tpu.pipeline_mode<synchronous>, transform_indices = @transform_1, window_bounds = array<i64: 32, 32>}, {pipeline_mode = #tpu.pipeline_mode<synchronous>, transform_indices = @transform_2, window_bounds = array<i64: 32, 32>}, {pipeline_mode = #tpu.pipeline_mode<synchronous>, transform_indices = @transform_3, window_bounds = array<i64: 32, 32>}, {pipeline_mode = #tpu.pipeline_mode<synchronous>, transform_indices = @transform_4, window_bounds = array<i64: 32, 32>}, {pipeline_mode = #tpu.pipeline_mode<synchronous>, transform_indices = @transform_5, window_bounds = array<i64: 4, 32>}, {pipeline_mode = #tpu.pipeline_mode<synchronous>, transform_indices = @transform_6, window_bounds = array<i64: 2, 32, 64>}, {pipeline_mode = #tpu.pipeline_mode<synchronous>, transform_indices = @transform_7, window_bounds = array<i64: 2, 1, 64>}, {pipeline_mode = #tpu.pipeline_mode<synchronous>, transform_indices = @transform_8, window_bounds = array<i64: 2, 64, 32>}, {pipeline_mode = #tpu.pipeline_mode<synchronous>, transform_indices = @transform_9, window_bounds = array<i64: 2, 5, 32>}, {transform_indices = @transform_10, window_bounds = array<i64: 2, 8, 32>}]} {
    %c0 = arith.constant 0 : index
    %c0_0 = arith.constant 0 : index
    %0 = vector.load %arg2[%c0, %c0_0] : memref<32x32xf32, #tpu.memory_space<vmem>>, vector<32x32xf32>
    %c0_1 = arith.constant 0 : index
    %c0_2 = arith.constant 0 : index
    %1 = vector.load %arg3[%c0_1, %c0_2] : memref<32x32xf32, #tpu.memory_space<vmem>>, vector<32x32xf32>
    %c0_3 = arith.constant 0 : index
    %c0_4 = arith.constant 0 : index
    %2 = vector.load %arg4[%c0_3, %c0_4] : memref<32x32xf32, #tpu.memory_space<vmem>>, vector<32x32xf32>
    %c0_5 = arith.constant 0 : index
    %c0_6 = arith.constant 0 : index
    %3 = vector.load %arg5[%c0_5, %c0_6] : memref<32x32xf32, #tpu.memory_space<vmem>>, vector<32x32xf32>
    %c0_7 = arith.constant 0 : index
    %c0_8 = arith.constant 0 : index
    %4 = vector.load %arg6[%c0_7, %c0_8] : memref<4x32xf32, #tpu.memory_space<vmem>>, vector<4x32xf32>
    %5 = vector.extract_strided_slice %4 {offsets = [0, 0], sizes = [1, 32], strides = [1, 1]} : vector<4x32xf32> to vector<1x32xf32>
    %6 = vector.shape_cast %5 : vector<1x32xf32> to vector<32xf32>
    %7 = vector.extract_strided_slice %4 {offsets = [1, 0], sizes = [1, 32], strides = [1, 1]} : vector<4x32xf32> to vector<1x32xf32>
    %8 = vector.shape_cast %7 : vector<1x32xf32> to vector<32xf32>
    %9 = vector.extract_strided_slice %4 {offsets = [2, 0], sizes = [1, 32], strides = [1, 1]} : vector<4x32xf32> to vector<1x32xf32>
    %10 = vector.shape_cast %9 : vector<1x32xf32> to vector<32xf32>
    %11 = vector.extract_strided_slice %4 {offsets = [3, 0], sizes = [1, 32], strides = [1, 1]} : vector<4x32xf32> to vector<1x32xf32>
    %12 = vector.shape_cast %11 : vector<1x32xf32> to vector<32xf32>
    %c0_9 = arith.constant 0 : index
    %c0_10 = arith.constant 0 : index
    %c0_11 = arith.constant 0 : index
    %13 = vector.load %arg1[%c0_9, %c0_10, %c0_11] : memref<2x8x32xf32, #tpu.memory_space<vmem>>, vector<2x8x32xf32>
    %14 = vector.shape_cast %13 : vector<2x8x32xf32> to vector<16x32xf32>
    %c0_12 = arith.constant 0 : index
    %c0_13 = arith.constant 0 : index
    %c0_14 = arith.constant 0 : index
    %15 = vector.load %arg10[%c0_12, %c0_13, %c0_14] : memref<2x5x32xf32, #tpu.memory_space<vmem>>, vector<1x5x32xf32>
    %16 = vector.shape_cast %15 : vector<1x5x32xf32> to vector<5x32xf32>
    %cst = arith.constant dense<0.000000e+00> : vector<16x32xf32>
    %17 = tpu.matmul %14, %0, %cst {dimension_numbers = #tpu.dot_dimension_numbers<[1], [0], [0], [1], [0, 0, 1, 1], [], []>} : vector<16x32xf32>, vector<32x32xf32>, vector<16x32xf32> -> vector<16x32xf32>
    %18 = vector.shape_cast %6 : vector<32xf32> to vector<1x32xf32>
    %19 = vector.broadcast %18 : vector<1x32xf32> to vector<16x32xf32>
    %20 = arith.addf %17, %19 : vector<16x32xf32>
    %cst_15 = arith.constant 0.353553385 : f32
    %21 = vector.broadcast %cst_15 : f32 to vector<16x32xf32>
    %22 = arith.mulf %20, %21 : vector<16x32xf32>
    %cst_16 = arith.constant dense<0.000000e+00> : vector<16x32xf32>
    %23 = tpu.matmul %14, %1, %cst_16 {dimension_numbers = #tpu.dot_dimension_numbers<[1], [0], [0], [1], [0, 0, 1, 1], [], []>} : vector<16x32xf32>, vector<32x32xf32>, vector<16x32xf32> -> vector<16x32xf32>
    %24 = vector.shape_cast %8 : vector<32xf32> to vector<1x32xf32>
    %25 = vector.broadcast %24 : vector<1x32xf32> to vector<16x32xf32>
    %26 = arith.addf %23, %25 : vector<16x32xf32>
    %cst_17 = arith.constant dense<0.000000e+00> : vector<16x32xf32>
    %27 = tpu.matmul %14, %2, %cst_17 {dimension_numbers = #tpu.dot_dimension_numbers<[1], [0], [0], [1], [0, 0, 1, 1], [], []>} : vector<16x32xf32>, vector<32x32xf32>, vector<16x32xf32> -> vector<16x32xf32>
    %28 = vector.shape_cast %10 : vector<32xf32> to vector<1x32xf32>
    %29 = vector.broadcast %28 : vector<1x32xf32> to vector<16x32xf32>
    %30 = arith.addf %27, %29 : vector<16x32xf32>
    %31 = vector.shape_cast %22 : vector<16x32xf32> to vector<2x8x32xf32>
    %32 = vector.shape_cast %26 : vector<16x32xf32> to vector<2x8x32xf32>
    %33 = vector.shape_cast %30 : vector<16x32xf32> to vector<2x8x32xf32>
    %cst_18 = arith.constant 0.000000e+00 : f32
    %34 = vector.broadcast %cst_18 : f32 to vector<16x32xf32>
    %35 = vector.extract_strided_slice %31 {offsets = [0, 0, 0], sizes = [2, 8, 8], strides = [1, 1, 1]} : vector<2x8x32xf32> to vector<2x8x8xf32>
    %36 = vector.extract_strided_slice %32 {offsets = [0, 0, 0], sizes = [2, 8, 8], strides = [1, 1, 1]} : vector<2x8x32xf32> to vector<2x8x8xf32>
    %37 = vector.extract_strided_slice %33 {offsets = [0, 0, 0], sizes = [2, 8, 8], strides = [1, 1, 1]} : vector<2x8x32xf32> to vector<2x8x8xf32>
    "tpu.trace_start"() <{level = 10 : i32, message = "ble,bme->blm"}> : () -> ()
    %cst_19 = arith.constant dense<0.000000e+00> : vector<2x8x8xf32>
    %38 = tpu.matmul %35, %36, %cst_19 {dimension_numbers = #tpu.dot_dimension_numbers<[2], [2], [1], [1], [0, 0, 0, 1, 1, 1], [0], [0]>} : vector<2x8x8xf32>, vector<2x8x8xf32>, vector<2x8x8xf32> -> vector<2x8x8xf32>
    "tpu.trace_stop"() : () -> ()
    %cst_20 = arith.constant dense<0xFF800000> : vector<2x8xf32>
    %39 = vector.multi_reduction <maximumf>, %38, %cst_20 [2] : vector<2x8x8xf32> to vector<2x8xf32>
    %40 = vector.shape_cast %39 : vector<2x8xf32> to vector<2x8x1xf32>
    %41 = vector.broadcast %40 : vector<2x8x1xf32> to vector<2x8x8xf32>
    %42 = arith.subf %38, %41 : vector<2x8x8xf32>
    %43 = math.exp %42 : vector<2x8x8xf32>
    %cst_21 = arith.constant dense<0.000000e+00> : vector<2x8xf32>
    %44 = vector.multi_reduction <add>, %43, %cst_21 [2] : vector<2x8x8xf32> to vector<2x8xf32>
    %45 = vector.shape_cast %44 : vector<2x8xf32> to vector<2x8x1xf32>
    %46 = tpu.reciprocal %45 {approx = true} : vector<2x8x1xf32> -> vector<2x8x1xf32>
    %47 = vector.broadcast %46 : vector<2x8x1xf32> to vector<2x8x8xf32>
    %48 = arith.mulf %43, %47 : vector<2x8x8xf32>
    "tpu.trace_start"() <{level = 10 : i32, message = "blm,bme->ble"}> : () -> ()
    %cst_22 = arith.constant dense<0.000000e+00> : vector<2x8x8xf32>
    %49 = tpu.matmul %48, %37, %cst_22 {dimension_numbers = #tpu.dot_dimension_numbers<[2], [1], [1], [2], [0, 0, 0, 1, 1, 2], [0], [0]>} : vector<2x8x8xf32>, vector<2x8x8xf32>, vector<2x8x8xf32> -> vector<2x8x8xf32>
    "tpu.trace_stop"() : () -> ()
    %50 = vector.shape_cast %49 : vector<2x8x8xf32> to vector<16x8xf32>
    %51 = vector.extract_strided_slice %3 {offsets = [0, 0], sizes = [8, 32], strides = [1, 1]} : vector<32x32xf32> to vector<8x32xf32>
    %cst_23 = arith.constant dense<0.000000e+00> : vector<16x32xf32>
    %52 = tpu.matmul %50, %51, %cst_23 {dimension_numbers = #tpu.dot_dimension_numbers<[1], [0], [0], [1], [0, 0, 1, 1], [], []>} : vector<16x8xf32>, vector<8x32xf32>, vector<16x32xf32> -> vector<16x32xf32>
    %53 = arith.addf %34, %52 : vector<16x32xf32>
    %54 = vector.extract_strided_slice %31 {offsets = [0, 0, 8], sizes = [2, 8, 8], strides = [1, 1, 1]} : vector<2x8x32xf32> to vector<2x8x8xf32>
    %55 = vector.extract_strided_slice %32 {offsets = [0, 0, 8], sizes = [2, 8, 8], strides = [1, 1, 1]} : vector<2x8x32xf32> to vector<2x8x8xf32>
    %56 = vector.extract_strided_slice %33 {offsets = [0, 0, 8], sizes = [2, 8, 8], strides = [1, 1, 1]} : vector<2x8x32xf32> to vector<2x8x8xf32>
    "tpu.trace_start"() <{level = 10 : i32, message = "ble,bme->blm"}> : () -> ()
    %cst_24 = arith.constant dense<0.000000e+00> : vector<2x8x8xf32>
    %57 = tpu.matmul %54, %55, %cst_24 {dimension_numbers = #tpu.dot_dimension_numbers<[2], [2], [1], [1], [0, 0, 0, 1, 1, 1], [0], [0]>} : vector<2x8x8xf32>, vector<2x8x8xf32>, vector<2x8x8xf32> -> vector<2x8x8xf32>
    "tpu.trace_stop"() : () -> ()
    %cst_25 = arith.constant dense<0xFF800000> : vector<2x8xf32>
    %58 = vector.multi_reduction <maximumf>, %57, %cst_25 [2] : vector<2x8x8xf32> to vector<2x8xf32>
    %59 = vector.shape_cast %58 : vector<2x8xf32> to vector<2x8x1xf32>
    %60 = vector.broadcast %59 : vector<2x8x1xf32> to vector<2x8x8xf32>
    %61 = arith.subf %57, %60 : vector<2x8x8xf32>
    %62 = math.exp %61 : vector<2x8x8xf32>
    %cst_26 = arith.constant dense<0.000000e+00> : vector<2x8xf32>
    %63 = vector.multi_reduction <add>, %62, %cst_26 [2] : vector<2x8x8xf32> to vector<2x8xf32>
    %64 = vector.shape_cast %63 : vector<2x8xf32> to vector<2x8x1xf32>
    %65 = tpu.reciprocal %64 {approx = true} : vector<2x8x1xf32> -> vector<2x8x1xf32>
    %66 = vector.broadcast %65 : vector<2x8x1xf32> to vector<2x8x8xf32>
    %67 = arith.mulf %62, %66 : vector<2x8x8xf32>
    "tpu.trace_start"() <{level = 10 : i32, message = "blm,bme->ble"}> : () -> ()
    %cst_27 = arith.constant dense<0.000000e+00> : vector<2x8x8xf32>
    %68 = tpu.matmul %67, %56, %cst_27 {dimension_numbers = #tpu.dot_dimension_numbers<[2], [1], [1], [2], [0, 0, 0, 1, 1, 2], [0], [0]>} : vector<2x8x8xf32>, vector<2x8x8xf32>, vector<2x8x8xf32> -> vector<2x8x8xf32>
    "tpu.trace_stop"() : () -> ()
    %69 = vector.shape_cast %68 : vector<2x8x8xf32> to vector<16x8xf32>
    %70 = vector.extract_strided_slice %3 {offsets = [8, 0], sizes = [8, 32], strides = [1, 1]} : vector<32x32xf32> to vector<8x32xf32>
    %cst_28 = arith.constant dense<0.000000e+00> : vector<16x32xf32>
    %71 = tpu.matmul %69, %70, %cst_28 {dimension_numbers = #tpu.dot_dimension_numbers<[1], [0], [0], [1], [0, 0, 1, 1], [], []>} : vector<16x8xf32>, vector<8x32xf32>, vector<16x32xf32> -> vector<16x32xf32>
    %72 = arith.addf %53, %71 : vector<16x32xf32>
    %73 = vector.extract_strided_slice %31 {offsets = [0, 0, 16], sizes = [2, 8, 8], strides = [1, 1, 1]} : vector<2x8x32xf32> to vector<2x8x8xf32>
    %74 = vector.extract_strided_slice %32 {offsets = [0, 0, 16], sizes = [2, 8, 8], strides = [1, 1, 1]} : vector<2x8x32xf32> to vector<2x8x8xf32>
    %75 = vector.extract_strided_slice %33 {offsets = [0, 0, 16], sizes = [2, 8, 8], strides = [1, 1, 1]} : vector<2x8x32xf32> to vector<2x8x8xf32>
    "tpu.trace_start"() <{level = 10 : i32, message = "ble,bme->blm"}> : () -> ()
    %cst_29 = arith.constant dense<0.000000e+00> : vector<2x8x8xf32>
    %76 = tpu.matmul %73, %74, %cst_29 {dimension_numbers = #tpu.dot_dimension_numbers<[2], [2], [1], [1], [0, 0, 0, 1, 1, 1], [0], [0]>} : vector<2x8x8xf32>, vector<2x8x8xf32>, vector<2x8x8xf32> -> vector<2x8x8xf32>
    "tpu.trace_stop"() : () -> ()
    %cst_30 = arith.constant dense<0xFF800000> : vector<2x8xf32>
    %77 = vector.multi_reduction <maximumf>, %76, %cst_30 [2] : vector<2x8x8xf32> to vector<2x8xf32>
    %78 = vector.shape_cast %77 : vector<2x8xf32> to vector<2x8x1xf32>
    %79 = vector.broadcast %78 : vector<2x8x1xf32> to vector<2x8x8xf32>
    %80 = arith.subf %76, %79 : vector<2x8x8xf32>
    %81 = math.exp %80 : vector<2x8x8xf32>
    %cst_31 = arith.constant dense<0.000000e+00> : vector<2x8xf32>
    %82 = vector.multi_reduction <add>, %81, %cst_31 [2] : vector<2x8x8xf32> to vector<2x8xf32>
    %83 = vector.shape_cast %82 : vector<2x8xf32> to vector<2x8x1xf32>
    %84 = tpu.reciprocal %83 {approx = true} : vector<2x8x1xf32> -> vector<2x8x1xf32>
    %85 = vector.broadcast %84 : vector<2x8x1xf32> to vector<2x8x8xf32>
    %86 = arith.mulf %81, %85 : vector<2x8x8xf32>
    "tpu.trace_start"() <{level = 10 : i32, message = "blm,bme->ble"}> : () -> ()
    %cst_32 = arith.constant dense<0.000000e+00> : vector<2x8x8xf32>
    %87 = tpu.matmul %86, %75, %cst_32 {dimension_numbers = #tpu.dot_dimension_numbers<[2], [1], [1], [2], [0, 0, 0, 1, 1, 2], [0], [0]>} : vector<2x8x8xf32>, vector<2x8x8xf32>, vector<2x8x8xf32> -> vector<2x8x8xf32>
    "tpu.trace_stop"() : () -> ()
    %88 = vector.shape_cast %87 : vector<2x8x8xf32> to vector<16x8xf32>
    %89 = vector.extract_strided_slice %3 {offsets = [16, 0], sizes = [8, 32], strides = [1, 1]} : vector<32x32xf32> to vector<8x32xf32>
    %cst_33 = arith.constant dense<0.000000e+00> : vector<16x32xf32>
    %90 = tpu.matmul %88, %89, %cst_33 {dimension_numbers = #tpu.dot_dimension_numbers<[1], [0], [0], [1], [0, 0, 1, 1], [], []>} : vector<16x8xf32>, vector<8x32xf32>, vector<16x32xf32> -> vector<16x32xf32>
    %91 = arith.addf %72, %90 : vector<16x32xf32>
    %92 = vector.extract_strided_slice %31 {offsets = [0, 0, 24], sizes = [2, 8, 8], strides = [1, 1, 1]} : vector<2x8x32xf32> to vector<2x8x8xf32>
    %93 = vector.extract_strided_slice %32 {offsets = [0, 0, 24], sizes = [2, 8, 8], strides = [1, 1, 1]} : vector<2x8x32xf32> to vector<2x8x8xf32>
    %94 = vector.extract_strided_slice %33 {offsets = [0, 0, 24], sizes = [2, 8, 8], strides = [1, 1, 1]} : vector<2x8x32xf32> to vector<2x8x8xf32>
    "tpu.trace_start"() <{level = 10 : i32, message = "ble,bme->blm"}> : () -> ()
    %cst_34 = arith.constant dense<0.000000e+00> : vector<2x8x8xf32>
    %95 = tpu.matmul %92, %93, %cst_34 {dimension_numbers = #tpu.dot_dimension_numbers<[2], [2], [1], [1], [0, 0, 0, 1, 1, 1], [0], [0]>} : vector<2x8x8xf32>, vector<2x8x8xf32>, vector<2x8x8xf32> -> vector<2x8x8xf32>
    "tpu.trace_stop"() : () -> ()
    %cst_35 = arith.constant dense<0xFF800000> : vector<2x8xf32>
    %96 = vector.multi_reduction <maximumf>, %95, %cst_35 [2] : vector<2x8x8xf32> to vector<2x8xf32>
    %97 = vector.shape_cast %96 : vector<2x8xf32> to vector<2x8x1xf32>
    %98 = vector.broadcast %97 : vector<2x8x1xf32> to vector<2x8x8xf32>
    %99 = arith.subf %95, %98 : vector<2x8x8xf32>
    %100 = math.exp %99 : vector<2x8x8xf32>
    %cst_36 = arith.constant dense<0.000000e+00> : vector<2x8xf32>
    %101 = vector.multi_reduction <add>, %100, %cst_36 [2] : vector<2x8x8xf32> to vector<2x8xf32>
    %102 = vector.shape_cast %101 : vector<2x8xf32> to vector<2x8x1xf32>
    %103 = tpu.reciprocal %102 {approx = true} : vector<2x8x1xf32> -> vector<2x8x1xf32>
    %104 = vector.broadcast %103 : vector<2x8x1xf32> to vector<2x8x8xf32>
    %105 = arith.mulf %100, %104 : vector<2x8x8xf32>
    "tpu.trace_start"() <{level = 10 : i32, message = "blm,bme->ble"}> : () -> ()
    %cst_37 = arith.constant dense<0.000000e+00> : vector<2x8x8xf32>
    %106 = tpu.matmul %105, %94, %cst_37 {dimension_numbers = #tpu.dot_dimension_numbers<[2], [1], [1], [2], [0, 0, 0, 1, 1, 2], [0], [0]>} : vector<2x8x8xf32>, vector<2x8x8xf32>, vector<2x8x8xf32> -> vector<2x8x8xf32>
    "tpu.trace_stop"() : () -> ()
    %107 = vector.shape_cast %106 : vector<2x8x8xf32> to vector<16x8xf32>
    %108 = vector.extract_strided_slice %3 {offsets = [24, 0], sizes = [8, 32], strides = [1, 1]} : vector<32x32xf32> to vector<8x32xf32>
    %cst_38 = arith.constant dense<0.000000e+00> : vector<16x32xf32>
    %109 = tpu.matmul %107, %108, %cst_38 {dimension_numbers = #tpu.dot_dimension_numbers<[1], [0], [0], [1], [0, 0, 1, 1], [], []>} : vector<16x8xf32>, vector<8x32xf32>, vector<16x32xf32> -> vector<16x32xf32>
    %110 = arith.addf %91, %109 : vector<16x32xf32>
    %111 = arith.addf %14, %110 : vector<16x32xf32>
    %112 = vector.shape_cast %12 : vector<32xf32> to vector<1x32xf32>
    %113 = vector.broadcast %112 : vector<1x32xf32> to vector<16x32xf32>
    %114 = arith.addf %111, %113 : vector<16x32xf32>
    %115 = vector.extract_strided_slice %16 {offsets = [1, 0], sizes = [1, 32], strides = [1, 1]} : vector<5x32xf32> to vector<1x32xf32>
    %116 = vector.shape_cast %115 : vector<1x32xf32> to vector<32xf32>
    %117 = vector.extract_strided_slice %16 {offsets = [2, 0], sizes = [1, 32], strides = [1, 1]} : vector<5x32xf32> to vector<1x32xf32>
    %118 = vector.shape_cast %117 : vector<1x32xf32> to vector<32xf32>
    %cst_39 = arith.constant dense<0.000000e+00> : vector<16xf32>
    %119 = vector.multi_reduction <add>, %114, %cst_39 [1] : vector<16x32xf32> to vector<16xf32>
    %120 = vector.shape_cast %119 : vector<16xf32> to vector<16x1xf32>
    %cst_40 = arith.constant 3.200000e+01 : f32
    %121 = vector.broadcast %cst_40 : f32 to vector<16x1xf32>
    %122 = arith.divf %120, %121 : vector<16x1xf32>
    %123 = vector.broadcast %122 : vector<16x1xf32> to vector<16x32xf32>
    %124 = arith.subf %114, %123 : vector<16x32xf32>
    %125 = arith.mulf %124, %124 : vector<16x32xf32>
    %cst_41 = arith.constant dense<0.000000e+00> : vector<16xf32>
    %126 = vector.multi_reduction <add>, %125, %cst_41 [1] : vector<16x32xf32> to vector<16xf32>
    %127 = vector.shape_cast %126 : vector<16xf32> to vector<16x1xf32>
    %cst_42 = arith.constant 3.200000e+01 : f32
    %128 = vector.broadcast %cst_42 : f32 to vector<16x1xf32>
    %129 = arith.divf %127, %128 : vector<16x1xf32>
    %130 = vector.broadcast %122 : vector<16x1xf32> to vector<16x32xf32>
    %131 = arith.subf %114, %130 : vector<16x32xf32>
    %cst_43 = arith.constant 9.99999974E-6 : f32
    %132 = vector.broadcast %cst_43 : f32 to vector<16x1xf32>
    %133 = arith.addf %129, %132 : vector<16x1xf32>
    %134 = math.rsqrt %133 : vector<16x1xf32>
    %135 = vector.broadcast %134 : vector<16x1xf32> to vector<16x32xf32>
    %136 = arith.mulf %131, %135 : vector<16x32xf32>
    %137 = vector.shape_cast %116 : vector<32xf32> to vector<1x32xf32>
    %138 = vector.broadcast %137 : vector<1x32xf32> to vector<16x32xf32>
    %139 = arith.mulf %136, %138 : vector<16x32xf32>
    %140 = vector.shape_cast %118 : vector<32xf32> to vector<1x32xf32>
    %141 = vector.broadcast %140 : vector<1x32xf32> to vector<16x32xf32>
    %142 = arith.addf %139, %141 : vector<16x32xf32>
    %c0_44 = arith.constant 0 : index
    %c0_45 = arith.constant 0 : index
    %c0_46 = arith.constant 0 : index
    %143 = vector.load %arg7[%c0_44, %c0_45, %c0_46] : memref<2x32x64xf32, #tpu.memory_space<vmem>>, vector<1x32x64xf32>
    %144 = vector.shape_cast %143 : vector<1x32x64xf32> to vector<32x64xf32>
    %cst_47 = arith.constant dense<0.000000e+00> : vector<16x64xf32>
    %145 = tpu.matmul %142, %144, %cst_47 {dimension_numbers = #tpu.dot_dimension_numbers<[1], [0], [0], [1], [0, 0, 1, 1], [], []>} : vector<16x32xf32>, vector<32x64xf32>, vector<16x64xf32> -> vector<16x64xf32>
    %c0_48 = arith.constant 0 : index
    %c0_49 = arith.constant 0 : index
    %c0_50 = arith.constant 0 : index
    %146 = vector.load %arg8[%c0_48, %c0_49, %c0_50] : memref<2x1x64xf32, #tpu.memory_space<vmem>>, vector<1x1x64xf32>
    %147 = vector.shape_cast %146 : vector<1x1x64xf32> to vector<1x64xf32>
    %148 = vector.broadcast %147 : vector<1x64xf32> to vector<16x64xf32>
    %149 = arith.addf %145, %148 : vector<16x64xf32>
    %cst_51 = arith.constant 0.000000e+00 : f32
    %150 = vector.broadcast %cst_51 : f32 to vector<16x64xf32>
    %151 = arith.maximumf %149, %150 : vector<16x64xf32>
    %c0_52 = arith.constant 0 : index
    %c0_53 = arith.constant 0 : index
    %c0_54 = arith.constant 0 : index
    %152 = vector.load %arg9[%c0_52, %c0_53, %c0_54] : memref<2x64x32xf32, #tpu.memory_space<vmem>>, vector<1x64x32xf32>
    %153 = vector.shape_cast %152 : vector<1x64x32xf32> to vector<64x32xf32>
    %cst_55 = arith.constant dense<0.000000e+00> : vector<16x32xf32>
    %154 = tpu.matmul %151, %153, %cst_55 {dimension_numbers = #tpu.dot_dimension_numbers<[1], [0], [0], [1], [0, 0, 1, 1], [], []>} : vector<16x64xf32>, vector<64x32xf32>, vector<16x32xf32> -> vector<16x32xf32>
    %155 = vector.extract_strided_slice %16 {offsets = [0, 0], sizes = [1, 32], strides = [1, 1]} : vector<5x32xf32> to vector<1x32xf32>
    %156 = vector.shape_cast %155 : vector<1x32xf32> to vector<32xf32>
    %157 = vector.shape_cast %156 : vector<32xf32> to vector<1x32xf32>
    %158 = vector.broadcast %157 : vector<1x32xf32> to vector<16x32xf32>
    %159 = arith.addf %154, %158 : vector<16x32xf32>
    %160 = arith.addf %142, %159 : vector<16x32xf32>
    %161 = vector.extract_strided_slice %16 {offsets = [3, 0], sizes = [1, 32], strides = [1, 1]} : vector<5x32xf32> to vector<1x32xf32>
    %162 = vector.shape_cast %161 : vector<1x32xf32> to vector<32xf32>
    %163 = vector.extract_strided_slice %16 {offsets = [4, 0], sizes = [1, 32], strides = [1, 1]} : vector<5x32xf32> to vector<1x32xf32>
    %164 = vector.shape_cast %163 : vector<1x32xf32> to vector<32xf32>
    %cst_56 = arith.constant dense<0.000000e+00> : vector<16xf32>
    %165 = vector.multi_reduction <add>, %160, %cst_56 [1] : vector<16x32xf32> to vector<16xf32>
    %166 = vector.shape_cast %165 : vector<16xf32> to vector<16x1xf32>
    %cst_57 = arith.constant 3.200000e+01 : f32
    %167 = vector.broadcast %cst_57 : f32 to vector<16x1xf32>
    %168 = arith.divf %166, %167 : vector<16x1xf32>
    %169 = vector.broadcast %168 : vector<16x1xf32> to vector<16x32xf32>
    %170 = arith.subf %160, %169 : vector<16x32xf32>
    %171 = arith.mulf %170, %170 : vector<16x32xf32>
    %cst_58 = arith.constant dense<0.000000e+00> : vector<16xf32>
    %172 = vector.multi_reduction <add>, %171, %cst_58 [1] : vector<16x32xf32> to vector<16xf32>
    %173 = vector.shape_cast %172 : vector<16xf32> to vector<16x1xf32>
    %cst_59 = arith.constant 3.200000e+01 : f32
    %174 = vector.broadcast %cst_59 : f32 to vector<16x1xf32>
    %175 = arith.divf %173, %174 : vector<16x1xf32>
    %176 = vector.broadcast %168 : vector<16x1xf32> to vector<16x32xf32>
    %177 = arith.subf %160, %176 : vector<16x32xf32>
    %cst_60 = arith.constant 9.99999974E-6 : f32
    %178 = vector.broadcast %cst_60 : f32 to vector<16x1xf32>
    %179 = arith.addf %175, %178 : vector<16x1xf32>
    %180 = math.rsqrt %179 : vector<16x1xf32>
    %181 = vector.broadcast %180 : vector<16x1xf32> to vector<16x32xf32>
    %182 = arith.mulf %177, %181 : vector<16x32xf32>
    %183 = vector.shape_cast %162 : vector<32xf32> to vector<1x32xf32>
    %184 = vector.broadcast %183 : vector<1x32xf32> to vector<16x32xf32>
    %185 = arith.mulf %182, %184 : vector<16x32xf32>
    %186 = vector.shape_cast %164 : vector<32xf32> to vector<1x32xf32>
    %187 = vector.broadcast %186 : vector<1x32xf32> to vector<16x32xf32>
    %188 = arith.addf %185, %187 : vector<16x32xf32>
    %c1 = arith.constant 1 : index
    %c0_61 = arith.constant 0 : index
    %c0_62 = arith.constant 0 : index
    %189 = vector.load %arg10[%c1, %c0_61, %c0_62] : memref<2x5x32xf32, #tpu.memory_space<vmem>>, vector<1x5x32xf32>
    %190 = vector.shape_cast %189 : vector<1x5x32xf32> to vector<5x32xf32>
    %cst_63 = arith.constant dense<0.000000e+00> : vector<16x32xf32>
    %191 = tpu.matmul %188, %0, %cst_63 {dimension_numbers = #tpu.dot_dimension_numbers<[1], [0], [0], [1], [0, 0, 1, 1], [], []>} : vector<16x32xf32>, vector<32x32xf32>, vector<16x32xf32> -> vector<16x32xf32>
    %192 = vector.shape_cast %6 : vector<32xf32> to vector<1x32xf32>
    %193 = vector.broadcast %192 : vector<1x32xf32> to vector<16x32xf32>
    %194 = arith.addf %191, %193 : vector<16x32xf32>
    %cst_64 = arith.constant 0.353553385 : f32
    %195 = vector.broadcast %cst_64 : f32 to vector<16x32xf32>
    %196 = arith.mulf %194, %195 : vector<16x32xf32>
    %cst_65 = arith.constant dense<0.000000e+00> : vector<16x32xf32>
    %197 = tpu.matmul %188, %1, %cst_65 {dimension_numbers = #tpu.dot_dimension_numbers<[1], [0], [0], [1], [0, 0, 1, 1], [], []>} : vector<16x32xf32>, vector<32x32xf32>, vector<16x32xf32> -> vector<16x32xf32>
    %198 = vector.shape_cast %8 : vector<32xf32> to vector<1x32xf32>
    %199 = vector.broadcast %198 : vector<1x32xf32> to vector<16x32xf32>
    %200 = arith.addf %197, %199 : vector<16x32xf32>
    %cst_66 = arith.constant dense<0.000000e+00> : vector<16x32xf32>
    %201 = tpu.matmul %188, %2, %cst_66 {dimension_numbers = #tpu.dot_dimension_numbers<[1], [0], [0], [1], [0, 0, 1, 1], [], []>} : vector<16x32xf32>, vector<32x32xf32>, vector<16x32xf32> -> vector<16x32xf32>
    %202 = vector.shape_cast %10 : vector<32xf32> to vector<1x32xf32>
    %203 = vector.broadcast %202 : vector<1x32xf32> to vector<16x32xf32>
    %204 = arith.addf %201, %203 : vector<16x32xf32>
    %205 = vector.shape_cast %196 : vector<16x32xf32> to vector<2x8x32xf32>
    %206 = vector.shape_cast %200 : vector<16x32xf32> to vector<2x8x32xf32>
    %207 = vector.shape_cast %204 : vector<16x32xf32> to vector<2x8x32xf32>
    %cst_67 = arith.constant 0.000000e+00 : f32
    %208 = vector.broadcast %cst_67 : f32 to vector<16x32xf32>
    %209 = vector.extract_strided_slice %205 {offsets = [0, 0, 0], sizes = [2, 8, 8], strides = [1, 1, 1]} : vector<2x8x32xf32> to vector<2x8x8xf32>
    %210 = vector.extract_strided_slice %206 {offsets = [0, 0, 0], sizes = [2, 8, 8], strides = [1, 1, 1]} : vector<2x8x32xf32> to vector<2x8x8xf32>
    %211 = vector.extract_strided_slice %207 {offsets = [0, 0, 0], sizes = [2, 8, 8], strides = [1, 1, 1]} : vector<2x8x32xf32> to vector<2x8x8xf32>
    "tpu.trace_start"() <{level = 10 : i32, message = "ble,bme->blm"}> : () -> ()
    %cst_68 = arith.constant dense<0.000000e+00> : vector<2x8x8xf32>
    %212 = tpu.matmul %209, %210, %cst_68 {dimension_numbers = #tpu.dot_dimension_numbers<[2], [2], [1], [1], [0, 0, 0, 1, 1, 1], [0], [0]>} : vector<2x8x8xf32>, vector<2x8x8xf32>, vector<2x8x8xf32> -> vector<2x8x8xf32>
    "tpu.trace_stop"() : () -> ()
    %cst_69 = arith.constant dense<0xFF800000> : vector<2x8xf32>
    %213 = vector.multi_reduction <maximumf>, %212, %cst_69 [2] : vector<2x8x8xf32> to vector<2x8xf32>
    %214 = vector.shape_cast %213 : vector<2x8xf32> to vector<2x8x1xf32>
    %215 = vector.broadcast %214 : vector<2x8x1xf32> to vector<2x8x8xf32>
    %216 = arith.subf %212, %215 : vector<2x8x8xf32>
    %217 = math.exp %216 : vector<2x8x8xf32>
    %cst_70 = arith.constant dense<0.000000e+00> : vector<2x8xf32>
    %218 = vector.multi_reduction <add>, %217, %cst_70 [2] : vector<2x8x8xf32> to vector<2x8xf32>
    %219 = vector.shape_cast %218 : vector<2x8xf32> to vector<2x8x1xf32>
    %220 = tpu.reciprocal %219 {approx = true} : vector<2x8x1xf32> -> vector<2x8x1xf32>
    %221 = vector.broadcast %220 : vector<2x8x1xf32> to vector<2x8x8xf32>
    %222 = arith.mulf %217, %221 : vector<2x8x8xf32>
    "tpu.trace_start"() <{level = 10 : i32, message = "blm,bme->ble"}> : () -> ()
    %cst_71 = arith.constant dense<0.000000e+00> : vector<2x8x8xf32>
    %223 = tpu.matmul %222, %211, %cst_71 {dimension_numbers = #tpu.dot_dimension_numbers<[2], [1], [1], [2], [0, 0, 0, 1, 1, 2], [0], [0]>} : vector<2x8x8xf32>, vector<2x8x8xf32>, vector<2x8x8xf32> -> vector<2x8x8xf32>
    "tpu.trace_stop"() : () -> ()
    %224 = vector.shape_cast %223 : vector<2x8x8xf32> to vector<16x8xf32>
    %225 = vector.extract_strided_slice %3 {offsets = [0, 0], sizes = [8, 32], strides = [1, 1]} : vector<32x32xf32> to vector<8x32xf32>
    %cst_72 = arith.constant dense<0.000000e+00> : vector<16x32xf32>
    %226 = tpu.matmul %224, %225, %cst_72 {dimension_numbers = #tpu.dot_dimension_numbers<[1], [0], [0], [1], [0, 0, 1, 1], [], []>} : vector<16x8xf32>, vector<8x32xf32>, vector<16x32xf32> -> vector<16x32xf32>
    %227 = arith.addf %208, %226 : vector<16x32xf32>
    %228 = vector.extract_strided_slice %205 {offsets = [0, 0, 8], sizes = [2, 8, 8], strides = [1, 1, 1]} : vector<2x8x32xf32> to vector<2x8x8xf32>
    %229 = vector.extract_strided_slice %206 {offsets = [0, 0, 8], sizes = [2, 8, 8], strides = [1, 1, 1]} : vector<2x8x32xf32> to vector<2x8x8xf32>
    %230 = vector.extract_strided_slice %207 {offsets = [0, 0, 8], sizes = [2, 8, 8], strides = [1, 1, 1]} : vector<2x8x32xf32> to vector<2x8x8xf32>
    "tpu.trace_start"() <{level = 10 : i32, message = "ble,bme->blm"}> : () -> ()
    %cst_73 = arith.constant dense<0.000000e+00> : vector<2x8x8xf32>
    %231 = tpu.matmul %228, %229, %cst_73 {dimension_numbers = #tpu.dot_dimension_numbers<[2], [2], [1], [1], [0, 0, 0, 1, 1, 1], [0], [0]>} : vector<2x8x8xf32>, vector<2x8x8xf32>, vector<2x8x8xf32> -> vector<2x8x8xf32>
    "tpu.trace_stop"() : () -> ()
    %cst_74 = arith.constant dense<0xFF800000> : vector<2x8xf32>
    %232 = vector.multi_reduction <maximumf>, %231, %cst_74 [2] : vector<2x8x8xf32> to vector<2x8xf32>
    %233 = vector.shape_cast %232 : vector<2x8xf32> to vector<2x8x1xf32>
    %234 = vector.broadcast %233 : vector<2x8x1xf32> to vector<2x8x8xf32>
    %235 = arith.subf %231, %234 : vector<2x8x8xf32>
    %236 = math.exp %235 : vector<2x8x8xf32>
    %cst_75 = arith.constant dense<0.000000e+00> : vector<2x8xf32>
    %237 = vector.multi_reduction <add>, %236, %cst_75 [2] : vector<2x8x8xf32> to vector<2x8xf32>
    %238 = vector.shape_cast %237 : vector<2x8xf32> to vector<2x8x1xf32>
    %239 = tpu.reciprocal %238 {approx = true} : vector<2x8x1xf32> -> vector<2x8x1xf32>
    %240 = vector.broadcast %239 : vector<2x8x1xf32> to vector<2x8x8xf32>
    %241 = arith.mulf %236, %240 : vector<2x8x8xf32>
    "tpu.trace_start"() <{level = 10 : i32, message = "blm,bme->ble"}> : () -> ()
    %cst_76 = arith.constant dense<0.000000e+00> : vector<2x8x8xf32>
    %242 = tpu.matmul %241, %230, %cst_76 {dimension_numbers = #tpu.dot_dimension_numbers<[2], [1], [1], [2], [0, 0, 0, 1, 1, 2], [0], [0]>} : vector<2x8x8xf32>, vector<2x8x8xf32>, vector<2x8x8xf32> -> vector<2x8x8xf32>
    "tpu.trace_stop"() : () -> ()
    %243 = vector.shape_cast %242 : vector<2x8x8xf32> to vector<16x8xf32>
    %244 = vector.extract_strided_slice %3 {offsets = [8, 0], sizes = [8, 32], strides = [1, 1]} : vector<32x32xf32> to vector<8x32xf32>
    %cst_77 = arith.constant dense<0.000000e+00> : vector<16x32xf32>
    %245 = tpu.matmul %243, %244, %cst_77 {dimension_numbers = #tpu.dot_dimension_numbers<[1], [0], [0], [1], [0, 0, 1, 1], [], []>} : vector<16x8xf32>, vector<8x32xf32>, vector<16x32xf32> -> vector<16x32xf32>
    %246 = arith.addf %227, %245 : vector<16x32xf32>
    %247 = vector.extract_strided_slice %205 {offsets = [0, 0, 16], sizes = [2, 8, 8], strides = [1, 1, 1]} : vector<2x8x32xf32> to vector<2x8x8xf32>
    %248 = vector.extract_strided_slice %206 {offsets = [0, 0, 16], sizes = [2, 8, 8], strides = [1, 1, 1]} : vector<2x8x32xf32> to vector<2x8x8xf32>
    %249 = vector.extract_strided_slice %207 {offsets = [0, 0, 16], sizes = [2, 8, 8], strides = [1, 1, 1]} : vector<2x8x32xf32> to vector<2x8x8xf32>
    "tpu.trace_start"() <{level = 10 : i32, message = "ble,bme->blm"}> : () -> ()
    %cst_78 = arith.constant dense<0.000000e+00> : vector<2x8x8xf32>
    %250 = tpu.matmul %247, %248, %cst_78 {dimension_numbers = #tpu.dot_dimension_numbers<[2], [2], [1], [1], [0, 0, 0, 1, 1, 1], [0], [0]>} : vector<2x8x8xf32>, vector<2x8x8xf32>, vector<2x8x8xf32> -> vector<2x8x8xf32>
    "tpu.trace_stop"() : () -> ()
    %cst_79 = arith.constant dense<0xFF800000> : vector<2x8xf32>
    %251 = vector.multi_reduction <maximumf>, %250, %cst_79 [2] : vector<2x8x8xf32> to vector<2x8xf32>
    %252 = vector.shape_cast %251 : vector<2x8xf32> to vector<2x8x1xf32>
    %253 = vector.broadcast %252 : vector<2x8x1xf32> to vector<2x8x8xf32>
    %254 = arith.subf %250, %253 : vector<2x8x8xf32>
    %255 = math.exp %254 : vector<2x8x8xf32>
    %cst_80 = arith.constant dense<0.000000e+00> : vector<2x8xf32>
    %256 = vector.multi_reduction <add>, %255, %cst_80 [2] : vector<2x8x8xf32> to vector<2x8xf32>
    %257 = vector.shape_cast %256 : vector<2x8xf32> to vector<2x8x1xf32>
    %258 = tpu.reciprocal %257 {approx = true} : vector<2x8x1xf32> -> vector<2x8x1xf32>
    %259 = vector.broadcast %258 : vector<2x8x1xf32> to vector<2x8x8xf32>
    %260 = arith.mulf %255, %259 : vector<2x8x8xf32>
    "tpu.trace_start"() <{level = 10 : i32, message = "blm,bme->ble"}> : () -> ()
    %cst_81 = arith.constant dense<0.000000e+00> : vector<2x8x8xf32>
    %261 = tpu.matmul %260, %249, %cst_81 {dimension_numbers = #tpu.dot_dimension_numbers<[2], [1], [1], [2], [0, 0, 0, 1, 1, 2], [0], [0]>} : vector<2x8x8xf32>, vector<2x8x8xf32>, vector<2x8x8xf32> -> vector<2x8x8xf32>
    "tpu.trace_stop"() : () -> ()
    %262 = vector.shape_cast %261 : vector<2x8x8xf32> to vector<16x8xf32>
    %263 = vector.extract_strided_slice %3 {offsets = [16, 0], sizes = [8, 32], strides = [1, 1]} : vector<32x32xf32> to vector<8x32xf32>
    %cst_82 = arith.constant dense<0.000000e+00> : vector<16x32xf32>
    %264 = tpu.matmul %262, %263, %cst_82 {dimension_numbers = #tpu.dot_dimension_numbers<[1], [0], [0], [1], [0, 0, 1, 1], [], []>} : vector<16x8xf32>, vector<8x32xf32>, vector<16x32xf32> -> vector<16x32xf32>
    %265 = arith.addf %246, %264 : vector<16x32xf32>
    %266 = vector.extract_strided_slice %205 {offsets = [0, 0, 24], sizes = [2, 8, 8], strides = [1, 1, 1]} : vector<2x8x32xf32> to vector<2x8x8xf32>
    %267 = vector.extract_strided_slice %206 {offsets = [0, 0, 24], sizes = [2, 8, 8], strides = [1, 1, 1]} : vector<2x8x32xf32> to vector<2x8x8xf32>
    %268 = vector.extract_strided_slice %207 {offsets = [0, 0, 24], sizes = [2, 8, 8], strides = [1, 1, 1]} : vector<2x8x32xf32> to vector<2x8x8xf32>
    "tpu.trace_start"() <{level = 10 : i32, message = "ble,bme->blm"}> : () -> ()
    %cst_83 = arith.constant dense<0.000000e+00> : vector<2x8x8xf32>
    %269 = tpu.matmul %266, %267, %cst_83 {dimension_numbers = #tpu.dot_dimension_numbers<[2], [2], [1], [1], [0, 0, 0, 1, 1, 1], [0], [0]>} : vector<2x8x8xf32>, vector<2x8x8xf32>, vector<2x8x8xf32> -> vector<2x8x8xf32>
    "tpu.trace_stop"() : () -> ()
    %cst_84 = arith.constant dense<0xFF800000> : vector<2x8xf32>
    %270 = vector.multi_reduction <maximumf>, %269, %cst_84 [2] : vector<2x8x8xf32> to vector<2x8xf32>
    %271 = vector.shape_cast %270 : vector<2x8xf32> to vector<2x8x1xf32>
    %272 = vector.broadcast %271 : vector<2x8x1xf32> to vector<2x8x8xf32>
    %273 = arith.subf %269, %272 : vector<2x8x8xf32>
    %274 = math.exp %273 : vector<2x8x8xf32>
    %cst_85 = arith.constant dense<0.000000e+00> : vector<2x8xf32>
    %275 = vector.multi_reduction <add>, %274, %cst_85 [2] : vector<2x8x8xf32> to vector<2x8xf32>
    %276 = vector.shape_cast %275 : vector<2x8xf32> to vector<2x8x1xf32>
    %277 = tpu.reciprocal %276 {approx = true} : vector<2x8x1xf32> -> vector<2x8x1xf32>
    %278 = vector.broadcast %277 : vector<2x8x1xf32> to vector<2x8x8xf32>
    %279 = arith.mulf %274, %278 : vector<2x8x8xf32>
    "tpu.trace_start"() <{level = 10 : i32, message = "blm,bme->ble"}> : () -> ()
    %cst_86 = arith.constant dense<0.000000e+00> : vector<2x8x8xf32>
    %280 = tpu.matmul %279, %268, %cst_86 {dimension_numbers = #tpu.dot_dimension_numbers<[2], [1], [1], [2], [0, 0, 0, 1, 1, 2], [0], [0]>} : vector<2x8x8xf32>, vector<2x8x8xf32>, vector<2x8x8xf32> -> vector<2x8x8xf32>
    "tpu.trace_stop"() : () -> ()
    %281 = vector.shape_cast %280 : vector<2x8x8xf32> to vector<16x8xf32>
    %282 = vector.extract_strided_slice %3 {offsets = [24, 0], sizes = [8, 32], strides = [1, 1]} : vector<32x32xf32> to vector<8x32xf32>
    %cst_87 = arith.constant dense<0.000000e+00> : vector<16x32xf32>
    %283 = tpu.matmul %281, %282, %cst_87 {dimension_numbers = #tpu.dot_dimension_numbers<[1], [0], [0], [1], [0, 0, 1, 1], [], []>} : vector<16x8xf32>, vector<8x32xf32>, vector<16x32xf32> -> vector<16x32xf32>
    %284 = arith.addf %265, %283 : vector<16x32xf32>
    %285 = arith.addf %188, %284 : vector<16x32xf32>
    %286 = vector.shape_cast %12 : vector<32xf32> to vector<1x32xf32>
    %287 = vector.broadcast %286 : vector<1x32xf32> to vector<16x32xf32>
    %288 = arith.addf %285, %287 : vector<16x32xf32>
    %289 = vector.extract_strided_slice %190 {offsets = [1, 0], sizes = [1, 32], strides = [1, 1]} : vector<5x32xf32> to vector<1x32xf32>
    %290 = vector.shape_cast %289 : vector<1x32xf32> to vector<32xf32>
    %291 = vector.extract_strided_slice %190 {offsets = [2, 0], sizes = [1, 32], strides = [1, 1]} : vector<5x32xf32> to vector<1x32xf32>
    %292 = vector.shape_cast %291 : vector<1x32xf32> to vector<32xf32>
    %cst_88 = arith.constant dense<0.000000e+00> : vector<16xf32>
    %293 = vector.multi_reduction <add>, %288, %cst_88 [1] : vector<16x32xf32> to vector<16xf32>
    %294 = vector.shape_cast %293 : vector<16xf32> to vector<16x1xf32>
    %cst_89 = arith.constant 3.200000e+01 : f32
    %295 = vector.broadcast %cst_89 : f32 to vector<16x1xf32>
    %296 = arith.divf %294, %295 : vector<16x1xf32>
    %297 = vector.broadcast %296 : vector<16x1xf32> to vector<16x32xf32>
    %298 = arith.subf %288, %297 : vector<16x32xf32>
    %299 = arith.mulf %298, %298 : vector<16x32xf32>
    %cst_90 = arith.constant dense<0.000000e+00> : vector<16xf32>
    %300 = vector.multi_reduction <add>, %299, %cst_90 [1] : vector<16x32xf32> to vector<16xf32>
    %301 = vector.shape_cast %300 : vector<16xf32> to vector<16x1xf32>
    %cst_91 = arith.constant 3.200000e+01 : f32
    %302 = vector.broadcast %cst_91 : f32 to vector<16x1xf32>
    %303 = arith.divf %301, %302 : vector<16x1xf32>
    %304 = vector.broadcast %296 : vector<16x1xf32> to vector<16x32xf32>
    %305 = arith.subf %288, %304 : vector<16x32xf32>
    %cst_92 = arith.constant 9.99999974E-6 : f32
    %306 = vector.broadcast %cst_92 : f32 to vector<16x1xf32>
    %307 = arith.addf %303, %306 : vector<16x1xf32>
    %308 = math.rsqrt %307 : vector<16x1xf32>
    %309 = vector.broadcast %308 : vector<16x1xf32> to vector<16x32xf32>
    %310 = arith.mulf %305, %309 : vector<16x32xf32>
    %311 = vector.shape_cast %290 : vector<32xf32> to vector<1x32xf32>
    %312 = vector.broadcast %311 : vector<1x32xf32> to vector<16x32xf32>
    %313 = arith.mulf %310, %312 : vector<16x32xf32>
    %314 = vector.shape_cast %292 : vector<32xf32> to vector<1x32xf32>
    %315 = vector.broadcast %314 : vector<1x32xf32> to vector<16x32xf32>
    %316 = arith.addf %313, %315 : vector<16x32xf32>
    %c1_93 = arith.constant 1 : index
    %c0_94 = arith.constant 0 : index
    %c0_95 = arith.constant 0 : index
    %317 = vector.load %arg7[%c1_93, %c0_94, %c0_95] : memref<2x32x64xf32, #tpu.memory_space<vmem>>, vector<1x32x64xf32>
    %318 = vector.shape_cast %317 : vector<1x32x64xf32> to vector<32x64xf32>
    %cst_96 = arith.constant dense<0.000000e+00> : vector<16x64xf32>
    %319 = tpu.matmul %316, %318, %cst_96 {dimension_numbers = #tpu.dot_dimension_numbers<[1], [0], [0], [1], [0, 0, 1, 1], [], []>} : vector<16x32xf32>, vector<32x64xf32>, vector<16x64xf32> -> vector<16x64xf32>
    %c1_97 = arith.constant 1 : index
    %c0_98 = arith.constant 0 : index
    %c0_99 = arith.constant 0 : index
    %320 = vector.load %arg8[%c1_97, %c0_98, %c0_99] : memref<2x1x64xf32, #tpu.memory_space<vmem>>, vector<1x1x64xf32>
    %321 = vector.shape_cast %320 : vector<1x1x64xf32> to vector<1x64xf32>
    %322 = vector.broadcast %321 : vector<1x64xf32> to vector<16x64xf32>
    %323 = arith.addf %319, %322 : vector<16x64xf32>
    %cst_100 = arith.constant 0.000000e+00 : f32
    %324 = vector.broadcast %cst_100 : f32 to vector<16x64xf32>
    %325 = arith.maximumf %323, %324 : vector<16x64xf32>
    %c1_101 = arith.constant 1 : index
    %c0_102 = arith.constant 0 : index
    %c0_103 = arith.constant 0 : index
    %326 = vector.load %arg9[%c1_101, %c0_102, %c0_103] : memref<2x64x32xf32, #tpu.memory_space<vmem>>, vector<1x64x32xf32>
    %327 = vector.shape_cast %326 : vector<1x64x32xf32> to vector<64x32xf32>
    %cst_104 = arith.constant dense<0.000000e+00> : vector<16x32xf32>
    %328 = tpu.matmul %325, %327, %cst_104 {dimension_numbers = #tpu.dot_dimension_numbers<[1], [0], [0], [1], [0, 0, 1, 1], [], []>} : vector<16x64xf32>, vector<64x32xf32>, vector<16x32xf32> -> vector<16x32xf32>
    %329 = vector.extract_strided_slice %190 {offsets = [0, 0], sizes = [1, 32], strides = [1, 1]} : vector<5x32xf32> to vector<1x32xf32>
    %330 = vector.shape_cast %329 : vector<1x32xf32> to vector<32xf32>
    %331 = vector.shape_cast %330 : vector<32xf32> to vector<1x32xf32>
    %332 = vector.broadcast %331 : vector<1x32xf32> to vector<16x32xf32>
    %333 = arith.addf %328, %332 : vector<16x32xf32>
    %334 = arith.addf %316, %333 : vector<16x32xf32>
    %335 = vector.extract_strided_slice %190 {offsets = [3, 0], sizes = [1, 32], strides = [1, 1]} : vector<5x32xf32> to vector<1x32xf32>
    %336 = vector.shape_cast %335 : vector<1x32xf32> to vector<32xf32>
    %337 = vector.extract_strided_slice %190 {offsets = [4, 0], sizes = [1, 32], strides = [1, 1]} : vector<5x32xf32> to vector<1x32xf32>
    %338 = vector.shape_cast %337 : vector<1x32xf32> to vector<32xf32>
    %cst_105 = arith.constant dense<0.000000e+00> : vector<16xf32>
    %339 = vector.multi_reduction <add>, %334, %cst_105 [1] : vector<16x32xf32> to vector<16xf32>
    %340 = vector.shape_cast %339 : vector<16xf32> to vector<16x1xf32>
    %cst_106 = arith.constant 3.200000e+01 : f32
    %341 = vector.broadcast %cst_106 : f32 to vector<16x1xf32>
    %342 = arith.divf %340, %341 : vector<16x1xf32>
    %343 = vector.broadcast %342 : vector<16x1xf32> to vector<16x32xf32>
    %344 = arith.subf %334, %343 : vector<16x32xf32>
    %345 = arith.mulf %344, %344 : vector<16x32xf32>
    %cst_107 = arith.constant dense<0.000000e+00> : vector<16xf32>
    %346 = vector.multi_reduction <add>, %345, %cst_107 [1] : vector<16x32xf32> to vector<16xf32>
    %347 = vector.shape_cast %346 : vector<16xf32> to vector<16x1xf32>
    %cst_108 = arith.constant 3.200000e+01 : f32
    %348 = vector.broadcast %cst_108 : f32 to vector<16x1xf32>
    %349 = arith.divf %347, %348 : vector<16x1xf32>
    %350 = vector.broadcast %342 : vector<16x1xf32> to vector<16x32xf32>
    %351 = arith.subf %334, %350 : vector<16x32xf32>
    %cst_109 = arith.constant 9.99999974E-6 : f32
    %352 = vector.broadcast %cst_109 : f32 to vector<16x1xf32>
    %353 = arith.addf %349, %352 : vector<16x1xf32>
    %354 = math.rsqrt %353 : vector<16x1xf32>
    %355 = vector.broadcast %354 : vector<16x1xf32> to vector<16x32xf32>
    %356 = arith.mulf %351, %355 : vector<16x32xf32>
    %357 = vector.shape_cast %336 : vector<32xf32> to vector<1x32xf32>
    %358 = vector.broadcast %357 : vector<1x32xf32> to vector<16x32xf32>
    %359 = arith.mulf %356, %358 : vector<16x32xf32>
    %360 = vector.shape_cast %338 : vector<32xf32> to vector<1x32xf32>
    %361 = vector.broadcast %360 : vector<1x32xf32> to vector<16x32xf32>
    %362 = arith.addf %359, %361 : vector<16x32xf32>
    %363 = vector.shape_cast %362 : vector<16x32xf32> to vector<2x8x32xf32>
    %c0_110 = arith.constant 0 : index
    %c0_111 = arith.constant 0 : index
    %c0_112 = arith.constant 0 : index
    %364 = vector.load %arg11[%c0_110, %c0_111, %c0_112] : memref<2x8x32xf32, #tpu.memory_space<vmem>>, vector<2x8x32xf32>
    tpu.vector_store %arg11[%c0_110, %c0_111, %c0_112], %363 {strides = array<i32>} : memref<2x8x32xf32, #tpu.memory_space<vmem>>, vector<2x8x32xf32>,
    return
  }
  func.func @transform_0(%arg0: i32) -> (i32, i32, i32) {
    %c0_i32 = arith.constant 0 : i32
    %c0_i32_0 = arith.constant 0 : i32
    %c0_i32_1 = arith.constant 0 : i32
    return %arg0, %c0_i32, %c0_i32_0 : i32, i32, i32
  }
  func.func @transform_1(%arg0: i32) -> (i32, i32) {
    %c0_i32 = arith.constant 0 : i32
    %c0_i32_0 = arith.constant 0 : i32
    %c0_i32_1 = arith.constant 0 : i32
    return %c0_i32, %c0_i32_0 : i32, i32
  }
  func.func @transform_2(%arg0: i32) -> (i32, i32) {
    %c0_i32 = arith.constant 0 : i32
    %c0_i32_0 = arith.constant 0 : i32
    %c0_i32_1 = arith.constant 0 : i32
    return %c0_i32, %c0_i32_0 : i32, i32
  }
  func.func @transform_3(%arg0: i32) -> (i32, i32) {
    %c0_i32 = arith.constant 0 : i32
    %c0_i32_0 = arith.constant 0 : i32
    %c0_i32_1 = arith.constant 0 : i32
    return %c0_i32, %c0_i32_0 : i32, i32
  }
  func.func @transform_4(%arg0: i32) -> (i32, i32) {
    %c0_i32 = arith.constant 0 : i32
    %c0_i32_0 = arith.constant 0 : i32
    %c0_i32_1 = arith.constant 0 : i32
    return %c0_i32, %c0_i32_0 : i32, i32
  }
  func.func @transform_5(%arg0: i32) -> (i32, i32) {
    %c0_i32 = arith.constant 0 : i32
    %c0_i32_0 = arith.constant 0 : i32
    %c0_i32_1 = arith.constant 0 : i32
    return %c0_i32, %c0_i32_0 : i32, i32
  }
  func.func @transform_6(%arg0: i32) -> (i32, i32, i32) {
    %c0_i32 = arith.constant 0 : i32
    %c0_i32_0 = arith.constant 0 : i32
    %c0_i32_1 = arith.constant 0 : i32
    %c0_i32_2 = arith.constant 0 : i32
    return %c0_i32, %c0_i32_0, %c0_i32_1 : i32, i32, i32
  }
  func.func @transform_7(%arg0: i32) -> (i32, i32, i32) {
    %c0_i32 = arith.constant 0 : i32
    %c0_i32_0 = arith.constant 0 : i32
    %c0_i32_1 = arith.constant 0 : i32
    %c0_i32_2 = arith.constant 0 : i32
    return %c0_i32, %c0_i32_0, %c0_i32_1 : i32, i32, i32
  }
  func.func @transform_8(%arg0: i32) -> (i32, i32, i32) {
    %c0_i32 = arith.constant 0 : i32
    %c0_i32_0 = arith.constant 0 : i32
    %c0_i32_1 = arith.constant 0 : i32
    %c0_i32_2 = arith.constant 0 : i32
    return %c0_i32, %c0_i32_0, %c0_i32_1 : i32, i32, i32
  }
  func.func @transform_9(%arg0: i32) -> (i32, i32, i32) {
    %c0_i32 = arith.constant 0 : i32
    %c0_i32_0 = arith.constant 0 : i32
    %c0_i32_1 = arith.constant 0 : i32
    %c0_i32_2 = arith.constant 0 : i32
    return %c0_i32, %c0_i32_0, %c0_i32_1 : i32, i32, i32
  }
  func.func @transform_10(%arg0: i32) -> (i32, i32, i32) {
    %c0_i32 = arith.constant 0 : i32
    %c0_i32_0 = arith.constant 0 : i32
    %c0_i32_1 = arith.constant 0 : i32
    return %arg0, %c0_i32, %c0_i32_0 : i32, i32, i32
  }
}

</mosaic_0001>

<llo_original>
// kernel: tpu_custom_call.1
$region0: #{tpu_custom_call.1}
  #allocation0 [shape = 'u32[]', space=smem, size = 0x4, offset = 0x4, fixed_abs, tag = 'smem constant byte address 0x4 - core index']
  #allocation1 [shape = 'u32[144,128]{1,0:T(1,128)}', space=vmem, size = 0x12000, scoped, tag = 'internal scratch']
  %s0 = inlined_call_operand.vmem [shape: f32[2,8,32], index: 0, kind: input, shape index: {}]
  %s1 = inlined_call_operand.vmem [shape: f32[32,32], index: 1, kind: input, shape index: {}]
  %s2 = inlined_call_operand.vmem [shape: f32[32,32], index: 2, kind: input, shape index: {}]
  %s3 = inlined_call_operand.vmem [shape: f32[32,32], index: 3, kind: input, shape index: {}]
  %s4 = inlined_call_operand.vmem [shape: f32[32,32], index: 4, kind: input, shape index: {}]
  %s5 = inlined_call_operand.vmem [shape: f32[4,32], index: 5, kind: input, shape index: {}]
  %s6 = inlined_call_operand.vmem [shape: f32[2,32,64], index: 6, kind: input, shape index: {}]
  %s7 = inlined_call_operand.vmem [shape: f32[2,1,64], index: 7, kind: input, shape index: {}]
  %s8 = inlined_call_operand.vmem [shape: f32[2,64,32], index: 8, kind: input, shape index: {}]
  %s9 = inlined_call_operand.vmem [shape: f32[2,5,32], index: 9, kind: input, shape index: {}]
  %s10 = inlined_call_operand.hbm [shape: f32[2,8,32], index: 10, kind: output, shape index: {}]
  %s11 = sld [smem:[#allocation0]]
  $region50: #{tpu_custom_call.1} parent=0
    _
  %s13 = ssub.s32 1, %s11
  %s14 = scalar_select 0, %s13, %s11
  $region1: #{tpu_custom_call.1} parent=0
    #allocation2 [shape = 'u8[8192]{0}', space=vmem, size = 0x2000, scoped, tag = 'output window, operand 0, single buffered']
    #allocation3 [shape = 's32[1]{0}', space=sflag, size = 0x4, scoped, tag = 'scoped memory for tpu_custom_call.1']
    %15 = vsyncpa [#allocation3], 0
    // Predicated region
    $region2: #{tpu_custom_call.1} parent=1 // pred_check
      _
    $region3: #{tpu_custom_call.1} parent=1 // pred_check_branch
      %17 = sbr.rel (0) target = $region5
    $region4: #{tpu_custom_call.1} parent=1 // pred_region
      _
    $region5: #{tpu_custom_call.1} parent=1 // pred_fallthru
      _
    // Predicated region
    $region6: #{tpu_custom_call.1} parent=1 // pred_check
      _
    $region7: #{tpu_custom_call.1} parent=1 // pred_check_branch
      %19 = sbr.rel (0) target = $region9
    $region8: #{tpu_custom_call.1} parent=1 // pred_region
      _
    $region9: #{tpu_custom_call.1} parent=1 // pred_fallthru
      _
    // Predicated region
    $region10: #{tpu_custom_call.1} parent=1 // pred_check
      _
    $region11: #{tpu_custom_call.1} parent=1 // pred_check_branch
      %21 = sbr.rel (0) target = $region13
    $region12: #{tpu_custom_call.1} parent=1 // pred_region
      _
    $region13: #{tpu_custom_call.1} parent=1 // pred_fallthru
      _
    // Predicated region
    $region14: #{tpu_custom_call.1} parent=1 // pred_check
      _
    $region15: #{tpu_custom_call.1} parent=1 // pred_check_branch
      %23 = sbr.rel (0) target = $region17
    $region16: #{tpu_custom_call.1} parent=1 // pred_region
      _
    $region17: #{tpu_custom_call.1} parent=1 // pred_fallthru
      _
    // Predicated region
    $region18: #{tpu_custom_call.1} parent=1 // pred_check
      _
    $region19: #{tpu_custom_call.1} parent=1 // pred_check_branch
      %25 = sbr.rel (0) target = $region21
    $region20: #{tpu_custom_call.1} parent=1 // pred_region
      _
    $region21: #{tpu_custom_call.1} parent=1 // pred_fallthru
      _
    // Predicated region
    $region22: #{tpu_custom_call.1} parent=1 // pred_check
      _
    $region23: #{tpu_custom_call.1} parent=1 // pred_check_branch
      %27 = sbr.rel (0) target = $region25
    $region24: #{tpu_custom_call.1} parent=1 // pred_region
      _
    $region25: #{tpu_custom_call.1} parent=1 // pred_fallthru
      _
    // Predicated region
    $region26: #{tpu_custom_call.1} parent=1 // pred_check
      _
    $region27: #{tpu_custom_call.1} parent=1 // pred_check_branch
      %29 = sbr.rel (0) target = $region29
    $region28: #{tpu_custom_call.1} parent=1 // pred_region
      _
    $region29: #{tpu_custom_call.1} parent=1 // pred_fallthru
      _
    // Predicated region
    $region30: #{tpu_custom_call.1} parent=1 // pred_check
      _
    $region31: #{tpu_custom_call.1} parent=1 // pred_check_branch
      %31 = sbr.rel (0) target = $region33
    $region32: #{tpu_custom_call.1} parent=1 // pred_region
      _
    $region33: #{tpu_custom_call.1} parent=1 // pred_fallthru
      _
    // Predicated region
    $region34: #{tpu_custom_call.1} parent=1 // pred_check
      _
    $region35: #{tpu_custom_call.1} parent=1 // pred_check_branch
      %33 = sbr.rel (0) target = $region37
    $region36: #{tpu_custom_call.1} parent=1 // pred_region
      _
    $region37: #{tpu_custom_call.1} parent=1 // pred_fallthru
      _
    // Predicated region
    $region38: #{tpu_custom_call.1} parent=1 // pred_check
      _
    $region39: #{tpu_custom_call.1} parent=1 // pred_check_branch
      %35 = sbr.rel (0) target = $region41
    $region40: #{tpu_custom_call.1} parent=1 // pred_region
      _
    $region41: #{tpu_custom_call.1} parent=1 // pred_fallthru
      _
    %v36 = vld [vmem:[%s1] sm:$0xff]
    %v37 = vld [vmem:[%s1 + $0x8] sm:$0xff]
    %v38 = vld [vmem:[%s1 + $0x10] sm:$0xff]
    %v39 = vld [vmem:[%s1 + $0x18] sm:$0xff]
    %v40 = vld [vmem:[%s2] sm:$0xff]
    %v41 = vld [vmem:[%s2 + $0x8] sm:$0xff]
    %v42 = vld [vmem:[%s2 + $0x10] sm:$0xff]
    %v43 = vld [vmem:[%s2 + $0x18] sm:$0xff]
    %v44 = vld [vmem:[%s3] sm:$0xff]
    %v45 = vld [vmem:[%s3 + $0x8] sm:$0xff]
    %v46 = vld [vmem:[%s3 + $0x10] sm:$0xff]
    %v47 = vld [vmem:[%s3 + $0x18] sm:$0xff]
    %v48 = vld [vmem:[%s4] sm:$0xff]
    %v49 = vld [vmem:[%s4 + $0x8] sm:$0xff]
    %v50 = vld [vmem:[%s4 + $0x10] sm:$0xff]
    %v51 = vld [vmem:[%s4 + $0x18] sm:$0xff]
    %v52 = vld [vmem:[%s5] sm:$0xf]
    %v53 = vld [vmem:[%s0] sm:$0xff]
    %v54 = vld [vmem:[%s0 + $0x8] sm:$0xff]
    %v55 = vld [vmem:[%s9] sm:$0x1f]
    %v56 = vlaneseq
    %v57 = vshrl.u32 %v56, 7
    %v58 = vsub.s32 0, %v57
    %v59 = vrot.slane %v52, %v58
    %vm60 = vcmask 261120
    %v62 = vsel %vm60, %v53, 0
    %v65 = vsel %vm60, %v54, 0
    %67 = vmatprep.subr.mxu0 0.0
    %68 = vmatpush1.msra.mxu0 %v36
    %69 = vmatprep.subr.mxu0 0.0
    %70 = vmatpush1.msra.mxu0 %v37
    %71 = vmatprep.subr.mxu0 0.0
    %72 = vmatpush1.msra.mxu0 %v38
    %73 = vmatprep.subr.mxu0 0.0
    %74 = vmatpush1.msra.mxu0 %v39
    %75 = vmatprep.subr.mxu0 0.0
    %76 = vmatpush1.msra.mxu0 0.0
    %77 = vmatprep.subr.mxu0 0.0
    %78 = vmatpush1.msra.mxu0 0.0
    %79 = vmatprep.subr.mxu0 0.0
    %80 = vmatpush1.msra.mxu0 0.0
    %81 = vmatprep.subr.mxu0 0.0
    %82 = vmatpush1.msra.mxu0 0.0
    %83 = vmatprep.subr.mxu0 0.0
    %84 = vmatpush1.msra.mxu0 0.0
    %85 = vmatprep.subr.mxu0 0.0
    %86 = vmatpush1.msra.mxu0 0.0
    %87 = vmatprep.subr.mxu0 0.0
    %88 = vmatpush1.msra.mxu0 0.0
    %89 = vmatprep.subr.mxu0 0.0
    %90 = vmatpush1.msra.mxu0 0.0
    %91 = vmatprep.subr.mxu0 0.0
    %92 = vmatpush1.msra.mxu0 0.0
    %93 = vmatprep.subr.mxu0 0.0
    %94 = vmatpush1.msra.mxu0 0.0
    %95 = vmatprep.subr.mxu0 0.0
    %96 = vmatpush1.msra.mxu0 0.0
    %97 = vmatprep.subr.mxu0 0.0
    %98 = vmatpush1.msra.mxu0 0.0
    %99 = vmatprep.subr.mxu0 0.0
    %100 = vmatpush1.msra.mxu0 0.0
    %101 = vmatprep.subr.mxu0 0.0
    %102 = vmatpush1.msra.mxu0 0.0
    %103 = vmatprep.subr.mxu0 0.0
    %104 = vmatpush1.msra.mxu0 0.0
    %105 = vmatprep.subr.mxu0 0.0
    %106 = vmatpush1.msra.mxu0 0.0
    %107 = vmatprep.subr.mxu0 0.0
    %108 = vmatpush1.msra.mxu0 0.0
    %109 = vmatprep.subr.mxu0 0.0
    %110 = vmatpush1.msra.mxu0 0.0
    %111 = vmatprep.subr.mxu0 0.0
    %112 = vmatpush1.msra.mxu0 0.0
    %113 = vmatprep.subr.mxu0 0.0
    %114 = vmatpush1.msra.mxu0 0.0
    %115 = vmatprep.subr.mxu0 0.0
    %116 = vmatpush1.msra.mxu0 0.0
    %117 = vmatprep.subr.mxu0 0.0
    %118 = vmatpush1.msra.mxu0 0.0
    %119 = vmatprep.subr.mxu0 0.0
    %120 = vmatpush1.msra.mxu0 0.0
    %121 = vmatprep.subr.mxu0 0.0
    %122 = vmatpush1.msra.mxu0 0.0
    %123 = vmatprep.subr.mxu0 0.0
    %124 = vmatpush1.msra.mxu0 0.0
    %125 = vmatprep.subr.mxu0 0.0
    %126 = vmatpush1.msra.mxu0 0.0
    %127 = vmatprep.subr.mxu0 0.0
    %128 = vmatpush1.msra.mxu0 0.0
    %129 = vmatprep.subr.mxu0 0.0
    %130 = vmatpush1.msra.mxu0 0.0
    %131 = vmatprep.mubr.f32.mxu0 0.0
    %132 = vmatmul.mubr.f32.gmra.mrb[0].mxu0 %v62
    %v133 = vpop.f32.mrb[0].mxu0
    %v134 = vadd.f32 %v59, %v133
    %v135 = vpop.f32.mrb[0].mxu0
    %136 = vmatprep.mubr.f32.mxu0 0.0
    %137 = vmatmul.mubr.f32.gmra.mrb[0].mxu0 %v65
    %v138 = vpop.f32.mrb[0].mxu0
    %v139 = vadd.f32 %v59, %v138
    %v140 = vpop.f32.mrb[0].mxu0
    %141 = vdwg.mxu0
    %v142 = vmul.f32 %v134, 0.35355338
    %v143 = vmul.f32 %v139, 0.35355338
    %v144 = vlaneseq
    %v145 = vshrl.u32 %v144, 7
    %v146 = vsub.s32 1, %v145
    %v147 = vrot.slane %v52, %v146
    %148 = vmatprep.subr.mxu0 0.0
    %149 = vmatpush1.msra.mxu0 %v40
    %150 = vmatprep.subr.mxu0 0.0
    %151 = vmatpush1.msra.mxu0 %v41
    %152 = vmatprep.subr.mxu0 0.0
    %153 = vmatpush1.msra.mxu0 %v42
    %154 = vmatprep.subr.mxu0 0.0
    %155 = vmatpush1.msra.mxu0 %v43
    %156 = vmatprep.subr.mxu0 0.0
    %157 = vmatpush1.msra.mxu0 0.0
    %158 = vmatprep.subr.mxu0 0.0
    %159 = vmatpush1.msra.mxu0 0.0
    %160 = vmatprep.subr.mxu0 0.0
    %161 = vmatpush1.msra.mxu0 0.0
    %162 = vmatprep.subr.mxu0 0.0
    %163 = vmatpush1.msra.mxu0 0.0
    %164 = vmatprep.subr.mxu0 0.0
    %165 = vmatpush1.msra.mxu0 0.0
    %166 = vmatprep.subr.mxu0 0.0
    %167 = vmatpush1.msra.mxu0 0.0
    %168 = vmatprep.subr.mxu0 0.0
    %169 = vmatpush1.msra.mxu0 0.0
    %170 = vmatprep.subr.mxu0 0.0
    %171 = vmatpush1.msra.mxu0 0.0
    %172 = vmatprep.subr.mxu0 0.0
    %173 = vmatpush1.msra.mxu0 0.0
    %174 = vmatprep.subr.mxu0 0.0
    %175 = vmatpush1.msra.mxu0 0.0
    %176 = vmatprep.subr.mxu0 0.0
    %177 = vmatpush1.msra.mxu0 0.0
    %178 = vmatprep.subr.mxu0 0.0
    %179 = vmatpush1.msra.mxu0 0.0
    %180 = vmatprep.subr.mxu0 0.0
    %181 = vmatpush1.msra.mxu0 0.0
    %182 = vmatprep.subr.mxu0 0.0
    %183 = vmatpush1.msra.mxu0 0.0
    %184 = vmatprep.subr.mxu0 0.0
    %185 = vmatpush1.msra.mxu0 0.0
    %186 = vmatprep.subr.mxu0 0.0
    %187 = vmatpush1.msra.mxu0 0.0
    %188 = vmatprep.subr.mxu0 0.0
    %189 = vmatpush1.msra.mxu0 0.0
    %190 = vmatprep.subr.mxu0 0.0
    %191 = vmatpush1.msra.mxu0 0.0
    %192 = vmatprep.subr.mxu0 0.0
    %193 = vmatpush1.msra.mxu0 0.0
    %194 = vmatprep.subr.mxu0 0.0
    %195 = vmatpush1.msra.mxu0 0.0
    %196 = vmatprep.subr.mxu0 0.0
    %197 = vmatpush1.msra.mxu0 0.0
    %198 = vmatprep.subr.mxu0 0.0
    %199 = vmatpush1.msra.mxu0 0.0
    %200 = vmatprep.subr.mxu0 0.0
    %201 = vmatpush1.msra.mxu0 0.0
    %202 = vmatprep.subr.mxu0 0.0
    %203 = vmatpush1.msra.mxu0 0.0
    %204 = vmatprep.subr.mxu0 0.0
    %205 = vmatpush1.msra.mxu0 0.0
    %206 = vmatprep.subr.mxu0 0.0
    %207 = vmatpush1.msra.mxu0 0.0
    %208 = vmatprep.subr.mxu0 0.0
    %209 = vmatpush1.msra.mxu0 0.0
    %210 = vmatprep.subr.mxu0 0.0
    %211 = vmatpush1.msra.mxu0 0.0
    %212 = vmatprep.mubr.f32.mxu0 0.0
    %213 = vmatmul.mubr.f32.gmra.mrb[0].mxu0 %v62
    %v214 = vpop.f32.mrb[0].mxu0
    %v215 = vadd.f32 %v147, %v214
    %v216 = vpop.f32.mrb[0].mxu0
    %217 = vmatprep.mubr.f32.mxu0 0.0
    %218 = vmatmul.mubr.f32.gmra.mrb[0].mxu0 %v65
    %v219 = vpop.f32.mrb[0].mxu0
    %v220 = vadd.f32 %v147, %v219
    %v221 = vpop.f32.mrb[0].mxu0
    %222 = vdwg.mxu0
    %v223 = vlaneseq
    %v224 = vshrl.u32 %v223, 7
    %v225 = vsub.s32 2, %v224
    %v226 = vrot.slane %v52, %v225
    %227 = vmatprep.subr.mxu0 0.0
    %228 = vmatpush1.msra.mxu0 %v44
    %229 = vmatprep.subr.mxu0 0.0
    %230 = vmatpush1.msra.mxu0 %v45
    %231 = vmatprep.subr.mxu0 0.0
    %232 = vmatpush1.msra.mxu0 %v46
    %233 = vmatprep.subr.mxu0 0.0
    %234 = vmatpush1.msra.mxu0 %v47
    %235 = vmatprep.subr.mxu0 0.0
    %236 = vmatpush1.msra.mxu0 0.0
    %237 = vmatprep.subr.mxu0 0.0
    %238 = vmatpush1.msra.mxu0 0.0
    %239 = vmatprep.subr.mxu0 0.0
    %240 = vmatpush1.msra.mxu0 0.0
    %241 = vmatprep.subr.mxu0 0.0
    %242 = vmatpush1.msra.mxu0 0.0
    %243 = vmatprep.subr.mxu0 0.0
    %244 = vmatpush1.msra.mxu0 0.0
    %245 = vmatprep.subr.mxu0 0.0
    %246 = vmatpush1.msra.mxu0 0.0
    %247 = vmatprep.subr.mxu0 0.0
    %248 = vmatpush1.msra.mxu0 0.0
    %249 = vmatprep.subr.mxu0 0.0
    %250 = vmatpush1.msra.mxu0 0.0
    %251 = vmatprep.subr.mxu0 0.0
    %252 = vmatpush1.msra.mxu0 0.0
    %253 = vmatprep.subr.mxu0 0.0
    %254 = vmatpush1.msra.mxu0 0.0
    %255 = vmatprep.subr.mxu0 0.0
    %256 = vmatpush1.msra.mxu0 0.0
    %257 = vmatprep.subr.mxu0 0.0
    %258 = vmatpush1.msra.mxu0 0.0
    %259 = vmatprep.subr.mxu0 0.0
    %260 = vmatpush1.msra.mxu0 0.0
    %261 = vmatprep.subr.mxu0 0.0
    %262 = vmatpush1.msra.mxu0 0.0
    %263 = vmatprep.subr.mxu0 0.0
    %264 = vmatpush1.msra.mxu0 0.0
    %265 = vmatprep.subr.mxu0 0.0
    %266 = vmatpush1.msra.mxu0 0.0
    %267 = vmatprep.subr.mxu0 0.0
    %268 = vmatpush1.msra.mxu0 0.0
    %269 = vmatprep.subr.mxu0 0.0
    %270 = vmatpush1.msra.mxu0 0.0
    %271 = vmatprep.subr.mxu0 0.0
    %272 = vmatpush1.msra.mxu0 0.0
    %273 = vmatprep.subr.mxu0 0.0
    %274 = vmatpush1.msra.mxu0 0.0
    %275 = vmatprep.subr.mxu0 0.0
    %276 = vmatpush1.msra.mxu0 0.0
    %277 = vmatprep.subr.mxu0 0.0
    %278 = vmatpush1.msra.mxu0 0.0
    %279 = vmatprep.subr.mxu0 0.0
    %280 = vmatpush1.msra.mxu0 0.0
    %281 = vmatprep.subr.mxu0 0.0
    %282 = vmatpush1.msra.mxu0 0.0
    %283 = vmatprep.subr.mxu0 0.0
    %284 = vmatpush1.msra.mxu0 0.0
    %285 = vmatprep.subr.mxu0 0.0
    %286 = vmatpush1.msra.mxu0 0.0
    %287 = vmatprep.subr.mxu0 0.0
    %288 = vmatpush1.msra.mxu0 0.0
    %289 = vmatprep.subr.mxu0 0.0
    %290 = vmatpush1.msra.mxu0 0.0
    %291 = vmatprep.mubr.f32.mxu0 0.0
    %292 = vmatmul.mubr.f32.gmra.mrb[0].mxu0 %v62
    %v293 = vpop.f32.mrb[0].mxu0
    %v294 = vadd.f32 %v226, %v293
    %v295 = vpop.f32.mrb[0].mxu0
    %296 = vmatprep.mubr.f32.mxu0 0.0
    %297 = vmatmul.mubr.f32.gmra.mrb[0].mxu0 %v65
    %v298 = vpop.f32.mrb[0].mxu0
    %v299 = vadd.f32 %v226, %v298
    %v300 = vpop.f32.mrb[0].mxu0
    %301 = vdwg.mxu0
    %vm302 = vcmask 64512
    %v304 = vsel %vm302, %v142, 0
    %v307 = vsel %vm302, %v215, 0
    %309 = vmatprep.subr.mxu0 0.0
    %310 = vmatpush1.xpose.msra.mxu0 %v307
    %311 = vmatprep.subr.mxu0 0.0
    %312 = vmatpush1.xpose.msra.mxu0 0.0
    %313 = vmatprep.subr.mxu0 0.0
    %314 = vmatpush1.xpose.msra.mxu0 0.0
    %315 = vmatprep.subr.mxu0 0.0
    %316 = vmatpush1.xpose.msra.mxu0 0.0
    %317 = vmatprep.subr.mxu0 0.0
    %318 = vmatpush1.xpose.msra.mxu0 0.0
    %319 = vmatprep.subr.mxu0 0.0
    %320 = vmatpush1.xpose.msra.mxu0 0.0
    %321 = vmatprep.subr.mxu0 0.0
    %322 = vmatpush1.xpose.msra.mxu0 0.0
    %323 = vmatprep.subr.mxu0 0.0
    %324 = vmatpush1.xpose.msra.mxu0 0.0
    %325 = vmatprep.subr.mxu0 0.0
    %326 = vmatpush1.xpose.msra.mxu0 0.0
    %327 = vmatprep.subr.mxu0 0.0
    %328 = vmatpush1.xpose.msra.mxu0 0.0
    %329 = vmatprep.subr.mxu0 0.0
    %330 = vmatpush1.xpose.msra.mxu0 0.0
    %331 = vmatprep.subr.mxu0 0.0
    %332 = vmatpush1.xpose.msra.mxu0 0.0
    %333 = vmatprep.subr.mxu0 0.0
    %334 = vmatpush1.xpose.msra.mxu0 0.0
    %335 = vmatprep.subr.mxu0 0.0
    %336 = vmatpush1.xpose.msra.mxu0 0.0
    %337 = vmatprep.subr.mxu0 0.0
    %338 = vmatpush1.xpose.msra.mxu0 0.0
    %339 = vmatprep.subr.mxu0 0.0
    %340 = vmatpush1.xpose.msra.mxu0 0.0
    %341 = vmatprep.subr.mxu0 0.0
    %342 = vmatpush1.xpose.msra.mxu0 0.0
    %343 = vmatprep.subr.mxu0 0.0
    %344 = vmatpush1.xpose.msra.mxu0 0.0
    %345 = vmatprep.subr.mxu0 0.0
    %346 = vmatpush1.xpose.msra.mxu0 0.0
    %347 = vmatprep.subr.mxu0 0.0
    %348 = vmatpush1.xpose.msra.mxu0 0.0
    %349 = vmatprep.subr.mxu0 0.0
    %350 = vmatpush1.xpose.msra.mxu0 0.0
    %351 = vmatprep.subr.mxu0 0.0
    %352 = vmatpush1.xpose.msra.mxu0 0.0
    %353 = vmatprep.subr.mxu0 0.0
    %354 = vmatpush1.xpose.msra.mxu0 0.0
    %355 = vmatprep.subr.mxu0 0.0
    %356 = vmatpush1.xpose.msra.mxu0 0.0
    %357 = vmatprep.subr.mxu0 0.0
    %358 = vmatpush1.xpose.msra.mxu0 0.0
    %359 = vmatprep.subr.mxu0 0.0
    %360 = vmatpush1.xpose.msra.mxu0 0.0
    %361 = vmatprep.subr.mxu0 0.0
    %362 = vmatpush1.xpose.msra.mxu0 0.0
    %363 = vmatprep.subr.mxu0 0.0
    %364 = vmatpush1.xpose.msra.mxu0 0.0
    %365 = vmatprep.subr.mxu0 0.0
    %366 = vmatpush1.xpose.msra.mxu0 0.0
    %367 = vmatprep.subr.mxu0 0.0
    %368 = vmatpush1.xpose.msra.mxu0 0.0
    %369 = vmatprep.subr.mxu0 0.0
    %370 = vmatpush1.xpose.msra.mxu0 0.0
    %371 = vmatprep.subr.mxu0 0.0
    %372 = vmatpush1.xpose.msra.mxu0 0.0
    %373 = vmatprep.mubr.f32.mxu0 0.0
    %374 = vmatmul.mubr.f32.gmra.mrb[0].mxu0 %v304
    %v375 = vpop.f32.mrb[0].mxu0
    %v376 = vadd.f32 0.0, %v375
    %v377 = vpop.f32.mrb[0].mxu0
    %378 = vdwg.mxu0
    %v380 = vsel %vm302, %v143, 0
    %v383 = vsel %vm302, %v220, 0
    %385 = vmatprep.subr.mxu0 0.0
    %386 = vmatpush1.xpose.msra.mxu0 %v383
    %387 = vmatprep.subr.mxu0 0.0
    %388 = vmatpush1.xpose.msra.mxu0 0.0
    %389 = vmatprep.subr.mxu0 0.0
    %390 = vmatpush1.xpose.msra.mxu0 0.0
    %391 = vmatprep.subr.mxu0 0.0
    %392 = vmatpush1.xpose.msra.mxu0 0.0
    %393 = vmatprep.subr.mxu0 0.0
    %394 = vmatpush1.xpose.msra.mxu0 0.0
    %395 = vmatprep.subr.mxu0 0.0
    %396 = vmatpush1.xpose.msra.mxu0 0.0
    %397 = vmatprep.subr.mxu0 0.0
    %398 = vmatpush1.xpose.msra.mxu0 0.0
    %399 = vmatprep.subr.mxu0 0.0
    %400 = vmatpush1.xpose.msra.mxu0 0.0
    %401 = vmatprep.subr.mxu0 0.0
    %402 = vmatpush1.xpose.msra.mxu0 0.0
    %403 = vmatprep.subr.mxu0 0.0
    %404 = vmatpush1.xpose.msra.mxu0 0.0
    %405 = vmatprep.subr.mxu0 0.0
    %406 = vmatpush1.xpose.msra.mxu0 0.0
    %407 = vmatprep.subr.mxu0 0.0
    %408 = vmatpush1.xpose.msra.mxu0 0.0
    %409 = vmatprep.subr.mxu0 0.0
    %410 = vmatpush1.xpose.msra.mxu0 0.0
    %411 = vmatprep.subr.mxu0 0.0
    %412 = vmatpush1.xpose.msra.mxu0 0.0
    %413 = vmatprep.subr.mxu0 0.0
    %414 = vmatpush1.xpose.msra.mxu0 0.0
    %415 = vmatprep.subr.mxu0 0.0
    %416 = vmatpush1.xpose.msra.mxu0 0.0
    %417 = vmatprep.subr.mxu0 0.0
    %418 = vmatpush1.xpose.msra.mxu0 0.0
    %419 = vmatprep.subr.mxu0 0.0
    %420 = vmatpush1.xpose.msra.mxu0 0.0
    %421 = vmatprep.subr.mxu0 0.0
    %422 = vmatpush1.xpose.msra.mxu0 0.0
    %423 = vmatprep.subr.mxu0 0.0
    %424 = vmatpush1.xpose.msra.mxu0 0.0
    %425 = vmatprep.subr.mxu0 0.0
    %426 = vmatpush1.xpose.msra.mxu0 0.0
    %427 = vmatprep.subr.mxu0 0.0
    %428 = vmatpush1.xpose.msra.mxu0 0.0
    %429 = vmatprep.subr.mxu0 0.0
    %430 = vmatpush1.xpose.msra.mxu0 0.0
    %431 = vmatprep.subr.mxu0 0.0
    %432 = vmatpush1.xpose.msra.mxu0 0.0
    %433 = vmatprep.subr.mxu0 0.0
    %434 = vmatpush1.xpose.msra.mxu0 0.0
    %435 = vmatprep.subr.mxu0 0.0
    %436 = vmatpush1.xpose.msra.mxu0 0.0
    %437 = vmatprep.subr.mxu0 0.0
    %438 = vmatpush1.xpose.msra.mxu0 0.0
    %439 = vmatprep.subr.mxu0 0.0
    %440 = vmatpush1.xpose.msra.mxu0 0.0
    %441 = vmatprep.subr.mxu0 0.0
    %442 = vmatpush1.xpose.msra.mxu0 0.0
    %443 = vmatprep.subr.mxu0 0.0
    %444 = vmatpush1.xpose.msra.mxu0 0.0
    %445 = vmatprep.subr.mxu0 0.0
    %446 = vmatpush1.xpose.msra.mxu0 0.0
    %447 = vmatprep.subr.mxu0 0.0
    %448 = vmatpush1.xpose.msra.mxu0 0.0
    %449 = vmatprep.mubr.f32.mxu0 0.0
    %450 = vmatmul.mubr.f32.gmra.mrb[0].mxu0 %v380
    %v451 = vpop.f32.mrb[0].mxu0
    %v452 = vadd.f32 0.0, %v451
    %v453 = vpop.f32.mrb[0].mxu0
    %454 = vdwg.mxu0
    %v455 = vsel %vm302, %v376, -inf
    %456 = vmax.xlane.f32.xlu0 %v455
    %v457 = vpop.xlane.xlu0 %456
    %v458 = vsel %vm302, %v452, -inf
    %459 = vmax.xlane.f32.xlu0 %v458
    %v460 = vpop.xlane.xlu0 %459
    %v461 = vsub.f32 %v376, %v457
    %v462 = vsub.f32 %v452, %v460
    %v463 = vmul.f32 %v461, 1.442695
    %v464 = vpow.pop %v463
    %v465 = vmul.f32 %v462, 1.442695
    %v466 = vpow.pop %v465
    %v467 = vsel %vm302, %v464, 0.0
    %468 = vadd.xlane.f32.xlu0 %v467
    %v469 = vpop.xlane.xlu0 %468
    %v470 = vsel %vm302, %v466, 0.0
    %471 = vadd.xlane.f32.xlu0 %v470
    %v472 = vpop.xlane.xlu0 %471
    %v473 = vrcp.pop %v469
    %v474 = vrcp.pop %v472
    %v475 = vmul.f32 %v464, %v473
    %v476 = vmul.f32 %v466, %v474
    %v478 = vsel %vm302, %v475, 0
    %480 = vmatprep.subr.mxu0 0.0
    %481 = vmatpush1.msra.mxu0 %v294
    %482 = vmatprep.subr.mxu0 0.0
    %483 = vmatpush1.msra.mxu0 0.0
    %484 = vmatprep.subr.mxu0 0.0
    %485 = vmatpush1.msra.mxu0 0.0
    %486 = vmatprep.subr.mxu0 0.0
    %487 = vmatpush1.msra.mxu0 0.0
    %488 = vmatprep.subr.mxu0 0.0
    %489 = vmatpush1.msra.mxu0 0.0
    %490 = vmatprep.subr.mxu0 0.0
    %491 = vmatpush1.msra.mxu0 0.0
    %492 = vmatprep.subr.mxu0 0.0
    %493 = vmatpush1.msra.mxu0 0.0
    %494 = vmatprep.subr.mxu0 0.0
    %495 = vmatpush1.msra.mxu0 0.0
    %496 = vmatprep.subr.mxu0 0.0
    %497 = vmatpush1.msra.mxu0 0.0
    %498 = vmatprep.subr.mxu0 0.0
    %499 = vmatpush1.msra.mxu0 0.0
    %500 = vmatprep.subr.mxu0 0.0
    %501 = vmatpush1.msra.mxu0 0.0
    %502 = vmatprep.subr.mxu0 0.0
    %503 = vmatpush1.msra.mxu0 0.0
    %504 = vmatprep.subr.mxu0 0.0
    %505 = vmatpush1.msra.mxu0 0.0
    %506 = vmatprep.subr.mxu0 0.0
    %507 = vmatpush1.msra.mxu0 0.0
    %508 = vmatprep.subr.mxu0 0.0
    %509 = vmatpush1.msra.mxu0 0.0
    %510 = vmatprep.subr.mxu0 0.0
    %511 = vmatpush1.msra.mxu0 0.0
    %512 = vmatprep.subr.mxu0 0.0
    %513 = vmatpush1.msra.mxu0 0.0
    %514 = vmatprep.subr.mxu0 0.0
    %515 = vmatpush1.msra.mxu0 0.0
    %516 = vmatprep.subr.mxu0 0.0
    %517 = vmatpush1.msra.mxu0 0.0
    %518 = vmatprep.subr.mxu0 0.0
    %519 = vmatpush1.msra.mxu0 0.0
    %520 = vmatprep.subr.mxu0 0.0
    %521 = vmatpush1.msra.mxu0 0.0
    %522 = vmatprep.subr.mxu0 0.0
    %523 = vmatpush1.msra.mxu0 0.0
    %524 = vmatprep.subr.mxu0 0.0
    %525 = vmatpush1.msra.mxu0 0.0
    %526 = vmatprep.subr.mxu0 0.0
    %527 = vmatpush1.msra.mxu0 0.0
    %528 = vmatprep.subr.mxu0 0.0
    %529 = vmatpush1.msra.mxu0 0.0
    %530 = vmatprep.subr.mxu0 0.0
    %531 = vmatpush1.msra.mxu0 0.0
    %532 = vmatprep.subr.mxu0 0.0
    %533 = vmatpush1.msra.mxu0 0.0
    %534 = vmatprep.subr.mxu0 0.0
    %535 = vmatpush1.msra.mxu0 0.0
    %536 = vmatprep.subr.mxu0 0.0
    %537 = vmatpush1.msra.mxu0 0.0
    %538 = vmatprep.subr.mxu0 0.0
    %539 = vmatpush1.msra.mxu0 0.0
    %540 = vmatprep.subr.mxu0 0.0
    %541 = vmatpush1.msra.mxu0 0.0
    %542 = vmatprep.subr.mxu0 0.0
    %543 = vmatpush1.msra.mxu0 0.0
    %544 = vmatprep.mubr.f32.mxu0 0.0
    %545 = vmatmul.mubr.f32.gmra.mrb[0].mxu0 %v478
    %v546 = vpop.f32.mrb[0].mxu0
    %v547 = vadd.f32 0.0, %v546
    %v548 = vpop.f32.mrb[0].mxu0
    %549 = vdwg.mxu0
    %v551 = vsel %vm302, %v476, 0
    %553 = vmatprep.subr.mxu0 0.0
    %554 = vmatpush1.msra.mxu0 %v299
    %555 = vmatprep.subr.mxu0 0.0
    %556 = vmatpush1.msra.mxu0 0.0
    %557 = vmatprep.subr.mxu0 0.0
    %558 = vmatpush1.msra.mxu0 0.0
    %559 = vmatprep.subr.mxu0 0.0
    %560 = vmatpush1.msra.mxu0 0.0
    %561 = vmatprep.subr.mxu0 0.0
    %562 = vmatpush1.msra.mxu0 0.0
    %563 = vmatprep.subr.mxu0 0.0
    %564 = vmatpush1.msra.mxu0 0.0
    %565 = vmatprep.subr.mxu0 0.0
    %566 = vmatpush1.msra.mxu0 0.0
    %567 = vmatprep.subr.mxu0 0.0
    %568 = vmatpush1.msra.mxu0 0.0
    %569 = vmatprep.subr.mxu0 0.0
    %570 = vmatpush1.msra.mxu0 0.0
    %571 = vmatprep.subr.mxu0 0.0
    %572 = vmatpush1.msra.mxu0 0.0
    %573 = vmatprep.subr.mxu0 0.0
    %574 = vmatpush1.msra.mxu0 0.0
    %575 = vmatprep.subr.mxu0 0.0
    %576 = vmatpush1.msra.mxu0 0.0
    %577 = vmatprep.subr.mxu0 0.0
    %578 = vmatpush1.msra.mxu0 0.0
    %579 = vmatprep.subr.mxu0 0.0
    %580 = vmatpush1.msra.mxu0 0.0
    %581 = vmatprep.subr.mxu0 0.0
    %582 = vmatpush1.msra.mxu0 0.0
    %583 = vmatprep.subr.mxu0 0.0
    %584 = vmatpush1.msra.mxu0 0.0
    %585 = vmatprep.subr.mxu0 0.0
    %586 = vmatpush1.msra.mxu0 0.0
    %587 = vmatprep.subr.mxu0 0.0
    %588 = vmatpush1.msra.mxu0 0.0
    %589 = vmatprep.subr.mxu0 0.0
    %590 = vmatpush1.msra.mxu0 0.0
    %591 = vmatprep.subr.mxu0 0.0
    %592 = vmatpush1.msra.mxu0 0.0
    %593 = vmatprep.subr.mxu0 0.0
    %594 = vmatpush1.msra.mxu0 0.0
    %595 = vmatprep.subr.mxu0 0.0
    %596 = vmatpush1.msra.mxu0 0.0
    %597 = vmatprep.subr.mxu0 0.0
    %598 = vmatpush1.msra.mxu0 0.0
    %599 = vmatprep.subr.mxu0 0.0
    %600 = vmatpush1.msra.mxu0 0.0
    %601 = vmatprep.subr.mxu0 0.0
    %602 = vmatpush1.msra.mxu0 0.0
    %603 = vmatprep.subr.mxu0 0.0
    %604 = vmatpush1.msra.mxu0 0.0
    %605 = vmatprep.subr.mxu0 0.0
    %606 = vmatpush1.msra.mxu0 0.0
    %607 = vmatprep.subr.mxu0 0.0
    %608 = vmatpush1.msra.mxu0 0.0
    %609 = vmatprep.subr.mxu0 0.0
    %610 = vmatpush1.msra.mxu0 0.0
    %611 = vmatprep.subr.mxu0 0.0
    %612 = vmatpush1.msra.mxu0 0.0
    %613 = vmatprep.subr.mxu0 0.0
    %614 = vmatpush1.msra.mxu0 0.0
    %615 = vmatprep.subr.mxu0 0.0
    %616 = vmatpush1.msra.mxu0 0.0
    %617 = vmatprep.mubr.f32.mxu0 0.0
    %618 = vmatmul.mubr.f32.gmra.mrb[0].mxu0 %v551
    %v619 = vpop.f32.mrb[0].mxu0
    %v620 = vadd.f32 0.0, %v619
    %v621 = vpop.f32.mrb[0].mxu0
    %622 = vdwg.mxu0
    %623 = vrot.lane.b32.xlu0 %v142, 120
    %v624 = vpop.permute.xlu0 %623
    %625 = vrot.lane.b32.xlu0 %v215, 120
    %v626 = vpop.permute.xlu0 %625
    %v627 = vsel %vm302, %v624, 0
    %v629 = vsel %vm302, %v626, 0
    %631 = vmatprep.subr.mxu0 0.0
    %632 = vmatpush1.xpose.msra.mxu0 %v629
    %633 = vmatprep.subr.mxu0 0.0
    %634 = vmatpush1.xpose.msra.mxu0 0.0
    %635 = vmatprep.subr.mxu0 0.0
    %636 = vmatpush1.xpose.msra.mxu0 0.0
    %637 = vmatprep.subr.mxu0 0.0
    %638 = vmatpush1.xpose.msra.mxu0 0.0
    %639 = vmatprep.subr.mxu0 0.0
    %640 = vmatpush1.xpose.msra.mxu0 0.0
    %641 = vmatprep.subr.mxu0 0.0
    %642 = vmatpush1.xpose.msra.mxu0 0.0
    %643 = vmatprep.subr.mxu0 0.0
    %644 = vmatpush1.xpose.msra.mxu0 0.0
    %645 = vmatprep.subr.mxu0 0.0
    %646 = vmatpush1.xpose.msra.mxu0 0.0
    %647 = vmatprep.subr.mxu0 0.0
    %648 = vmatpush1.xpose.msra.mxu0 0.0
    %649 = vmatprep.subr.mxu0 0.0
    %650 = vmatpush1.xpose.msra.mxu0 0.0
    %651 = vmatprep.subr.mxu0 0.0
    %652 = vmatpush1.xpose.msra.mxu0 0.0
    %653 = vmatprep.subr.mxu0 0.0
    %654 = vmatpush1.xpose.msra.mxu0 0.0
    %655 = vmatprep.subr.mxu0 0.0
    %656 = vmatpush1.xpose.msra.mxu0 0.0
    %657 = vmatprep.subr.mxu0 0.0
    %658 = vmatpush1.xpose.msra.mxu0 0.0
    %659 = vmatprep.subr.mxu0 0.0
    %660 = vmatpush1.xpose.msra.mxu0 0.0
    %661 = vmatprep.subr.mxu0 0.0
    %662 = vmatpush1.xpose.msra.mxu0 0.0
    %663 = vmatprep.subr.mxu0 0.0
    %664 = vmatpush1.xpose.msra.mxu0 0.0
    %665 = vmatprep.subr.mxu0 0.0
    %666 = vmatpush1.xpose.msra.mxu0 0.0
    %667 = vmatprep.subr.mxu0 0.0
    %668 = vmatpush1.xpose.msra.mxu0 0.0
    %669 = vmatprep.subr.mxu0 0.0
    %670 = vmatpush1.xpose.msra.mxu0 0.0
    %671 = vmatprep.subr.mxu0 0.0
    %672 = vmatpush1.xpose.msra.mxu0 0.0
    %673 = vmatprep.subr.mxu0 0.0
    %674 = vmatpush1.xpose.msra.mxu0 0.0
    %675 = vmatprep.subr.mxu0 0.0
    %676 = vmatpush1.xpose.msra.mxu0 0.0
    %677 = vmatprep.subr.mxu0 0.0
    %678 = vmatpush1.xpose.msra.mxu0 0.0
    %679 = vmatprep.subr.mxu0 0.0
    %680 = vmatpush1.xpose.msra.mxu0 0.0
    %681 = vmatprep.subr.mxu0 0.0
    %682 = vmatpush1.xpose.msra.mxu0 0.0
    %683 = vmatprep.subr.mxu0 0.0
    %684 = vmatpush1.xpose.msra.mxu0 0.0
    %685 = vmatprep.subr.mxu0 0.0
    %686 = vmatpush1.xpose.msra.mxu0 0.0
    %687 = vmatprep.subr.mxu0 0.0
    %688 = vmatpush1.xpose.msra.mxu0 0.0
    %689 = vmatprep.subr.mxu0 0.0
    %690 = vmatpush1.xpose.msra.mxu0 0.0
    %691 = vmatprep.subr.mxu0 0.0
    %692 = vmatpush1.xpose.msra.mxu0 0.0
    %693 = vmatprep.subr.mxu0 0.0
    %694 = vmatpush1.xpose.msra.mxu0 0.0
    %695 = vmatprep.mubr.f32.mxu0 0.0
    %696 = vmatmul.mubr.f32.gmra.mrb[0].mxu0 %v627
    %v697 = vpop.f32.mrb[0].mxu0
    %v698 = vadd.f32 0.0, %v697
    %v699 = vpop.f32.mrb[0].mxu0
    %700 = vdwg.mxu0
    %701 = vrot.lane.b32.xlu0 %v143, 120
    %v702 = vpop.permute.xlu0 %701
    %703 = vrot.lane.b32.xlu0 %v220, 120
    %v704 = vpop.permute.xlu0 %703
    %v705 = vsel %vm302, %v702, 0
    %v707 = vsel %vm302, %v704, 0
    %709 = vmatprep.subr.mxu0 0.0
    %710 = vmatpush1.xpose.msra.mxu0 %v707
    %711 = vmatprep.subr.mxu0 0.0
    %712 = vmatpush1.xpose.msra.mxu0 0.0
    %713 = vmatprep.subr.mxu0 0.0
    %714 = vmatpush1.xpose.msra.mxu0 0.0
    %715 = vmatprep.subr.mxu0 0.0
    %716 = vmatpush1.xpose.msra.mxu0 0.0
    %717 = vmatprep.subr.mxu0 0.0
    %718 = vmatpush1.xpose.msra.mxu0 0.0
    %719 = vmatprep.subr.mxu0 0.0
    %720 = vmatpush1.xpose.msra.mxu0 0.0
    %721 = vmatprep.subr.mxu0 0.0
    %722 = vmatpush1.xpose.msra.mxu0 0.0
    %723 = vmatprep.subr.mxu0 0.0
    %724 = vmatpush1.xpose.msra.mxu0 0.0
    %725 = vmatprep.subr.mxu0 0.0
    %726 = vmatpush1.xpose.msra.mxu0 0.0
    %727 = vmatprep.subr.mxu0 0.0
    %728 = vmatpush1.xpose.msra.mxu0 0.0
    %729 = vmatprep.subr.mxu0 0.0
    %730 = vmatpush1.xpose.msra.mxu0 0.0
    %731 = vmatprep.subr.mxu0 0.0
    %732 = vmatpush1.xpose.msra.mxu0 0.0
    %733 = vmatprep.subr.mxu0 0.0
    %734 = vmatpush1.xpose.msra.mxu0 0.0
    %735 = vmatprep.subr.mxu0 0.0
    %736 = vmatpush1.xpose.msra.mxu0 0.0
    %737 = vmatprep.subr.mxu0 0.0
    %738 = vmatpush1.xpose.msra.mxu0 0.0
    %739 = vmatprep.subr.mxu0 0.0
    %740 = vmatpush1.xpose.msra.mxu0 0.0
    %741 = vmatprep.subr.mxu0 0.0
    %742 = vmatpush1.xpose.msra.mxu0 0.0
    %743 = vmatprep.subr.mxu0 0.0
    %744 = vmatpush1.xpose.msra.mxu0 0.0
    %745 = vmatprep.subr.mxu0 0.0
    %746 = vmatpush1.xpose.msra.mxu0 0.0
    %747 = vmatprep.subr.mxu0 0.0
    %748 = vmatpush1.xpose.msra.mxu0 0.0
    %749 = vmatprep.subr.mxu0 0.0
    %750 = vmatpush1.xpose.msra.mxu0 0.0
    %751 = vmatprep.subr.mxu0 0.0
    %752 = vmatpush1.xpose.msra.mxu0 0.0
    %753 = vmatprep.subr.mxu0 0.0
    %754 = vmatpush1.xpose.msra.mxu0 0.0
    %755 = vmatprep.subr.mxu0 0.0
    %756 = vmatpush1.xpose.msra.mxu0 0.0
    %757 = vmatprep.subr.mxu0 0.0
    %758 = vmatpush1.xpose.msra.mxu0 0.0
    %759 = vmatprep.subr.mxu0 0.0
    %760 = vmatpush1.xpose.msra.mxu0 0.0
    %761 = vmatprep.subr.mxu0 0.0
    %762 = vmatpush1.xpose.msra.mxu0 0.0
    %763 = vmatprep.subr.mxu0 0.0
    %764 = vmatpush1.xpose.msra.mxu0 0.0
    %765 = vmatprep.subr.mxu0 0.0
    %766 = vmatpush1.xpose.msra.mxu0 0.0
    %767 = vmatprep.subr.mxu0 0.0
    %768 = vmatpush1.xpose.msra.mxu0 0.0
    %769 = vmatprep.subr.mxu0 0.0
    %770 = vmatpush1.xpose.msra.mxu0 0.0
    %771 = vmatprep.subr.mxu0 0.0
    %772 = vmatpush1.xpose.msra.mxu0 0.0
    %773 = vmatprep.mubr.f32.mxu0 0.0
    %774 = vmatmul.mubr.f32.gmra.mrb[0].mxu0 %v705
    %v775 = vpop.f32.mrb[0].mxu0
    %v776 = vadd.f32 0.0, %v775
    %v777 = vpop.f32.mrb[0].mxu0
    %778 = vdwg.mxu0
    %v779 = vsel %vm302, %v698, -inf
    %780 = vmax.xlane.f32.xlu0 %v779
    %v781 = vpop.xlane.xlu0 %780
    %v782 = vsel %vm302, %v776, -inf
    %783 = vmax.xlane.f32.xlu0 %v782
    %v784 = vpop.xlane.xlu0 %783
    %v785 = vsub.f32 %v698, %v781
    %v786 = vsub.f32 %v776, %v784
    %v787 = vmul.f32 %v785, 1.442695
    %v788 = vpow.pop %v787
    %v789 = vmul.f32 %v786, 1.442695
    %v790 = vpow.pop %v789
    %v791 = vsel %vm302, %v788, 0.0
    %792 = vadd.xlane.f32.xlu0 %v791
    %v793 = vpop.xlane.xlu0 %792
    %v794 = vsel %vm302, %v790, 0.0
    %795 = vadd.xlane.f32.xlu0 %v794
    %v796 = vpop.xlane.xlu0 %795
    %v797 = vrcp.pop %v793
    %v798 = vrcp.pop %v796
    %v799 = vmul.f32 %v788, %v797
    %v800 = vmul.f32 %v790, %v798
    %802 = vrot.lane.b32.xlu0 %v294, 120
    %v803 = vpop.permute.xlu0 %802
    %v806 = vsel %vm302, %v799, 0
    %808 = vmatprep.subr.mxu0 0.0
    %809 = vmatpush1.msra.mxu0 %v803
    %810 = vmatprep.subr.mxu0 0.0
    %811 = vmatpush1.msra.mxu0 0.0
    %812 = vmatprep.subr.mxu0 0.0
    %813 = vmatpush1.msra.mxu0 0.0
    %814 = vmatprep.subr.mxu0 0.0
    %815 = vmatpush1.msra.mxu0 0.0
    %816 = vmatprep.subr.mxu0 0.0
    %817 = vmatpush1.msra.mxu0 0.0
    %818 = vmatprep.subr.mxu0 0.0
    %819 = vmatpush1.msra.mxu0 0.0
    %820 = vmatprep.subr.mxu0 0.0
    %821 = vmatpush1.msra.mxu0 0.0
    %822 = vmatprep.subr.mxu0 0.0
    %823 = vmatpush1.msra.mxu0 0.0
    %824 = vmatprep.subr.mxu0 0.0
    %825 = vmatpush1.msra.mxu0 0.0
    %826 = vmatprep.subr.mxu0 0.0
    %827 = vmatpush1.msra.mxu0 0.0
    %828 = vmatprep.subr.mxu0 0.0
    %829 = vmatpush1.msra.mxu0 0.0
    %830 = vmatprep.subr.mxu0 0.0
    %831 = vmatpush1.msra.mxu0 0.0
    %832 = vmatprep.subr.mxu0 0.0
    %833 = vmatpush1.msra.mxu0 0.0
    %834 = vmatprep.subr.mxu0 0.0
    %835 = vmatpush1.msra.mxu0 0.0
    %836 = vmatprep.subr.mxu0 0.0
    %837 = vmatpush1.msra.mxu0 0.0
    %838 = vmatprep.subr.mxu0 0.0
    %839 = vmatpush1.msra.mxu0 0.0
    %840 = vmatprep.subr.mxu0 0.0
    %841 = vmatpush1.msra.mxu0 0.0
    %842 = vmatprep.subr.mxu0 0.0
    %843 = vmatpush1.msra.mxu0 0.0
    %844 = vmatprep.subr.mxu0 0.0
    %845 = vmatpush1.msra.mxu0 0.0
    %846 = vmatprep.subr.mxu0 0.0
    %847 = vmatpush1.msra.mxu0 0.0
    %848 = vmatprep.subr.mxu0 0.0
    %849 = vmatpush1.msra.mxu0 0.0
    %850 = vmatprep.subr.mxu0 0.0
    %851 = vmatpush1.msra.mxu0 0.0
    %852 = vmatprep.subr.mxu0 0.0
    %853 = vmatpush1.msra.mxu0 0.0
    %854 = vmatprep.subr.mxu0 0.0
    %855 = vmatpush1.msra.mxu0 0.0
    %856 = vmatprep.subr.mxu0 0.0
    %857 = vmatpush1.msra.mxu0 0.0
    %858 = vmatprep.subr.mxu0 0.0
    %859 = vmatpush1.msra.mxu0 0.0
    %860 = vmatprep.subr.mxu0 0.0
    %861 = vmatpush1.msra.mxu0 0.0
    %862 = vmatprep.subr.mxu0 0.0
    %863 = vmatpush1.msra.mxu0 0.0
    %864 = vmatprep.subr.mxu0 0.0
    %865 = vmatpush1.msra.mxu0 0.0
    %866 = vmatprep.subr.mxu0 0.0
    %867 = vmatpush1.msra.mxu0 0.0
    %868 = vmatprep.subr.mxu0 0.0
    %869 = vmatpush1.msra.mxu0 0.0
    %870 = vmatprep.subr.mxu0 0.0
    %871 = vmatpush1.msra.mxu0 0.0
    %872 = vmatprep.mubr.f32.mxu0 0.0
    %873 = vmatmul.mubr.f32.gmra.mrb[0].mxu0 %v806
    %v874 = vpop.f32.mrb[0].mxu0
    %v875 = vadd.f32 0.0, %v874
    %v876 = vpop.f32.mrb[0].mxu0
    %877 = vdwg.mxu0
    %879 = vrot.lane.b32.xlu0 %v299, 120
    %v880 = vpop.permute.xlu0 %879
    %v883 = vsel %vm302, %v800, 0
    %885 = vmatprep.subr.mxu0 0.0
    %886 = vmatpush1.msra.mxu0 %v880
    %887 = vmatprep.subr.mxu0 0.0
    %888 = vmatpush1.msra.mxu0 0.0
    %889 = vmatprep.subr.mxu0 0.0
    %890 = vmatpush1.msra.mxu0 0.0
    %891 = vmatprep.subr.mxu0 0.0
    %892 = vmatpush1.msra.mxu0 0.0
    %893 = vmatprep.subr.mxu0 0.0
    %894 = vmatpush1.msra.mxu0 0.0
    %895 = vmatprep.subr.mxu0 0.0
    %896 = vmatpush1.msra.mxu0 0.0
    %897 = vmatprep.subr.mxu0 0.0
    %898 = vmatpush1.msra.mxu0 0.0
    %899 = vmatprep.subr.mxu0 0.0
    %900 = vmatpush1.msra.mxu0 0.0
    %901 = vmatprep.subr.mxu0 0.0
    %902 = vmatpush1.msra.mxu0 0.0
    %903 = vmatprep.subr.mxu0 0.0
    %904 = vmatpush1.msra.mxu0 0.0
    %905 = vmatprep.subr.mxu0 0.0
    %906 = vmatpush1.msra.mxu0 0.0
    %907 = vmatprep.subr.mxu0 0.0
    %908 = vmatpush1.msra.mxu0 0.0
    %909 = vmatprep.subr.mxu0 0.0
    %910 = vmatpush1.msra.mxu0 0.0
    %911 = vmatprep.subr.mxu0 0.0
    %912 = vmatpush1.msra.mxu0 0.0
    %913 = vmatprep.subr.mxu0 0.0
    %914 = vmatpush1.msra.mxu0 0.0
    %915 = vmatprep.subr.mxu0 0.0
    %916 = vmatpush1.msra.mxu0 0.0
    %917 = vmatprep.subr.mxu0 0.0
    %918 = vmatpush1.msra.mxu0 0.0
    %919 = vmatprep.subr.mxu0 0.0
    %920 = vmatpush1.msra.mxu0 0.0
    %921 = vmatprep.subr.mxu0 0.0
    %922 = vmatpush1.msra.mxu0 0.0
    %923 = vmatprep.subr.mxu0 0.0
    %924 = vmatpush1.msra.mxu0 0.0
    %925 = vmatprep.subr.mxu0 0.0
    %926 = vmatpush1.msra.mxu0 0.0
    %927 = vmatprep.subr.mxu0 0.0
    %928 = vmatpush1.msra.mxu0 0.0
    %929 = vmatprep.subr.mxu0 0.0
    %930 = vmatpush1.msra.mxu0 0.0
    %931 = vmatprep.subr.mxu0 0.0
    %932 = vmatpush1.msra.mxu0 0.0
    %933 = vmatprep.subr.mxu0 0.0
    %934 = vmatpush1.msra.mxu0 0.0
    %935 = vmatprep.subr.mxu0 0.0
    %936 = vmatpush1.msra.mxu0 0.0
    %937 = vmatprep.subr.mxu0 0.0
    %938 = vmatpush1.msra.mxu0 0.0
    %939 = vmatprep.subr.mxu0 0.0
    %940 = vmatpush1.msra.mxu0 0.0
    %941 = vmatprep.subr.mxu0 0.0
    %942 = vmatpush1.msra.mxu0 0.0
    %943 = vmatprep.subr.mxu0 0.0
    %944 = vmatpush1.msra.mxu0 0.0
    %945 = vmatprep.subr.mxu0 0.0
    %946 = vmatpush1.msra.mxu0 0.0
    %947 = vmatprep.subr.mxu0 0.0
    %948 = vmatpush1.msra.mxu0 0.0
    %949 = vmatprep.mubr.f32.mxu0 0.0
    %950 = vmatmul.mubr.f32.gmra.mrb[0].mxu0 %v883
    %v951 = vpop.f32.mrb[0].mxu0
    %v952 = vadd.f32 0.0, %v951
    %v953 = vpop.f32.mrb[0].mxu0
    %954 = vdwg.mxu0
    %v956 = vsel %vm302, %v875, 0
    %v959 = vsel %vm302, %v952, 0
    %961 = vmatprep.subr.mxu0 0.0
    %962 = vmatpush1.msra.mxu0 %v49
    %963 = vmatprep.subr.mxu0 0.0
    %964 = vmatpush1.msra.mxu0 0.0
    %965 = vmatprep.subr.mxu0 0.0
    %966 = vmatpush1.msra.mxu0 0.0
    %967 = vmatprep.subr.mxu0 0.0
    %968 = vmatpush1.msra.mxu0 0.0
    %969 = vmatprep.subr.mxu0 0.0
    %970 = vmatpush1.msra.mxu0 0.0
    %971 = vmatprep.subr.mxu0 0.0
    %972 = vmatpush1.msra.mxu0 0.0
    %973 = vmatprep.subr.mxu0 0.0
    %974 = vmatpush1.msra.mxu0 0.0
    %975 = vmatprep.subr.mxu0 0.0
    %976 = vmatpush1.msra.mxu0 0.0
    %977 = vmatprep.subr.mxu0 0.0
    %978 = vmatpush1.msra.mxu0 0.0
    %979 = vmatprep.subr.mxu0 0.0
    %980 = vmatpush1.msra.mxu0 0.0
    %981 = vmatprep.subr.mxu0 0.0
    %982 = vmatpush1.msra.mxu0 0.0
    %983 = vmatprep.subr.mxu0 0.0
    %984 = vmatpush1.msra.mxu0 0.0
    %985 = vmatprep.subr.mxu0 0.0
    %986 = vmatpush1.msra.mxu0 0.0
    %987 = vmatprep.subr.mxu0 0.0
    %988 = vmatpush1.msra.mxu0 0.0
    %989 = vmatprep.subr.mxu0 0.0
    %990 = vmatpush1.msra.mxu0 0.0
    %991 = vmatprep.subr.mxu0 0.0
    %992 = vmatpush1.msra.mxu0 0.0
    %993 = vmatprep.subr.mxu0 0.0
    %994 = vmatpush1.msra.mxu0 0.0
    %995 = vmatprep.subr.mxu0 0.0
    %996 = vmatpush1.msra.mxu0 0.0
    %997 = vmatprep.subr.mxu0 0.0
    %998 = vmatpush1.msra.mxu0 0.0
    %999 = vmatprep.subr.mxu0 0.0
    %1000 = vmatpush1.msra.mxu0 0.0
    %1001 = vmatprep.subr.mxu0 0.0
    %1002 = vmatpush1.msra.mxu0 0.0
    %1003 = vmatprep.subr.mxu0 0.0
    %1004 = vmatpush1.msra.mxu0 0.0
    %1005 = vmatprep.subr.mxu0 0.0
    %1006 = vmatpush1.msra.mxu0 0.0
    %1007 = vmatprep.subr.mxu0 0.0
    %1008 = vmatpush1.msra.mxu0 0.0
    %1009 = vmatprep.subr.mxu0 0.0
    %1010 = vmatpush1.msra.mxu0 0.0
    %1011 = vmatprep.subr.mxu0 0.0
    %1012 = vmatpush1.msra.mxu0 0.0
    %1013 = vmatprep.subr.mxu0 0.0
    %1014 = vmatpush1.msra.mxu0 0.0
    %1015 = vmatprep.subr.mxu0 0.0
    %1016 = vmatpush1.msra.mxu0 0.0
    %1017 = vmatprep.subr.mxu0 0.0
    %1018 = vmatpush1.msra.mxu0 0.0
    %1019 = vmatprep.subr.mxu0 0.0
    %1020 = vmatpush1.msra.mxu0 0.0
    %1021 = vmatprep.subr.mxu0 0.0
    %1022 = vmatpush1.msra.mxu0 0.0
    %1023 = vmatprep.subr.mxu0 0.0
    %1024 = vmatpush1.msra.mxu0 0.0
    %1025 = vmatprep.mubr.f32.mxu0 0.0
    %1026 = vmatmul.mubr.f32.gmra.mrb[0].mxu0 %v956
    %v1027 = vpop.f32.mrb[0].mxu0
    %v1028 = vadd.f32 0.0, %v1027
    %v1029 = vpop.f32.mrb[0].mxu0
    %1030 = vmatprep.mubr.f32.mxu0 0.0
    %1031 = vmatmul.mubr.f32.gmra.mrb[0].mxu0 %v959
    %v1032 = vpop.f32.mrb[0].mxu0
    %v1033 = vadd.f32 0.0, %v1032
    %v1034 = vpop.f32.mrb[0].mxu0
    %1035 = vdwg.mxu0
    %v1037 = vsel %vm302, %v547, 0
    %v1040 = vsel %vm302, %v620, 0
    %1042 = vmatprep.subr.mxu0 0.0
    %1043 = vmatpush1.msra.mxu0 %v48
    %1044 = vmatprep.subr.mxu0 0.0
    %1045 = vmatpush1.msra.mxu0 0.0
    %1046 = vmatprep.subr.mxu0 0.0
    %1047 = vmatpush1.msra.mxu0 0.0
    %1048 = vmatprep.subr.mxu0 0.0
    %1049 = vmatpush1.msra.mxu0 0.0
    %1050 = vmatprep.subr.mxu0 0.0
    %1051 = vmatpush1.msra.mxu0 0.0
    %1052 = vmatprep.subr.mxu0 0.0
    %1053 = vmatpush1.msra.mxu0 0.0
    %1054 = vmatprep.subr.mxu0 0.0
    %1055 = vmatpush1.msra.mxu0 0.0
    %1056 = vmatprep.subr.mxu0 0.0
    %1057 = vmatpush1.msra.mxu0 0.0
    %1058 = vmatprep.subr.mxu0 0.0
    %1059 = vmatpush1.msra.mxu0 0.0
    %1060 = vmatprep.subr.mxu0 0.0
    %1061 = vmatpush1.msra.mxu0 0.0
    %1062 = vmatprep.subr.mxu0 0.0
    %1063 = vmatpush1.msra.mxu0 0.0
    %1064 = vmatprep.subr.mxu0 0.0
    %1065 = vmatpush1.msra.mxu0 0.0
    %1066 = vmatprep.subr.mxu0 0.0
    %1067 = vmatpush1.msra.mxu0 0.0
    %1068 = vmatprep.subr.mxu0 0.0
    %1069 = vmatpush1.msra.mxu0 0.0
    %1070 = vmatprep.subr.mxu0 0.0
    %1071 = vmatpush1.msra.mxu0 0.0
    %1072 = vmatprep.subr.mxu0 0.0
    %1073 = vmatpush1.msra.mxu0 0.0
    %1074 = vmatprep.subr.mxu0 0.0
    %1075 = vmatpush1.msra.mxu0 0.0
    %1076 = vmatprep.subr.mxu0 0.0
    %1077 = vmatpush1.msra.mxu0 0.0
    %1078 = vmatprep.subr.mxu0 0.0
    %1079 = vmatpush1.msra.mxu0 0.0
    %1080 = vmatprep.subr.mxu0 0.0
    %1081 = vmatpush1.msra.mxu0 0.0
    %1082 = vmatprep.subr.mxu0 0.0
    %1083 = vmatpush1.msra.mxu0 0.0
    %1084 = vmatprep.subr.mxu0 0.0
    %1085 = vmatpush1.msra.mxu0 0.0
    %1086 = vmatprep.subr.mxu0 0.0
    %1087 = vmatpush1.msra.mxu0 0.0
    %1088 = vmatprep.subr.mxu0 0.0
    %1089 = vmatpush1.msra.mxu0 0.0
    %1090 = vmatprep.subr.mxu0 0.0
    %1091 = vmatpush1.msra.mxu0 0.0
    %1092 = vmatprep.subr.mxu0 0.0
    %1093 = vmatpush1.msra.mxu0 0.0
    %1094 = vmatprep.subr.mxu0 0.0
    %1095 = vmatpush1.msra.mxu0 0.0
    %1096 = vmatprep.subr.mxu0 0.0
    %1097 = vmatpush1.msra.mxu0 0.0
    %1098 = vmatprep.subr.mxu0 0.0
    %1099 = vmatpush1.msra.mxu0 0.0
    %1100 = vmatprep.subr.mxu0 0.0
    %1101 = vmatpush1.msra.mxu0 0.0
    %1102 = vmatprep.subr.mxu0 0.0
    %1103 = vmatpush1.msra.mxu0 0.0
    %1104 = vmatprep.subr.mxu0 0.0
    %1105 = vmatpush1.msra.mxu0 0.0
    %1106 = vmatprep.mubr.f32.mxu0 0.0
    %1107 = vmatmul.mubr.f32.gmra.mrb[0].mxu0 %v1037
    %v1108 = vpop.f32.mrb[0].mxu0
    %v1109 = vadd.f32 %v1028, %v1108
    %v1110 = vpop.f32.mrb[0].mxu0
    %1111 = vmatprep.mubr.f32.mxu0 0.0
    %1112 = vmatmul.mubr.f32.gmra.mrb[0].mxu0 %v1040
    %v1113 = vpop.f32.mrb[0].mxu0
    %v1114 = vadd.f32 %v1033, %v1113
    %v1115 = vpop.f32.mrb[0].mxu0
    %1116 = vdwg.mxu0
    %1117 = vrot.lane.b32.xlu0 %v142, 112
    %v1118 = vpop.permute.xlu0 %1117
    %1119 = vrot.lane.b32.xlu0 %v215, 112
    %v1120 = vpop.permute.xlu0 %1119
    %v1121 = vsel %vm302, %v1118, 0
    %v1123 = vsel %vm302, %v1120, 0
    %1125 = vmatprep.subr.mxu0 0.0
    %1126 = vmatpush1.xpose.msra.mxu0 %v1123
    %1127 = vmatprep.subr.mxu0 0.0
    %1128 = vmatpush1.xpose.msra.mxu0 0.0
    %1129 = vmatprep.subr.mxu0 0.0
    %1130 = vmatpush1.xpose.msra.mxu0 0.0
    %1131 = vmatprep.subr.mxu0 0.0
    %1132 = vmatpush1.xpose.msra.mxu0 0.0
    %1133 = vmatprep.subr.mxu0 0.0
    %1134 = vmatpush1.xpose.msra.mxu0 0.0
    %1135 = vmatprep.subr.mxu0 0.0
    %1136 = vmatpush1.xpose.msra.mxu0 0.0
    %1137 = vmatprep.subr.mxu0 0.0
    %1138 = vmatpush1.xpose.msra.mxu0 0.0
    %1139 = vmatprep.subr.mxu0 0.0
    %1140 = vmatpush1.xpose.msra.mxu0 0.0
    %1141 = vmatprep.subr.mxu0 0.0
    %1142 = vmatpush1.xpose.msra.mxu0 0.0
    %1143 = vmatprep.subr.mxu0 0.0
    %1144 = vmatpush1.xpose.msra.mxu0 0.0
    %1145 = vmatprep.subr.mxu0 0.0
    %1146 = vmatpush1.xpose.msra.mxu0 0.0
    %1147 = vmatprep.subr.mxu0 0.0
    %1148 = vmatpush1.xpose.msra.mxu0 0.0
    %1149 = vmatprep.subr.mxu0 0.0
    %1150 = vmatpush1.xpose.msra.mxu0 0.0
    %1151 = vmatprep.subr.mxu0 0.0
    %1152 = vmatpush1.xpose.msra.mxu0 0.0
    %1153 = vmatprep.subr.mxu0 0.0
    %1154 = vmatpush1.xpose.msra.mxu0 0.0
    %1155 = vmatprep.subr.mxu0 0.0
    %1156 = vmatpush1.xpose.msra.mxu0 0.0
    %1157 = vmatprep.subr.mxu0 0.0
    %1158 = vmatpush1.xpose.msra.mxu0 0.0
    %1159 = vmatprep.subr.mxu0 0.0
    %1160 = vmatpush1.xpose.msra.mxu0 0.0
    %1161 = vmatprep.subr.mxu0 0.0
    %1162 = vmatpush1.xpose.msra.mxu0 0.0
    %1163 = vmatprep.subr.mxu0 0.0
    %1164 = vmatpush1.xpose.msra.mxu0 0.0
    %1165 = vmatprep.subr.mxu0 0.0
    %1166 = vmatpush1.xpose.msra.mxu0 0.0
    %1167 = vmatprep.subr.mxu0 0.0
    %1168 = vmatpush1.xpose.msra.mxu0 0.0
    %1169 = vmatprep.subr.mxu0 0.0
    %1170 = vmatpush1.xpose.msra.mxu0 0.0
    %1171 = vmatprep.subr.mxu0 0.0
    %1172 = vmatpush1.xpose.msra.mxu0 0.0
    %1173 = vmatprep.subr.mxu0 0.0
    %1174 = vmatpush1.xpose.msra.mxu0 0.0
    %1175 = vmatprep.subr.mxu0 0.0
    %1176 = vmatpush1.xpose.msra.mxu0 0.0
    %1177 = vmatprep.subr.mxu0 0.0
    %1178 = vmatpush1.xpose.msra.mxu0 0.0
    %1179 = vmatprep.subr.mxu0 0.0
    %1180 = vmatpush1.xpose.msra.mxu0 0.0
    %1181 = vmatprep.subr.mxu0 0.0
    %1182 = vmatpush1.xpose.msra.mxu0 0.0
    %1183 = vmatprep.subr.mxu0 0.0
    %1184 = vmatpush1.xpose.msra.mxu0 0.0
    %1185 = vmatprep.subr.mxu0 0.0
    %1186 = vmatpush1.xpose.msra.mxu0 0.0
    %1187 = vmatprep.subr.mxu0 0.0
    %1188 = vmatpush1.xpose.msra.mxu0 0.0
    %1189 = vmatprep.mubr.f32.mxu0 0.0
    %1190 = vmatmul.mubr.f32.gmra.mrb[0].mxu0 %v1121
    %v1191 = vpop.f32.mrb[0].mxu0
    %v1192 = vadd.f32 0.0, %v1191
    %v1193 = vpop.f32.mrb[0].mxu0
    %1194 = vdwg.mxu0
    %1195 = vrot.lane.b32.xlu0 %v143, 112
    %v1196 = vpop.permute.xlu0 %1195
    %1197 = vrot.lane.b32.xlu0 %v220, 112
    %v1198 = vpop.permute.xlu0 %1197
    %v1199 = vsel %vm302, %v1196, 0
    %v1201 = vsel %vm302, %v1198, 0
    %1203 = vmatprep.subr.mxu0 0.0
    %1204 = vmatpush1.xpose.msra.mxu0 %v1201
    %1205 = vmatprep.subr.mxu0 0.0
    %1206 = vmatpush1.xpose.msra.mxu0 0.0
    %1207 = vmatprep.subr.mxu0 0.0
    %1208 = vmatpush1.xpose.msra.mxu0 0.0
    %1209 = vmatprep.subr.mxu0 0.0
    %1210 = vmatpush1.xpose.msra.mxu0 0.0
    %1211 = vmatprep.subr.mxu0 0.0
    %1212 = vmatpush1.xpose.msra.mxu0 0.0
    %1213 = vmatprep.subr.mxu0 0.0
    %1214 = vmatpush1.xpose.msra.mxu0 0.0
    %1215 = vmatprep.subr.mxu0 0.0
    %1216 = vmatpush1.xpose.msra.mxu0 0.0
    %1217 = vmatprep.subr.mxu0 0.0
    %1218 = vmatpush1.xpose.msra.mxu0 0.0
    %1219 = vmatprep.subr.mxu0 0.0
    %1220 = vmatpush1.xpose.msra.mxu0 0.0
    %1221 = vmatprep.subr.mxu0 0.0
    %1222 = vmatpush1.xpose.msra.mxu0 0.0
    %1223 = vmatprep.subr.mxu0 0.0
    %1224 = vmatpush1.xpose.msra.mxu0 0.0
    %1225 = vmatprep.subr.mxu0 0.0
    %1226 = vmatpush1.xpose.msra.mxu0 0.0
    %1227 = vmatprep.subr.mxu0 0.0
    %1228 = vmatpush1.xpose.msra.mxu0 0.0
    %1229 = vmatprep.subr.mxu0 0.0
    %1230 = vmatpush1.xpose.msra.mxu0 0.0
    %1231 = vmatprep.subr.mxu0 0.0
    %1232 = vmatpush1.xpose.msra.mxu0 0.0
    %1233 = vmatprep.subr.mxu0 0.0
    %1234 = vmatpush1.xpose.msra.mxu0 0.0
    %1235 = vmatprep.subr.mxu0 0.0
    %1236 = vmatpush1.xpose.msra.mxu0 0.0
    %1237 = vmatprep.subr.mxu0 0.0
    %1238 = vmatpush1.xpose.msra.mxu0 0.0
    %1239 = vmatprep.subr.mxu0 0.0
    %1240 = vmatpush1.xpose.msra.mxu0 0.0
    %1241 = vmatprep.subr.mxu0 0.0
    %1242 = vmatpush1.xpose.msra.mxu0 0.0
    %1243 = vmatprep.subr.mxu0 0.0
    %1244 = vmatpush1.xpose.msra.mxu0 0.0
    %1245 = vmatprep.subr.mxu0 0.0
    %1246 = vmatpush1.xpose.msra.mxu0 0.0
    %1247 = vmatprep.subr.mxu0 0.0
    %1248 = vmatpush1.xpose.msra.mxu0 0.0
    %1249 = vmatprep.subr.mxu0 0.0
    %1250 = vmatpush1.xpose.msra.mxu0 0.0
    %1251 = vmatprep.subr.mxu0 0.0
    %1252 = vmatpush1.xpose.msra.mxu0 0.0
    %1253 = vmatprep.subr.mxu0 0.0
    %1254 = vmatpush1.xpose.msra.mxu0 0.0
    %1255 = vmatprep.subr.mxu0 0.0
    %1256 = vmatpush1.xpose.msra.mxu0 0.0
    %1257 = vmatprep.subr.mxu0 0.0
    %1258 = vmatpush1.xpose.msra.mxu0 0.0
    %1259 = vmatprep.subr.mxu0 0.0
    %1260 = vmatpush1.xpose.msra.mxu0 0.0
    %1261 = vmatprep.subr.mxu0 0.0
    %1262 = vmatpush1.xpose.msra.mxu0 0.0
    %1263 = vmatprep.subr.mxu0 0.0
    %1264 = vmatpush1.xpose.msra.mxu0 0.0
    %1265 = vmatprep.subr.mxu0 0.0
    %1266 = vmatpush1.xpose.msra.mxu0 0.0
    %1267 = vmatprep.mubr.f32.mxu0 0.0
    %1268 = vmatmul.mubr.f32.gmra.mrb[0].mxu0 %v1199
    %v1269 = vpop.f32.mrb[0].mxu0
    %v1270 = vadd.f32 0.0, %v1269
    %v1271 = vpop.f32.mrb[0].mxu0
    %1272 = vdwg.mxu0
    %v1273 = vsel %vm302, %v1192, -inf
    %1274 = vmax.xlane.f32.xlu0 %v1273
    %v1275 = vpop.xlane.xlu0 %1274
    %v1276 = vsel %vm302, %v1270, -inf
    %1277 = vmax.xlane.f32.xlu0 %v1276
    %v1278 = vpop.xlane.xlu0 %1277
    %v1279 = vsub.f32 %v1192, %v1275
    %v1280 = vsub.f32 %v1270, %v1278
    %v1281 = vmul.f32 %v1279, 1.442695
    %v1282 = vpow.pop %v1281
    %v1283 = vmul.f32 %v1280, 1.442695
    %v1284 = vpow.pop %v1283
    %v1285 = vsel %vm302, %v1282, 0.0
    %1286 = vadd.xlane.f32.xlu0 %v1285
    %v1287 = vpop.xlane.xlu0 %1286
    %v1288 = vsel %vm302, %v1284, 0.0
    %1289 = vadd.xlane.f32.xlu0 %v1288
    %v1290 = vpop.xlane.xlu0 %1289
    %v1291 = vrcp.pop %v1287
    %v1292 = vrcp.pop %v1290
    %v1293 = vmul.f32 %v1282, %v1291
    %v1294 = vmul.f32 %v1284, %v1292
    %1295 = vrot.lane.b32.xlu0 %v294, 112
    %v1296 = vpop.permute.xlu0 %1295
    %v1299 = vsel %vm302, %v1293, 0
    %1301 = vmatprep.subr.mxu0 0.0
    %1302 = vmatpush1.msra.mxu0 %v1296
    %1303 = vmatprep.subr.mxu0 0.0
    %1304 = vmatpush1.msra.mxu0 0.0
    %1305 = vmatprep.subr.mxu0 0.0
    %1306 = vmatpush1.msra.mxu0 0.0
    %1307 = vmatprep.subr.mxu0 0.0
    %1308 = vmatpush1.msra.mxu0 0.0
    %1309 = vmatprep.subr.mxu0 0.0
    %1310 = vmatpush1.msra.mxu0 0.0
    %1311 = vmatprep.subr.mxu0 0.0
    %1312 = vmatpush1.msra.mxu0 0.0
    %1313 = vmatprep.subr.mxu0 0.0
    %1314 = vmatpush1.msra.mxu0 0.0
    %1315 = vmatprep.subr.mxu0 0.0
    %1316 = vmatpush1.msra.mxu0 0.0
    %1317 = vmatprep.subr.mxu0 0.0
    %1318 = vmatpush1.msra.mxu0 0.0
    %1319 = vmatprep.subr.mxu0 0.0
    %1320 = vmatpush1.msra.mxu0 0.0
    %1321 = vmatprep.subr.mxu0 0.0
    %1322 = vmatpush1.msra.mxu0 0.0
    %1323 = vmatprep.subr.mxu0 0.0
    %1324 = vmatpush1.msra.mxu0 0.0
    %1325 = vmatprep.subr.mxu0 0.0
    %1326 = vmatpush1.msra.mxu0 0.0
    %1327 = vmatprep.subr.mxu0 0.0
    %1328 = vmatpush1.msra.mxu0 0.0
    %1329 = vmatprep.subr.mxu0 0.0
    %1330 = vmatpush1.msra.mxu0 0.0
    %1331 = vmatprep.subr.mxu0 0.0
    %1332 = vmatpush1.msra.mxu0 0.0
    %1333 = vmatprep.subr.mxu0 0.0
    %1334 = vmatpush1.msra.mxu0 0.0
    %1335 = vmatprep.subr.mxu0 0.0
    %1336 = vmatpush1.msra.mxu0 0.0
    %1337 = vmatprep.subr.mxu0 0.0
    %1338 = vmatpush1.msra.mxu0 0.0
    %1339 = vmatprep.subr.mxu0 0.0
    %1340 = vmatpush1.msra.mxu0 0.0
    %1341 = vmatprep.subr.mxu0 0.0
    %1342 = vmatpush1.msra.mxu0 0.0
    %1343 = vmatprep.subr.mxu0 0.0
    %1344 = vmatpush1.msra.mxu0 0.0
    %1345 = vmatprep.subr.mxu0 0.0
    %1346 = vmatpush1.msra.mxu0 0.0
    %1347 = vmatprep.subr.mxu0 0.0
    %1348 = vmatpush1.msra.mxu0 0.0
    %1349 = vmatprep.subr.mxu0 0.0
    %1350 = vmatpush1.msra.mxu0 0.0
    %1351 = vmatprep.subr.mxu0 0.0
    %1352 = vmatpush1.msra.mxu0 0.0
    %1353 = vmatprep.subr.mxu0 0.0
    %1354 = vmatpush1.msra.mxu0 0.0
    %1355 = vmatprep.subr.mxu0 0.0
    %1356 = vmatpush1.msra.mxu0 0.0
    %1357 = vmatprep.subr.mxu0 0.0
    %1358 = vmatpush1.msra.mxu0 0.0
    %1359 = vmatprep.subr.mxu0 0.0
    %1360 = vmatpush1.msra.mxu0 0.0
    %1361 = vmatprep.subr.mxu0 0.0
    %1362 = vmatpush1.msra.mxu0 0.0
    %1363 = vmatprep.subr.mxu0 0.0
    %1364 = vmatpush1.msra.mxu0 0.0
    %1365 = vmatprep.mubr.f32.mxu0 0.0
    %1366 = vmatmul.mubr.f32.gmra.mrb[0].mxu0 %v1299
    %v1367 = vpop.f32.mrb[0].mxu0
    %v1368 = vadd.f32 0.0, %v1367
    %v1369 = vpop.f32.mrb[0].mxu0
    %1370 = vdwg.mxu0
    %1371 = vrot.lane.b32.xlu0 %v299, 112
    %v1372 = vpop.permute.xlu0 %1371
    %v1375 = vsel %vm302, %v1294, 0
    %1377 = vmatprep.subr.mxu0 0.0
    %1378 = vmatpush1.msra.mxu0 %v1372
    %1379 = vmatprep.subr.mxu0 0.0
    %1380 = vmatpush1.msra.mxu0 0.0
    %1381 = vmatprep.subr.mxu0 0.0
    %1382 = vmatpush1.msra.mxu0 0.0
    %1383 = vmatprep.subr.mxu0 0.0
    %1384 = vmatpush1.msra.mxu0 0.0
    %1385 = vmatprep.subr.mxu0 0.0
    %1386 = vmatpush1.msra.mxu0 0.0
    %1387 = vmatprep.subr.mxu0 0.0
    %1388 = vmatpush1.msra.mxu0 0.0
    %1389 = vmatprep.subr.mxu0 0.0
    %1390 = vmatpush1.msra.mxu0 0.0
    %1391 = vmatprep.subr.mxu0 0.0
    %1392 = vmatpush1.msra.mxu0 0.0
    %1393 = vmatprep.subr.mxu0 0.0
    %1394 = vmatpush1.msra.mxu0 0.0
    %1395 = vmatprep.subr.mxu0 0.0
    %1396 = vmatpush1.msra.mxu0 0.0
    %1397 = vmatprep.subr.mxu0 0.0
    %1398 = vmatpush1.msra.mxu0 0.0
    %1399 = vmatprep.subr.mxu0 0.0
    %1400 = vmatpush1.msra.mxu0 0.0
    %1401 = vmatprep.subr.mxu0 0.0
    %1402 = vmatpush1.msra.mxu0 0.0
    %1403 = vmatprep.subr.mxu0 0.0
    %1404 = vmatpush1.msra.mxu0 0.0
    %1405 = vmatprep.subr.mxu0 0.0
    %1406 = vmatpush1.msra.mxu0 0.0
    %1407 = vmatprep.subr.mxu0 0.0
    %1408 = vmatpush1.msra.mxu0 0.0
    %1409 = vmatprep.subr.mxu0 0.0
    %1410 = vmatpush1.msra.mxu0 0.0
    %1411 = vmatprep.subr.mxu0 0.0
    %1412 = vmatpush1.msra.mxu0 0.0
    %1413 = vmatprep.subr.mxu0 0.0
    %1414 = vmatpush1.msra.mxu0 0.0
    %1415 = vmatprep.subr.mxu0 0.0
    %1416 = vmatpush1.msra.mxu0 0.0
    %1417 = vmatprep.subr.mxu0 0.0
    %1418 = vmatpush1.msra.mxu0 0.0
    %1419 = vmatprep.subr.mxu0 0.0
    %1420 = vmatpush1.msra.mxu0 0.0
    %1421 = vmatprep.subr.mxu0 0.0
    %1422 = vmatpush1.msra.mxu0 0.0
    %1423 = vmatprep.subr.mxu0 0.0
    %1424 = vmatpush1.msra.mxu0 0.0
    %1425 = vmatprep.subr.mxu0 0.0
    %1426 = vmatpush1.msra.mxu0 0.0
    %1427 = vmatprep.subr.mxu0 0.0
    %1428 = vmatpush1.msra.mxu0 0.0
    %1429 = vmatprep.subr.mxu0 0.0
    %1430 = vmatpush1.msra.mxu0 0.0
    %1431 = vmatprep.subr.mxu0 0.0
    %1432 = vmatpush1.msra.mxu0 0.0
    %1433 = vmatprep.subr.mxu0 0.0
    %1434 = vmatpush1.msra.mxu0 0.0
    %1435 = vmatprep.subr.mxu0 0.0
    %1436 = vmatpush1.msra.mxu0 0.0
    %1437 = vmatprep.subr.mxu0 0.0
    %1438 = vmatpush1.msra.mxu0 0.0
    %1439 = vmatprep.subr.mxu0 0.0
    %1440 = vmatpush1.msra.mxu0 0.0
    %1441 = vmatprep.mubr.f32.mxu0 0.0
    %1442 = vmatmul.mubr.f32.gmra.mrb[0].mxu0 %v1375
    %v1443 = vpop.f32.mrb[0].mxu0
    %v1444 = vadd.f32 0.0, %v1443
    %v1445 = vpop.f32.mrb[0].mxu0
    %1446 = vdwg.mxu0
    %v1448 = vsel %vm302, %v1368, 0
    %v1451 = vsel %vm302, %v1444, 0
    %1453 = vmatprep.subr.mxu0 0.0
    %1454 = vmatpush1.msra.mxu0 %v50
    %1455 = vmatprep.subr.mxu0 0.0
    %1456 = vmatpush1.msra.mxu0 0.0
    %1457 = vmatprep.subr.mxu0 0.0
    %1458 = vmatpush1.msra.mxu0 0.0
    %1459 = vmatprep.subr.mxu0 0.0
    %1460 = vmatpush1.msra.mxu0 0.0
    %1461 = vmatprep.subr.mxu0 0.0
    %1462 = vmatpush1.msra.mxu0 0.0
    %1463 = vmatprep.subr.mxu0 0.0
    %1464 = vmatpush1.msra.mxu0 0.0
    %1465 = vmatprep.subr.mxu0 0.0
    %1466 = vmatpush1.msra.mxu0 0.0
    %1467 = vmatprep.subr.mxu0 0.0
    %1468 = vmatpush1.msra.mxu0 0.0
    %1469 = vmatprep.subr.mxu0 0.0
    %1470 = vmatpush1.msra.mxu0 0.0
    %1471 = vmatprep.subr.mxu0 0.0
    %1472 = vmatpush1.msra.mxu0 0.0
    %1473 = vmatprep.subr.mxu0 0.0
    %1474 = vmatpush1.msra.mxu0 0.0
    %1475 = vmatprep.subr.mxu0 0.0
    %1476 = vmatpush1.msra.mxu0 0.0
    %1477 = vmatprep.subr.mxu0 0.0
    %1478 = vmatpush1.msra.mxu0 0.0
    %1479 = vmatprep.subr.mxu0 0.0
    %1480 = vmatpush1.msra.mxu0 0.0
    %1481 = vmatprep.subr.mxu0 0.0
    %1482 = vmatpush1.msra.mxu0 0.0
    %1483 = vmatprep.subr.mxu0 0.0
    %1484 = vmatpush1.msra.mxu0 0.0
    %1485 = vmatprep.subr.mxu0 0.0
    %1486 = vmatpush1.msra.mxu0 0.0
    %1487 = vmatprep.subr.mxu0 0.0
    %1488 = vmatpush1.msra.mxu0 0.0
    %1489 = vmatprep.subr.mxu0 0.0
    %1490 = vmatpush1.msra.mxu0 0.0
    %1491 = vmatprep.subr.mxu0 0.0
    %1492 = vmatpush1.msra.mxu0 0.0
    %1493 = vmatprep.subr.mxu0 0.0
    %1494 = vmatpush1.msra.mxu0 0.0
    %1495 = vmatprep.subr.mxu0 0.0
    %1496 = vmatpush1.msra.mxu0 0.0
    %1497 = vmatprep.subr.mxu0 0.0
    %1498 = vmatpush1.msra.mxu0 0.0
    %1499 = vmatprep.subr.mxu0 0.0
    %1500 = vmatpush1.msra.mxu0 0.0
    %1501 = vmatprep.subr.mxu0 0.0
    %1502 = vmatpush1.msra.mxu0 0.0
    %1503 = vmatprep.subr.mxu0 0.0
    %1504 = vmatpush1.msra.mxu0 0.0
    %1505 = vmatprep.subr.mxu0 0.0
    %1506 = vmatpush1.msra.mxu0 0.0
    %1507 = vmatprep.subr.mxu0 0.0
    %1508 = vmatpush1.msra.mxu0 0.0
    %1509 = vmatprep.subr.mxu0 0.0
    %1510 = vmatpush1.msra.mxu0 0.0
    %1511 = vmatprep.subr.mxu0 0.0
    %1512 = vmatpush1.msra.mxu0 0.0
    %1513 = vmatprep.subr.mxu0 0.0
    %1514 = vmatpush1.msra.mxu0 0.0
    %1515 = vmatprep.subr.mxu0 0.0
    %1516 = vmatpush1.msra.mxu0 0.0
    %1517 = vmatprep.mubr.f32.mxu0 0.0
    %1518 = vmatmul.mubr.f32.gmra.mrb[0].mxu0 %v1448
    %v1519 = vpop.f32.mrb[0].mxu0
    %v1520 = vadd.f32 0.0, %v1519
    %v1521 = vpop.f32.mrb[0].mxu0
    %1522 = vmatprep.mubr.f32.mxu0 0.0
    %1523 = vmatmul.mubr.f32.gmra.mrb[0].mxu0 %v1451
    %v1524 = vpop.f32.mrb[0].mxu0
    %v1525 = vadd.f32 0.0, %v1524
    %v1526 = vpop.f32.mrb[0].mxu0
    %1527 = vdwg.mxu0
    %v1528 = vadd.f32 %v1109, %v1520
    %v1529 = vadd.f32 %v1114, %v1525
    %1530 = vrot.lane.b32.xlu0 %v142, 104
    %v1531 = vpop.permute.xlu0 %1530
    %1532 = vrot.lane.b32.xlu0 %v215, 104
    %v1533 = vpop.permute.xlu0 %1532
    %v1534 = vsel %vm302, %v1531, 0
    %v1536 = vsel %vm302, %v1533, 0
    %1538 = vmatprep.subr.mxu0 0.0
    %1539 = vmatpush1.xpose.msra.mxu0 %v1536
    %1540 = vmatprep.subr.mxu0 0.0
    %1541 = vmatpush1.xpose.msra.mxu0 0.0
    %1542 = vmatprep.subr.mxu0 0.0
    %1543 = vmatpush1.xpose.msra.mxu0 0.0
    %1544 = vmatprep.subr.mxu0 0.0
    %1545 = vmatpush1.xpose.msra.mxu0 0.0
    %1546 = vmatprep.subr.mxu0 0.0
    %1547 = vmatpush1.xpose.msra.mxu0 0.0
    %1548 = vmatprep.subr.mxu0 0.0
    %1549 = vmatpush1.xpose.msra.mxu0 0.0
    %1550 = vmatprep.subr.mxu0 0.0
    %1551 = vmatpush1.xpose.msra.mxu0 0.0
    %1552 = vmatprep.subr.mxu0 0.0
    %1553 = vmatpush1.xpose.msra.mxu0 0.0
    %1554 = vmatprep.subr.mxu0 0.0
    %1555 = vmatpush1.xpose.msra.mxu0 0.0
    %1556 = vmatprep.subr.mxu0 0.0
    %1557 = vmatpush1.xpose.msra.mxu0 0.0
    %1558 = vmatprep.subr.mxu0 0.0
    %1559 = vmatpush1.xpose.msra.mxu0 0.0
    %1560 = vmatprep.subr.mxu0 0.0
    %1561 = vmatpush1.xpose.msra.mxu0 0.0
    %1562 = vmatprep.subr.mxu0 0.0
    %1563 = vmatpush1.xpose.msra.mxu0 0.0
    %1564 = vmatprep.subr.mxu0 0.0
    %1565 = vmatpush1.xpose.msra.mxu0 0.0
    %1566 = vmatprep.subr.mxu0 0.0
    %1567 = vmatpush1.xpose.msra.mxu0 0.0
    %1568 = vmatprep.subr.mxu0 0.0
    %1569 = vmatpush1.xpose.msra.mxu0 0.0
    %1570 = vmatprep.subr.mxu0 0.0
    %1571 = vmatpush1.xpose.msra.mxu0 0.0
    %1572 = vmatprep.subr.mxu0 0.0
    %1573 = vmatpush1.xpose.msra.mxu0 0.0
    %1574 = vmatprep.subr.mxu0 0.0
    %1575 = vmatpush1.xpose.msra.mxu0 0.0
    %1576 = vmatprep.subr.mxu0 0.0
    %1577 = vmatpush1.xpose.msra.mxu0 0.0
    %1578 = vmatprep.subr.mxu0 0.0
    %1579 = vmatpush1.xpose.msra.mxu0 0.0
    %1580 = vmatprep.subr.mxu0 0.0
    %1581 = vmatpush1.xpose.msra.mxu0 0.0
    %1582 = vmatprep.subr.mxu0 0.0
    %1583 = vmatpush1.xpose.msra.mxu0 0.0
    %1584 = vmatprep.subr.mxu0 0.0
    %1585 = vmatpush1.xpose.msra.mxu0 0.0
    %1586 = vmatprep.subr.mxu0 0.0
    %1587 = vmatpush1.xpose.msra.mxu0 0.0
    %1588 = vmatprep.subr.mxu0 0.0
    %1589 = vmatpush1.xpose.msra.mxu0 0.0
    %1590 = vmatprep.subr.mxu0 0.0
    %1591 = vmatpush1.xpose.msra.mxu0 0.0
    %1592 = vmatprep.subr.mxu0 0.0
    %1593 = vmatpush1.xpose.msra.mxu0 0.0
    %1594 = vmatprep.subr.mxu0 0.0
    %1595 = vmatpush1.xpose.msra.mxu0 0.0
    %1596 = vmatprep.subr.mxu0 0.0
    %1597 = vmatpush1.xpose.msra.mxu0 0.0
    %1598 = vmatprep.subr.mxu0 0.0
    %1599 = vmatpush1.xpose.msra.mxu0 0.0
    %1600 = vmatprep.subr.mxu0 0.0
    %1601 = vmatpush1.xpose.msra.mxu0 0.0
    %1602 = vmatprep.mubr.f32.mxu0 0.0
    %1603 = vmatmul.mubr.f32.gmra.mrb[0].mxu0 %v1534
    %v1604 = vpop.f32.mrb[0].mxu0
    %v1605 = vadd.f32 0.0, %v1604
    %v1606 = vpop.f32.mrb[0].mxu0
    %1607 = vdwg.mxu0
    %1608 = vrot.lane.b32.xlu0 %v143, 104
    %v1609 = vpop.permute.xlu0 %1608
    %1610 = vrot.lane.b32.xlu0 %v220, 104
    %v1611 = vpop.permute.xlu0 %1610
    %v1612 = vsel %vm302, %v1609, 0
    %v1614 = vsel %vm302, %v1611, 0
    %1616 = vmatprep.subr.mxu0 0.0
    %1617 = vmatpush1.xpose.msra.mxu0 %v1614
    %1618 = vmatprep.subr.mxu0 0.0
    %1619 = vmatpush1.xpose.msra.mxu0 0.0
    %1620 = vmatprep.subr.mxu0 0.0
    %1621 = vmatpush1.xpose.msra.mxu0 0.0
    %1622 = vmatprep.subr.mxu0 0.0
    %1623 = vmatpush1.xpose.msra.mxu0 0.0
    %1624 = vmatprep.subr.mxu0 0.0
    %1625 = vmatpush1.xpose.msra.mxu0 0.0
    %1626 = vmatprep.subr.mxu0 0.0
    %1627 = vmatpush1.xpose.msra.mxu0 0.0
    %1628 = vmatprep.subr.mxu0 0.0
    %1629 = vmatpush1.xpose.msra.mxu0 0.0
    %1630 = vmatprep.subr.mxu0 0.0
    %1631 = vmatpush1.xpose.msra.mxu0 0.0
    %1632 = vmatprep.subr.mxu0 0.0
    %1633 = vmatpush1.xpose.msra.mxu0 0.0
    %1634 = vmatprep.subr.mxu0 0.0
    %1635 = vmatpush1.xpose.msra.mxu0 0.0
    %1636 = vmatprep.subr.mxu0 0.0
    %1637 = vmatpush1.xpose.msra.mxu0 0.0
    %1638 = vmatprep.subr.mxu0 0.0
    %1639 = vmatpush1.xpose.msra.mxu0 0.0
    %1640 = vmatprep.subr.mxu0 0.0
    %1641 = vmatpush1.xpose.msra.mxu0 0.0
    %1642 = vmatprep.subr.mxu0 0.0
    %1643 = vmatpush1.xpose.msra.mxu0 0.0
    %1644 = vmatprep.subr.mxu0 0.0
    %1645 = vmatpush1.xpose.msra.mxu0 0.0
    %1646 = vmatprep.subr.mxu0 0.0
    %1647 = vmatpush1.xpose.msra.mxu0 0.0
    %1648 = vmatprep.subr.mxu0 0.0
    %1649 = vmatpush1.xpose.msra.mxu0 0.0
    %1650 = vmatprep.subr.mxu0 0.0
    %1651 = vmatpush1.xpose.msra.mxu0 0.0
    %1652 = vmatprep.subr.mxu0 0.0
    %1653 = vmatpush1.xpose.msra.mxu0 0.0
    %1654 = vmatprep.subr.mxu0 0.0
    %1655 = vmatpush1.xpose.msra.mxu0 0.0
    %1656 = vmatprep.subr.mxu0 0.0
    %1657 = vmatpush1.xpose.msra.mxu0 0.0
    %1658 = vmatprep.subr.mxu0 0.0
    %1659 = vmatpush1.xpose.msra.mxu0 0.0
    %1660 = vmatprep.subr.mxu0 0.0
    %1661 = vmatpush1.xpose.msra.mxu0 0.0
    %1662 = vmatprep.subr.mxu0 0.0
    %1663 = vmatpush1.xpose.msra.mxu0 0.0
    %1664 = vmatprep.subr.mxu0 0.0
    %1665 = vmatpush1.xpose.msra.mxu0 0.0
    %1666 = vmatprep.subr.mxu0 0.0
    %1667 = vmatpush1.xpose.msra.mxu0 0.0
    %1668 = vmatprep.subr.mxu0 0.0
    %1669 = vmatpush1.xpose.msra.mxu0 0.0
    %1670 = vmatprep.subr.mxu0 0.0
    %1671 = vmatpush1.xpose.msra.mxu0 0.0
    %1672 = vmatprep.subr.mxu0 0.0
    %1673 = vmatpush1.xpose.msra.mxu0 0.0
    %1674 = vmatprep.subr.mxu0 0.0
    %1675 = vmatpush1.xpose.msra.mxu0 0.0
    %1676 = vmatprep.subr.mxu0 0.0
    %1677 = vmatpush1.xpose.msra.mxu0 0.0
    %1678 = vmatprep.subr.mxu0 0.0
    %1679 = vmatpush1.xpose.msra.mxu0 0.0
    %1680 = vmatprep.mubr.f32.mxu0 0.0
    %1681 = vmatmul.mubr.f32.gmra.mrb[0].mxu0 %v1612
    %v1682 = vpop.f32.mrb[0].mxu0
    %v1683 = vadd.f32 0.0, %v1682
    %v1684 = vpop.f32.mrb[0].mxu0
    %1685 = vdwg.mxu0
    %v1686 = vsel %vm302, %v1605, -inf
    %1687 = vmax.xlane.f32.xlu0 %v1686
    %v1688 = vpop.xlane.xlu0 %1687
    %v1689 = vsel %vm302, %v1683, -inf
    %1690 = vmax.xlane.f32.xlu0 %v1689
    %v1691 = vpop.xlane.xlu0 %1690
    %v1692 = vsub.f32 %v1605, %v1688
    %v1693 = vsub.f32 %v1683, %v1691
    %v1694 = vmul.f32 %v1692, 1.442695
    %v1695 = vpow.pop %v1694
    %v1696 = vmul.f32 %v1693, 1.442695
    %v1697 = vpow.pop %v1696
    %v1698 = vsel %vm302, %v1695, 0.0
    %1699 = vadd.xlane.f32.xlu0 %v1698
    %v1700 = vpop.xlane.xlu0 %1699
    %v1701 = vsel %vm302, %v1697, 0.0
    %1702 = vadd.xlane.f32.xlu0 %v1701
    %v1703 = vpop.xlane.xlu0 %1702
    %v1704 = vrcp.pop %v1700
    %v1705 = vrcp.pop %v1703
    %v1706 = vmul.f32 %v1695, %v1704
    %v1707 = vmul.f32 %v1697, %v1705
    %1708 = vrot.lane.b32.xlu0 %v294, 104
    %v1709 = vpop.permute.xlu0 %1708
    %v1712 = vsel %vm302, %v1706, 0
    %1714 = vmatprep.subr.mxu0 0.0
    %1715 = vmatpush1.msra.mxu0 %v1709
    %1716 = vmatprep.subr.mxu0 0.0
    %1717 = vmatpush1.msra.mxu0 0.0
    %1718 = vmatprep.subr.mxu0 0.0
    %1719 = vmatpush1.msra.mxu0 0.0
    %1720 = vmatprep.subr.mxu0 0.0
    %1721 = vmatpush1.msra.mxu0 0.0
    %1722 = vmatprep.subr.mxu0 0.0
    %1723 = vmatpush1.msra.mxu0 0.0
    %1724 = vmatprep.subr.mxu0 0.0
    %1725 = vmatpush1.msra.mxu0 0.0
    %1726 = vmatprep.subr.mxu0 0.0
    %1727 = vmatpush1.msra.mxu0 0.0
    %1728 = vmatprep.subr.mxu0 0.0
    %1729 = vmatpush1.msra.mxu0 0.0
    %1730 = vmatprep.subr.mxu0 0.0
    %1731 = vmatpush1.msra.mxu0 0.0
    %1732 = vmatprep.subr.mxu0 0.0
    %1733 = vmatpush1.msra.mxu0 0.0
    %1734 = vmatprep.subr.mxu0 0.0
    %1735 = vmatpush1.msra.mxu0 0.0
    %1736 = vmatprep.subr.mxu0 0.0
    %1737 = vmatpush1.msra.mxu0 0.0
    %1738 = vmatprep.subr.mxu0 0.0
    %1739 = vmatpush1.msra.mxu0 0.0
    %1740 = vmatprep.subr.mxu0 0.0
    %1741 = vmatpush1.msra.mxu0 0.0
    %1742 = vmatprep.subr.mxu0 0.0
    %1743 = vmatpush1.msra.mxu0 0.0
    %1744 = vmatprep.subr.mxu0 0.0
    %1745 = vmatpush1.msra.mxu0 0.0
    %1746 = vmatprep.subr.mxu0 0.0
    %1747 = vmatpush1.msra.mxu0 0.0
    %1748 = vmatprep.subr.mxu0 0.0
    %1749 = vmatpush1.msra.mxu0 0.0
    %1750 = vmatprep.subr.mxu0 0.0
    %1751 = vmatpush1.msra.mxu0 0.0
    %1752 = vmatprep.subr.mxu0 0.0
    %1753 = vmatpush1.msra.mxu0 0.0
    %1754 = vmatprep.subr.mxu0 0.0
    %1755 = vmatpush1.msra.mxu0 0.0
    %1756 = vmatprep.subr.mxu0 0.0
    %1757 = vmatpush1.msra.mxu0 0.0
    %1758 = vmatprep.subr.mxu0 0.0
    %1759 = vmatpush1.msra.mxu0 0.0
    %1760 = vmatprep.subr.mxu0 0.0
    %1761 = vmatpush1.msra.mxu0 0.0
    %1762 = vmatprep.subr.mxu0 0.0
    %1763 = vmatpush1.msra.mxu0 0.0
    %1764 = vmatprep.subr.mxu0 0.0
    %1765 = vmatpush1.msra.mxu0 0.0
    %1766 = vmatprep.subr.mxu0 0.0
    %1767 = vmatpush1.msra.mxu0 0.0
    %1768 = vmatprep.subr.mxu0 0.0
    %1769 = vmatpush1.msra.mxu0 0.0
    %1770 = vmatprep.subr.mxu0 0.0
    %1771 = vmatpush1.msra.mxu0 0.0
    %1772 = vmatprep.subr.mxu0 0.0
    %1773 = vmatpush1.msra.mxu0 0.0
    %1774 = vmatprep.subr.mxu0 0.0
    %1775 = vmatpush1.msra.mxu0 0.0
    %1776 = vmatprep.subr.mxu0 0.0
    %1777 = vmatpush1.msra.mxu0 0.0
    %1778 = vmatprep.mubr.f32.mxu0 0.0
    %1779 = vmatmul.mubr.f32.gmra.mrb[0].mxu0 %v1712
    %v1780 = vpop.f32.mrb[0].mxu0
    %v1781 = vadd.f32 0.0, %v1780
    %v1782 = vpop.f32.mrb[0].mxu0
    %1783 = vdwg.mxu0
    %1784 = vrot.lane.b32.xlu0 %v299, 104
    %v1785 = vpop.permute.xlu0 %1784
    %v1788 = vsel %vm302, %v1707, 0
    %1790 = vmatprep.subr.mxu0 0.0
    %1791 = vmatpush1.msra.mxu0 %v1785
    %1792 = vmatprep.subr.mxu0 0.0
    %1793 = vmatpush1.msra.mxu0 0.0
    %1794 = vmatprep.subr.mxu0 0.0
    %1795 = vmatpush1.msra.mxu0 0.0
    %1796 = vmatprep.subr.mxu0 0.0
    %1797 = vmatpush1.msra.mxu0 0.0
    %1798 = vmatprep.subr.mxu0 0.0
    %1799 = vmatpush1.msra.mxu0 0.0
    %1800 = vmatprep.subr.mxu0 0.0
    %1801 = vmatpush1.msra.mxu0 0.0
    %1802 = vmatprep.subr.mxu0 0.0
    %1803 = vmatpush1.msra.mxu0 0.0
    %1804 = vmatprep.subr.mxu0 0.0
    %1805 = vmatpush1.msra.mxu0 0.0
    %1806 = vmatprep.subr.mxu0 0.0
    %1807 = vmatpush1.msra.mxu0 0.0
    %1808 = vmatprep.subr.mxu0 0.0
    %1809 = vmatpush1.msra.mxu0 0.0
    %1810 = vmatprep.subr.mxu0 0.0
    %1811 = vmatpush1.msra.mxu0 0.0
    %1812 = vmatprep.subr.mxu0 0.0
    %1813 = vmatpush1.msra.mxu0 0.0
    %1814 = vmatprep.subr.mxu0 0.0
    %1815 = vmatpush1.msra.mxu0 0.0
    %1816 = vmatprep.subr.mxu0 0.0
    %1817 = vmatpush1.msra.mxu0 0.0
    %1818 = vmatprep.subr.mxu0 0.0
    %1819 = vmatpush1.msra.mxu0 0.0
    %1820 = vmatprep.subr.mxu0 0.0
    %1821 = vmatpush1.msra.mxu0 0.0
    %1822 = vmatprep.subr.mxu0 0.0
    %1823 = vmatpush1.msra.mxu0 0.0
    %1824 = vmatprep.subr.mxu0 0.0
    %1825 = vmatpush1.msra.mxu0 0.0
    %1826 = vmatprep.subr.mxu0 0.0
    %1827 = vmatpush1.msra.mxu0 0.0
    %1828 = vmatprep.subr.mxu0 0.0
    %1829 = vmatpush1.msra.mxu0 0.0
    %1830 = vmatprep.subr.mxu0 0.0
    %1831 = vmatpush1.msra.mxu0 0.0
    %1832 = vmatprep.subr.mxu0 0.0
    %1833 = vmatpush1.msra.mxu0 0.0
    %1834 = vmatprep.subr.mxu0 0.0
    %1835 = vmatpush1.msra.mxu0 0.0
    %1836 = vmatprep.subr.mxu0 0.0
    %1837 = vmatpush1.msra.mxu0 0.0
    %1838 = vmatprep.subr.mxu0 0.0
    %1839 = vmatpush1.msra.mxu0 0.0
    %1840 = vmatprep.subr.mxu0 0.0
    %1841 = vmatpush1.msra.mxu0 0.0
    %1842 = vmatprep.subr.mxu0 0.0
    %1843 = vmatpush1.msra.mxu0 0.0
    %1844 = vmatprep.subr.mxu0 0.0
    %1845 = vmatpush1.msra.mxu0 0.0
    %1846 = vmatprep.subr.mxu0 0.0
    %1847 = vmatpush1.msra.mxu0 0.0
    %1848 = vmatprep.subr.mxu0 0.0
    %1849 = vmatpush1.msra.mxu0 0.0
    %1850 = vmatprep.subr.mxu0 0.0
    %1851 = vmatpush1.msra.mxu0 0.0
    %1852 = vmatprep.subr.mxu0 0.0
    %1853 = vmatpush1.msra.mxu0 0.0
    %1854 = vmatprep.mubr.f32.mxu0 0.0
    %1855 = vmatmul.mubr.f32.gmra.mrb[0].mxu0 %v1788
    %v1856 = vpop.f32.mrb[0].mxu0
    %v1857 = vadd.f32 0.0, %v1856
    %v1858 = vpop.f32.mrb[0].mxu0
    %1859 = vdwg.mxu0
    %v1861 = vsel %vm302, %v1781, 0
    %v1864 = vsel %vm302, %v1857, 0
    %1866 = vmatprep.subr.mxu0 0.0
    %1867 = vmatpush1.msra.mxu0 %v51
    %1868 = vmatprep.subr.mxu0 0.0
    %1869 = vmatpush1.msra.mxu0 0.0
    %1870 = vmatprep.subr.mxu0 0.0
    %1871 = vmatpush1.msra.mxu0 0.0
    %1872 = vmatprep.subr.mxu0 0.0
    %1873 = vmatpush1.msra.mxu0 0.0
    %1874 = vmatprep.subr.mxu0 0.0
    %1875 = vmatpush1.msra.mxu0 0.0
    %1876 = vmatprep.subr.mxu0 0.0
    %1877 = vmatpush1.msra.mxu0 0.0
    %1878 = vmatprep.subr.mxu0 0.0
    %1879 = vmatpush1.msra.mxu0 0.0
    %1880 = vmatprep.subr.mxu0 0.0
    %1881 = vmatpush1.msra.mxu0 0.0
    %1882 = vmatprep.subr.mxu0 0.0
    %1883 = vmatpush1.msra.mxu0 0.0
    %1884 = vmatprep.subr.mxu0 0.0
    %1885 = vmatpush1.msra.mxu0 0.0
    %1886 = vmatprep.subr.mxu0 0.0
    %1887 = vmatpush1.msra.mxu0 0.0
    %1888 = vmatprep.subr.mxu0 0.0
    %1889 = vmatpush1.msra.mxu0 0.0
    %1890 = vmatprep.subr.mxu0 0.0
    %1891 = vmatpush1.msra.mxu0 0.0
    %1892 = vmatprep.subr.mxu0 0.0
    %1893 = vmatpush1.msra.mxu0 0.0
    %1894 = vmatprep.subr.mxu0 0.0
    %1895 = vmatpush1.msra.mxu0 0.0
    %1896 = vmatprep.subr.mxu0 0.0
    %1897 = vmatpush1.msra.mxu0 0.0
    %1898 = vmatprep.subr.mxu0 0.0
    %1899 = vmatpush1.msra.mxu0 0.0
    %1900 = vmatprep.subr.mxu0 0.0
    %1901 = vmatpush1.msra.mxu0 0.0
    %1902 = vmatprep.subr.mxu0 0.0
    %1903 = vmatpush1.msra.mxu0 0.0
    %1904 = vmatprep.subr.mxu0 0.0
    %1905 = vmatpush1.msra.mxu0 0.0
    %1906 = vmatprep.subr.mxu0 0.0
    %1907 = vmatpush1.msra.mxu0 0.0
    %1908 = vmatprep.subr.mxu0 0.0
    %1909 = vmatpush1.msra.mxu0 0.0
    %1910 = vmatprep.subr.mxu0 0.0
    %1911 = vmatpush1.msra.mxu0 0.0
    %1912 = vmatprep.subr.mxu0 0.0
    %1913 = vmatpush1.msra.mxu0 0.0
    %1914 = vmatprep.subr.mxu0 0.0
    %1915 = vmatpush1.msra.mxu0 0.0
    %1916 = vmatprep.subr.mxu0 0.0
    %1917 = vmatpush1.msra.mxu0 0.0
    %1918 = vmatprep.subr.mxu0 0.0
    %1919 = vmatpush1.msra.mxu0 0.0
    %1920 = vmatprep.subr.mxu0 0.0
    %1921 = vmatpush1.msra.mxu0 0.0
    %1922 = vmatprep.subr.mxu0 0.0
    %1923 = vmatpush1.msra.mxu0 0.0
    %1924 = vmatprep.subr.mxu0 0.0
    %1925 = vmatpush1.msra.mxu0 0.0
    %1926 = vmatprep.subr.mxu0 0.0
    %1927 = vmatpush1.msra.mxu0 0.0
    %1928 = vmatprep.subr.mxu0 0.0
    %1929 = vmatpush1.msra.mxu0 0.0
    %1930 = vmatprep.mubr.f32.mxu0 0.0
    %1931 = vmatmul.mubr.f32.gmra.mrb[0].mxu0 %v1861
    %v1932 = vpop.f32.mrb[0].mxu0
    %v1933 = vadd.f32 0.0, %v1932
    %v1934 = vpop.f32.mrb[0].mxu0
    %1935 = vmatprep.mubr.f32.mxu0 0.0
    %1936 = vmatmul.mubr.f32.gmra.mrb[0].mxu0 %v1864
    %v1937 = vpop.f32.mrb[0].mxu0
    %v1938 = vadd.f32 0.0, %v1937
    %v1939 = vpop.f32.mrb[0].mxu0
    %1940 = vdwg.mxu0
    %v1941 = vadd.f32 %v1528, %v1933
    %v1942 = vadd.f32 %v1529, %v1938
    %v1943 = vadd.f32 %v53, %v1941
    %v1944 = vadd.f32 %v54, %v1942
    %v1945 = vlaneseq
    %v1946 = vshrl.u32 %v1945, 7
    %v1947 = vsub.s32 3, %v1946
    %v1948 = vrot.slane %v52, %v1947
    %v1949 = vadd.f32 %v1943, %v1948
    %v1950 = vadd.f32 %v1944, %v1948
    %v1951 = vsel %vm60, %v1949, 0.0
    %1952 = vadd.xlane.f32.xlu0 %v1951
    %v1953 = vpop.xlane.xlu0 %1952
    %v1954 = vsel %vm60, %v1950, 0.0
    %1955 = vadd.xlane.f32.xlu0 %v1954
    %v1956 = vpop.xlane.xlu0 %1955
    %v1957 = vrcp.pop 32.0
    %v1958 = vmul.f32 %v1953, %v1957
    %v1959 = vmul.f32 %v1956, %v1957
    %v1960 = vsub.f32 %v1949, %v1958
    %v1961 = vsub.f32 %v1950, %v1959
    %v1962 = vmul.f32 %v1960, %v1960
    %v1963 = vmul.f32 %v1961, %v1961
    %v1964 = vsel %vm60, %v1962, 0.0
    %1965 = vadd.xlane.f32.xlu0 %v1964
    %v1966 = vpop.xlane.xlu0 %1965
    %v1967 = vsel %vm60, %v1963, 0.0
    %1968 = vadd.xlane.f32.xlu0 %v1967
    %v1969 = vpop.xlane.xlu0 %1968
    %v1970 = vmul.f32 %v1966, %v1957
    %v1971 = vmul.f32 %v1969, %v1957
    %v1972 = vadd.f32 %v1970, 1e-05
    %v1973 = vadd.f32 %v1971, 1e-05
    %v1974 = vrsqrt.pop %v1972
    %v1975 = vrsqrt.pop %v1973
    %v1976 = vmul.f32 %v1960, %v1974
    %v1977 = vmul.f32 %v1961, %v1975
    %v1978 = vlaneseq
    %v1979 = vshrl.u32 %v1978, 7
    %v1980 = vsub.s32 1, %v1979
    %v1981 = vrot.slane %v55, %v1980
    %v1982 = vmul.f32 %v1976, %v1981
    %v1983 = vmul.f32 %v1977, %v1981
    %v1984 = vlaneseq
    %v1985 = vshrl.u32 %v1984, 7
    %v1986 = vsub.s32 2, %v1985
    %v1987 = vrot.slane %v55, %v1986
    %v1988 = vadd.f32 %v1982, %v1987
    %v1989 = vadd.f32 %v1983, %v1987
    %v1990 = vld [vmem:[%s6] sm:$0xff]
    %v1991 = vld [vmem:[%s6 + $0x8] sm:$0xff]
    %v1992 = vld [vmem:[%s6 + $0x10] sm:$0xff]
    %v1993 = vld [vmem:[%s6 + $0x18] sm:$0xff]
    %v1994 = vld [vmem:[%s7] sm:$0x1]
    %v1996 = vlaneseq
    %v1997 = vshrl.u32 %v1996, 7
    %v1998 = vsub.s32 0, %v1997
    %v1999 = vrot.slane %v1994, %v1998
    %v2002 = vsel %vm60, %v1988, 0
    %v2005 = vsel %vm60, %v1989, 0
    %2007 = vmatprep.subr.mxu0 0.0
    %2008 = vmatpush1.msra.mxu0 %v1990
    %2009 = vmatprep.subr.mxu0 0.0
    %2010 = vmatpush1.msra.mxu0 %v1991
    %2011 = vmatprep.subr.mxu0 0.0
    %2012 = vmatpush1.msra.mxu0 %v1992
    %2013 = vmatprep.subr.mxu0 0.0
    %2014 = vmatpush1.msra.mxu0 %v1993
    %2015 = vmatprep.subr.mxu0 0.0
    %2016 = vmatpush1.msra.mxu0 0.0
    %2017 = vmatprep.subr.mxu0 0.0
    %2018 = vmatpush1.msra.mxu0 0.0
    %2019 = vmatprep.subr.mxu0 0.0
    %2020 = vmatpush1.msra.mxu0 0.0
    %2021 = vmatprep.subr.mxu0 0.0
    %2022 = vmatpush1.msra.mxu0 0.0
    %2023 = vmatprep.subr.mxu0 0.0
    %2024 = vmatpush1.msra.mxu0 0.0
    %2025 = vmatprep.subr.mxu0 0.0
    %2026 = vmatpush1.msra.mxu0 0.0
    %2027 = vmatprep.subr.mxu0 0.0
    %2028 = vmatpush1.msra.mxu0 0.0
    %2029 = vmatprep.subr.mxu0 0.0
    %2030 = vmatpush1.msra.mxu0 0.0
    %2031 = vmatprep.subr.mxu0 0.0
    %2032 = vmatpush1.msra.mxu0 0.0
    %2033 = vmatprep.subr.mxu0 0.0
    %2034 = vmatpush1.msra.mxu0 0.0
    %2035 = vmatprep.subr.mxu0 0.0
    %2036 = vmatpush1.msra.mxu0 0.0
    %2037 = vmatprep.subr.mxu0 0.0
    %2038 = vmatpush1.msra.mxu0 0.0
    %2039 = vmatprep.subr.mxu0 0.0
    %2040 = vmatpush1.msra.mxu0 0.0
    %2041 = vmatprep.subr.mxu0 0.0
    %2042 = vmatpush1.msra.mxu0 0.0
    %2043 = vmatprep.subr.mxu0 0.0
    %2044 = vmatpush1.msra.mxu0 0.0
    %2045 = vmatprep.subr.mxu0 0.0
    %2046 = vmatpush1.msra.mxu0 0.0
    %2047 = vmatprep.subr.mxu0 0.0
    %2048 = vmatpush1.msra.mxu0 0.0
    %2049 = vmatprep.subr.mxu0 0.0
    %2050 = vmatpush1.msra.mxu0 0.0
    %2051 = vmatprep.subr.mxu0 0.0
    %2052 = vmatpush1.msra.mxu0 0.0
    %2053 = vmatprep.subr.mxu0 0.0
    %2054 = vmatpush1.msra.mxu0 0.0
    %2055 = vmatprep.subr.mxu0 0.0
    %2056 = vmatpush1.msra.mxu0 0.0
    %2057 = vmatprep.subr.mxu0 0.0
    %2058 = vmatpush1.msra.mxu0 0.0
    %2059 = vmatprep.subr.mxu0 0.0
    %2060 = vmatpush1.msra.mxu0 0.0
    %2061 = vmatprep.subr.mxu0 0.0
    %2062 = vmatpush1.msra.mxu0 0.0
    %2063 = vmatprep.subr.mxu0 0.0
    %2064 = vmatpush1.msra.mxu0 0.0
    %2065 = vmatprep.subr.mxu0 0.0
    %2066 = vmatpush1.msra.mxu0 0.0
    %2067 = vmatprep.subr.mxu0 0.0
    %2068 = vmatpush1.msra.mxu0 0.0
    %2069 = vmatprep.subr.mxu0 0.0
    %2070 = vmatpush1.msra.mxu0 0.0
    %2071 = vmatprep.mubr.f32.mxu0 0.0
    %2072 = vmatmul.mubr.f32.gmra.mrb[0].mxu0 %v2002
    %v2073 = vpop.f32.mrb[0].mxu0
    %v2074 = vadd.f32 %v1999, %v2073
    %v2075 = vpop.f32.mrb[0].mxu0
    %2076 = vmatprep.mubr.f32.mxu0 0.0
    %2077 = vmatmul.mubr.f32.gmra.mrb[0].mxu0 %v2005
    %v2078 = vpop.f32.mrb[0].mxu0
    %v2079 = vadd.f32 %v1999, %v2078
    %v2080 = vpop.f32.mrb[0].mxu0
    %2081 = vdwg.mxu0
    %v2082 = vmax.f32 %v2074, 0.0
    %v2083 = vmax.f32 %v2079, 0.0
    %v2084 = vld [vmem:[%s8] sm:$0xff]
    %v2085 = vld [vmem:[%s8 + $0x8] sm:$0xff]
    %v2086 = vld [vmem:[%s8 + $0x10] sm:$0xff]
    %v2087 = vld [vmem:[%s8 + $0x18] sm:$0xff]
    %v2088 = vld [vmem:[%s8 + $0x20] sm:$0xff]
    %v2089 = vld [vmem:[%s8 + $0x28] sm:$0xff]
    %v2090 = vld [vmem:[%s8 + $0x30] sm:$0xff]
    %v2091 = vld [vmem:[%s8 + $0x38] sm:$0xff]
    %v2092 = vlaneseq
    %v2093 = vshrl.u32 %v2092, 7
    %v2094 = vsub.s32 0, %v2093
    %v2095 = vrot.slane %v55, %v2094
    %vm2096 = vcmask 523264
    %v2098 = vsel %vm2096, %v2082, 0
    %v2101 = vsel %vm2096, %v2083, 0
    %2103 = vmatprep.subr.mxu0 0.0
    %2104 = vmatpush1.msra.mxu0 %v2084
    %2105 = vmatprep.subr.mxu0 0.0
    %2106 = vmatpush1.msra.mxu0 %v2085
    %2107 = vmatprep.subr.mxu0 0.0
    %2108 = vmatpush1.msra.mxu0 %v2086
    %2109 = vmatprep.subr.mxu0 0.0
    %2110 = vmatpush1.msra.mxu0 %v2087
    %2111 = vmatprep.subr.mxu0 0.0
    %2112 = vmatpush1.msra.mxu0 %v2088
    %2113 = vmatprep.subr.mxu0 0.0
    %2114 = vmatpush1.msra.mxu0 %v2089
    %2115 = vmatprep.subr.mxu0 0.0
    %2116 = vmatpush1.msra.mxu0 %v2090
    %2117 = vmatprep.subr.mxu0 0.0
    %2118 = vmatpush1.msra.mxu0 %v2091
    %2119 = vmatprep.subr.mxu0 0.0
    %2120 = vmatpush1.msra.mxu0 0.0
    %2121 = vmatprep.subr.mxu0 0.0
    %2122 = vmatpush1.msra.mxu0 0.0
    %2123 = vmatprep.subr.mxu0 0.0
    %2124 = vmatpush1.msra.mxu0 0.0
    %2125 = vmatprep.subr.mxu0 0.0
    %2126 = vmatpush1.msra.mxu0 0.0
    %2127 = vmatprep.subr.mxu0 0.0
    %2128 = vmatpush1.msra.mxu0 0.0
    %2129 = vmatprep.subr.mxu0 0.0
    %2130 = vmatpush1.msra.mxu0 0.0
    %2131 = vmatprep.subr.mxu0 0.0
    %2132 = vmatpush1.msra.mxu0 0.0
    %2133 = vmatprep.subr.mxu0 0.0
    %2134 = vmatpush1.msra.mxu0 0.0
    %2135 = vmatprep.subr.mxu0 0.0
    %2136 = vmatpush1.msra.mxu0 0.0
    %2137 = vmatprep.subr.mxu0 0.0
    %2138 = vmatpush1.msra.mxu0 0.0
    %2139 = vmatprep.subr.mxu0 0.0
    %2140 = vmatpush1.msra.mxu0 0.0
    %2141 = vmatprep.subr.mxu0 0.0
    %2142 = vmatpush1.msra.mxu0 0.0
    %2143 = vmatprep.subr.mxu0 0.0
    %2144 = vmatpush1.msra.mxu0 0.0
    %2145 = vmatprep.subr.mxu0 0.0
    %2146 = vmatpush1.msra.mxu0 0.0
    %2147 = vmatprep.subr.mxu0 0.0
    %2148 = vmatpush1.msra.mxu0 0.0
    %2149 = vmatprep.subr.mxu0 0.0
    %2150 = vmatpush1.msra.mxu0 0.0
    %2151 = vmatprep.subr.mxu0 0.0
    %2152 = vmatpush1.msra.mxu0 0.0
    %2153 = vmatprep.subr.mxu0 0.0
    %2154 = vmatpush1.msra.mxu0 0.0
    %2155 = vmatprep.subr.mxu0 0.0
    %2156 = vmatpush1.msra.mxu0 0.0
    %2157 = vmatprep.subr.mxu0 0.0
    %2158 = vmatpush1.msra.mxu0 0.0
    %2159 = vmatprep.subr.mxu0 0.0
    %2160 = vmatpush1.msra.mxu0 0.0
    %2161 = vmatprep.subr.mxu0 0.0
    %2162 = vmatpush1.msra.mxu0 0.0
    %2163 = vmatprep.subr.mxu0 0.0
    %2164 = vmatpush1.msra.mxu0 0.0
    %2165 = vmatprep.subr.mxu0 0.0
    %2166 = vmatpush1.msra.mxu0 0.0
    %2167 = vmatprep.mubr.f32.mxu0 0.0
    %2168 = vmatmul.mubr.f32.gmra.mrb[0].mxu0 %v2098
    %v2169 = vpop.f32.mrb[0].mxu0
    %v2170 = vadd.f32 %v2095, %v2169
    %v2171 = vpop.f32.mrb[0].mxu0
    %2172 = vmatprep.mubr.f32.mxu0 0.0
    %2173 = vmatmul.mubr.f32.gmra.mrb[0].mxu0 %v2101
    %v2174 = vpop.f32.mrb[0].mxu0
    %v2175 = vadd.f32 %v2095, %v2174
    %v2176 = vpop.f32.mrb[0].mxu0
    %2177 = vdwg.mxu0
    %v2178 = vadd.f32 %v1988, %v2170
    %v2179 = vadd.f32 %v1989, %v2175
    %v2180 = vsel %vm60, %v2178, 0.0
    %2181 = vadd.xlane.f32.xlu0 %v2180
    %v2182 = vpop.xlane.xlu0 %2181
    %v2183 = vsel %vm60, %v2179, 0.0
    %2184 = vadd.xlane.f32.xlu0 %v2183
    %v2185 = vpop.xlane.xlu0 %2184
    %v2186 = vmul.f32 %v2182, %v1957
    %v2187 = vmul.f32 %v2185, %v1957
    %v2188 = vsub.f32 %v2178, %v2186
    %v2189 = vsub.f32 %v2179, %v2187
    %v2190 = vmul.f32 %v2188, %v2188
    %v2191 = vmul.f32 %v2189, %v2189
    %v2192 = vsel %vm60, %v2190, 0.0
    %2193 = vadd.xlane.f32.xlu0 %v2192
    %v2194 = vpop.xlane.xlu0 %2193
    %v2195 = vsel %vm60, %v2191, 0.0
    %2196 = vadd.xlane.f32.xlu0 %v2195
    %v2197 = vpop.xlane.xlu0 %2196
    %v2198 = vmul.f32 %v2194, %v1957
    %v2199 = vmul.f32 %v2197, %v1957
    %v2200 = vadd.f32 %v2198, 1e-05
    %v2201 = vadd.f32 %v2199, 1e-05
    %v2202 = vrsqrt.pop %v2200
    %v2203 = vrsqrt.pop %v2201
    %v2204 = vmul.f32 %v2188, %v2202
    %v2205 = vmul.f32 %v2189, %v2203
    %v2206 = vlaneseq
    %v2207 = vshrl.u32 %v2206, 7
    %v2208 = vsub.s32 3, %v2207
    %v2209 = vrot.slane %v55, %v2208
    %v2210 = vmul.f32 %v2204, %v2209
    %v2211 = vmul.f32 %v2205, %v2209
    %v2212 = vlaneseq
    %v2213 = vshrl.u32 %v2212, 7
    %v2214 = vsub.s32 4, %v2213
    %v2215 = vrot.slane %v55, %v2214
    %v2216 = vadd.f32 %v2210, %v2215
    %v2217 = vadd.f32 %v2211, %v2215
    %s2218 = scalar_lea.vmem %s9, 8
    %v2219 = vld [vmem:[%s2218] sm:$0x1f]
    %v2221 = vsel %vm60, %v2216, 0
    %v2224 = vsel %vm60, %v2217, 0
    %2226 = vmatprep.subr.mxu0 0.0
    %2227 = vmatpush1.msra.mxu0 %v36
    %2228 = vmatprep.subr.mxu0 0.0
    %2229 = vmatpush1.msra.mxu0 %v37
    %2230 = vmatprep.subr.mxu0 0.0
    %2231 = vmatpush1.msra.mxu0 %v38
    %2232 = vmatprep.subr.mxu0 0.0
    %2233 = vmatpush1.msra.mxu0 %v39
    %2234 = vmatprep.subr.mxu0 0.0
    %2235 = vmatpush1.msra.mxu0 0.0
    %2236 = vmatprep.subr.mxu0 0.0
    %2237 = vmatpush1.msra.mxu0 0.0
    %2238 = vmatprep.subr.mxu0 0.0
    %2239 = vmatpush1.msra.mxu0 0.0
    %2240 = vmatprep.subr.mxu0 0.0
    %2241 = vmatpush1.msra.mxu0 0.0
    %2242 = vmatprep.subr.mxu0 0.0
    %2243 = vmatpush1.msra.mxu0 0.0
    %2244 = vmatprep.subr.mxu0 0.0
    %2245 = vmatpush1.msra.mxu0 0.0
    %2246 = vmatprep.subr.mxu0 0.0
    %2247 = vmatpush1.msra.mxu0 0.0
    %2248 = vmatprep.subr.mxu0 0.0
    %2249 = vmatpush1.msra.mxu0 0.0
    %2250 = vmatprep.subr.mxu0 0.0
    %2251 = vmatpush1.msra.mxu0 0.0
    %2252 = vmatprep.subr.mxu0 0.0
    %2253 = vmatpush1.msra.mxu0 0.0
    %2254 = vmatprep.subr.mxu0 0.0
    %2255 = vmatpush1.msra.mxu0 0.0
    %2256 = vmatprep.subr.mxu0 0.0
    %2257 = vmatpush1.msra.mxu0 0.0
    %2258 = vmatprep.subr.mxu0 0.0
    %2259 = vmatpush1.msra.mxu0 0.0
    %2260 = vmatprep.subr.mxu0 0.0
    %2261 = vmatpush1.msra.mxu0 0.0
    %2262 = vmatprep.subr.mxu0 0.0
    %2263 = vmatpush1.msra.mxu0 0.0
    %2264 = vmatprep.subr.mxu0 0.0
    %2265 = vmatpush1.msra.mxu0 0.0
    %2266 = vmatprep.subr.mxu0 0.0
    %2267 = vmatpush1.msra.mxu0 0.0
    %2268 = vmatprep.subr.mxu0 0.0
    %2269 = vmatpush1.msra.mxu0 0.0
    %2270 = vmatprep.subr.mxu0 0.0
    %2271 = vmatpush1.msra.mxu0 0.0
    %2272 = vmatprep.subr.mxu0 0.0
    %2273 = vmatpush1.msra.mxu0 0.0
    %2274 = vmatprep.subr.mxu0 0.0
    %2275 = vmatpush1.msra.mxu0 0.0
    %2276 = vmatprep.subr.mxu0 0.0
    %2277 = vmatpush1.msra.mxu0 0.0
    %2278 = vmatprep.subr.mxu0 0.0
    %2279 = vmatpush1.msra.mxu0 0.0
    %2280 = vmatprep.subr.mxu0 0.0
    %2281 = vmatpush1.msra.mxu0 0.0
    %2282 = vmatprep.subr.mxu0 0.0
    %2283 = vmatpush1.msra.mxu0 0.0
    %2284 = vmatprep.subr.mxu0 0.0
    %2285 = vmatpush1.msra.mxu0 0.0
    %2286 = vmatprep.subr.mxu0 0.0
    %2287 = vmatpush1.msra.mxu0 0.0
    %2288 = vmatprep.subr.mxu0 0.0
    %2289 = vmatpush1.msra.mxu0 0.0
    %2290 = vmatprep.mubr.f32.mxu0 0.0
    %2291 = vmatmul.mubr.f32.gmra.mrb[0].mxu0 %v2221
    %v2292 = vpop.f32.mrb[0].mxu0
    %v2293 = vadd.f32 %v59, %v2292
    %v2294 = vpop.f32.mrb[0].mxu0
    %2295 = vmatprep.mubr.f32.mxu0 0.0
    %2296 = vmatmul.mubr.f32.gmra.mrb[0].mxu0 %v2224
    %v2297 = vpop.f32.mrb[0].mxu0
    %v2298 = vadd.f32 %v59, %v2297
    %v2299 = vpop.f32.mrb[0].mxu0
    %2300 = vdwg.mxu0
    %v2301 = vmul.f32 %v2293, 0.35355338
    %v2302 = vmul.f32 %v2298, 0.35355338
    %2303 = vmatprep.subr.mxu0 0.0
    %2304 = vmatpush1.msra.mxu0 %v40
    %2305 = vmatprep.subr.mxu0 0.0
    %2306 = vmatpush1.msra.mxu0 %v41
    %2307 = vmatprep.subr.mxu0 0.0
    %2308 = vmatpush1.msra.mxu0 %v42
    %2309 = vmatprep.subr.mxu0 0.0
    %2310 = vmatpush1.msra.mxu0 %v43
    %2311 = vmatprep.subr.mxu0 0.0
    %2312 = vmatpush1.msra.mxu0 0.0
    %2313 = vmatprep.subr.mxu0 0.0
    %2314 = vmatpush1.msra.mxu0 0.0
    %2315 = vmatprep.subr.mxu0 0.0
    %2316 = vmatpush1.msra.mxu0 0.0
    %2317 = vmatprep.subr.mxu0 0.0
    %2318 = vmatpush1.msra.mxu0 0.0
    %2319 = vmatprep.subr.mxu0 0.0
    %2320 = vmatpush1.msra.mxu0 0.0
    %2321 = vmatprep.subr.mxu0 0.0
    %2322 = vmatpush1.msra.mxu0 0.0
    %2323 = vmatprep.subr.mxu0 0.0
    %2324 = vmatpush1.msra.mxu0 0.0
    %2325 = vmatprep.subr.mxu0 0.0
    %2326 = vmatpush1.msra.mxu0 0.0
    %2327 = vmatprep.subr.mxu0 0.0
    %2328 = vmatpush1.msra.mxu0 0.0
    %2329 = vmatprep.subr.mxu0 0.0
    %2330 = vmatpush1.msra.mxu0 0.0
    %2331 = vmatprep.subr.mxu0 0.0
    %2332 = vmatpush1.msra.mxu0 0.0
    %2333 = vmatprep.subr.mxu0 0.0
    %2334 = vmatpush1.msra.mxu0 0.0
    %2335 = vmatprep.subr.mxu0 0.0
    %2336 = vmatpush1.msra.mxu0 0.0
    %2337 = vmatprep.subr.mxu0 0.0
    %2338 = vmatpush1.msra.mxu0 0.0
    %2339 = vmatprep.subr.mxu0 0.0
    %2340 = vmatpush1.msra.mxu0 0.0
    %2341 = vmatprep.subr.mxu0 0.0
    %2342 = vmatpush1.msra.mxu0 0.0
    %2343 = vmatprep.subr.mxu0 0.0
    %2344 = vmatpush1.msra.mxu0 0.0
    %2345 = vmatprep.subr.mxu0 0.0
    %2346 = vmatpush1.msra.mxu0 0.0
    %2347 = vmatprep.subr.mxu0 0.0
    %2348 = vmatpush1.msra.mxu0 0.0
    %2349 = vmatprep.subr.mxu0 0.0
    %2350 = vmatpush1.msra.mxu0 0.0
    %2351 = vmatprep.subr.mxu0 0.0
    %2352 = vmatpush1.msra.mxu0 0.0
    %2353 = vmatprep.subr.mxu0 0.0
    %2354 = vmatpush1.msra.mxu0 0.0
    %2355 = vmatprep.subr.mxu0 0.0
    %2356 = vmatpush1.msra.mxu0 0.0
    %2357 = vmatprep.subr.mxu0 0.0
    %2358 = vmatpush1.msra.mxu0 0.0
    %2359 = vmatprep.subr.mxu0 0.0
    %2360 = vmatpush1.msra.mxu0 0.0
    %2361 = vmatprep.subr.mxu0 0.0
    %2362 = vmatpush1.msra.mxu0 0.0
    %2363 = vmatprep.subr.mxu0 0.0
    %2364 = vmatpush1.msra.mxu0 0.0
    %2365 = vmatprep.subr.mxu0 0.0
    %2366 = vmatpush1.msra.mxu0 0.0
    %2367 = vmatprep.mubr.f32.mxu0 0.0
    %2368 = vmatmul.mubr.f32.gmra.mrb[0].mxu0 %v2221
    %v2369 = vpop.f32.mrb[0].mxu0
    %v2370 = vadd.f32 %v147, %v2369
    %v2371 = vpop.f32.mrb[0].mxu0
    %2372 = vmatprep.mubr.f32.mxu0 0.0
    %2373 = vmatmul.mubr.f32.gmra.mrb[0].mxu0 %v2224
    %v2374 = vpop.f32.mrb[0].mxu0
    %v2375 = vadd.f32 %v147, %v2374
    %v2376 = vpop.f32.mrb[0].mxu0
    %2377 = vdwg.mxu0
    %2378 = vmatprep.subr.mxu0 0.0
    %2379 = vmatpush1.msra.mxu0 %v44
    %2380 = vmatprep.subr.mxu0 0.0
    %2381 = vmatpush1.msra.mxu0 %v45
    %2382 = vmatprep.subr.mxu0 0.0
    %2383 = vmatpush1.msra.mxu0 %v46
    %2384 = vmatprep.subr.mxu0 0.0
    %2385 = vmatpush1.msra.mxu0 %v47
    %2386 = vmatprep.subr.mxu0 0.0
    %2387 = vmatpush1.msra.mxu0 0.0
    %2388 = vmatprep.subr.mxu0 0.0
    %2389 = vmatpush1.msra.mxu0 0.0
    %2390 = vmatprep.subr.mxu0 0.0
    %2391 = vmatpush1.msra.mxu0 0.0
    %2392 = vmatprep.subr.mxu0 0.0
    %2393 = vmatpush1.msra.mxu0 0.0
    %2394 = vmatprep.subr.mxu0 0.0
    %2395 = vmatpush1.msra.mxu0 0.0
    %2396 = vmatprep.subr.mxu0 0.0
    %2397 = vmatpush1.msra.mxu0 0.0
    %2398 = vmatprep.subr.mxu0 0.0
    %2399 = vmatpush1.msra.mxu0 0.0
    %2400 = vmatprep.subr.mxu0 0.0
    %2401 = vmatpush1.msra.mxu0 0.0
    %2402 = vmatprep.subr.mxu0 0.0
    %2403 = vmatpush1.msra.mxu0 0.0
    %2404 = vmatprep.subr.mxu0 0.0
    %2405 = vmatpush1.msra.mxu0 0.0
    %2406 = vmatprep.subr.mxu0 0.0
    %2407 = vmatpush1.msra.mxu0 0.0
    %2408 = vmatprep.subr.mxu0 0.0
    %2409 = vmatpush1.msra.mxu0 0.0
    %2410 = vmatprep.subr.mxu0 0.0
    %2411 = vmatpush1.msra.mxu0 0.0
    %2412 = vmatprep.subr.mxu0 0.0
    %2413 = vmatpush1.msra.mxu0 0.0
    %2414 = vmatprep.subr.mxu0 0.0
    %2415 = vmatpush1.msra.mxu0 0.0
    %2416 = vmatprep.subr.mxu0 0.0
    %2417 = vmatpush1.msra.mxu0 0.0
    %2418 = vmatprep.subr.mxu0 0.0
    %2419 = vmatpush1.msra.mxu0 0.0
    %2420 = vmatprep.subr.mxu0 0.0
    %2421 = vmatpush1.msra.mxu0 0.0
    %2422 = vmatprep.subr.mxu0 0.0
    %2423 = vmatpush1.msra.mxu0 0.0
    %2424 = vmatprep.subr.mxu0 0.0
    %2425 = vmatpush1.msra.mxu0 0.0
    %2426 = vmatprep.subr.mxu0 0.0
    %2427 = vmatpush1.msra.mxu0 0.0
    %2428 = vmatprep.subr.mxu0 0.0
    %2429 = vmatpush1.msra.mxu0 0.0
    %2430 = vmatprep.subr.mxu0 0.0
    %2431 = vmatpush1.msra.mxu0 0.0
    %2432 = vmatprep.subr.mxu0 0.0
    %2433 = vmatpush1.msra.mxu0 0.0
    %2434 = vmatprep.subr.mxu0 0.0
    %2435 = vmatpush1.msra.mxu0 0.0
    %2436 = vmatprep.subr.mxu0 0.0
    %2437 = vmatpush1.msra.mxu0 0.0
    %2438 = vmatprep.subr.mxu0 0.0
    %2439 = vmatpush1.msra.mxu0 0.0
    %2440 = vmatprep.subr.mxu0 0.0
    %2441 = vmatpush1.msra.mxu0 0.0
    %2442 = vmatprep.mubr.f32.mxu0 0.0
    %2443 = vmatmul.mubr.f32.gmra.mrb[0].mxu0 %v2221
    %v2444 = vpop.f32.mrb[0].mxu0
    %v2445 = vadd.f32 %v226, %v2444
    %v2446 = vpop.f32.mrb[0].mxu0
    %2447 = vmatprep.mubr.f32.mxu0 0.0
    %2448 = vmatmul.mubr.f32.gmra.mrb[0].mxu0 %v2224
    %v2449 = vpop.f32.mrb[0].mxu0
    %v2450 = vadd.f32 %v226, %v2449
    %v2451 = vpop.f32.mrb[0].mxu0
    %2452 = vdwg.mxu0
    %v2454 = vsel %vm302, %v2301, 0
    %v2457 = vsel %vm302, %v2370, 0
    %2459 = vmatprep.subr.mxu0 0.0
    %2460 = vmatpush1.xpose.msra.mxu0 %v2457
    %2461 = vmatprep.subr.mxu0 0.0
    %2462 = vmatpush1.xpose.msra.mxu0 0.0
    %2463 = vmatprep.subr.mxu0 0.0
    %2464 = vmatpush1.xpose.msra.mxu0 0.0
    %2465 = vmatprep.subr.mxu0 0.0
    %2466 = vmatpush1.xpose.msra.mxu0 0.0
    %2467 = vmatprep.subr.mxu0 0.0
    %2468 = vmatpush1.xpose.msra.mxu0 0.0
    %2469 = vmatprep.subr.mxu0 0.0
    %2470 = vmatpush1.xpose.msra.mxu0 0.0
    %2471 = vmatprep.subr.mxu0 0.0
    %2472 = vmatpush1.xpose.msra.mxu0 0.0
    %2473 = vmatprep.subr.mxu0 0.0
    %2474 = vmatpush1.xpose.msra.mxu0 0.0
    %2475 = vmatprep.subr.mxu0 0.0
    %2476 = vmatpush1.xpose.msra.mxu0 0.0
    %2477 = vmatprep.subr.mxu0 0.0
    %2478 = vmatpush1.xpose.msra.mxu0 0.0
    %2479 = vmatprep.subr.mxu0 0.0
    %2480 = vmatpush1.xpose.msra.mxu0 0.0
    %2481 = vmatprep.subr.mxu0 0.0
    %2482 = vmatpush1.xpose.msra.mxu0 0.0
    %2483 = vmatprep.subr.mxu0 0.0
    %2484 = vmatpush1.xpose.msra.mxu0 0.0
    %2485 = vmatprep.subr.mxu0 0.0
    %2486 = vmatpush1.xpose.msra.mxu0 0.0
    %2487 = vmatprep.subr.mxu0 0.0
    %2488 = vmatpush1.xpose.msra.mxu0 0.0
    %2489 = vmatprep.subr.mxu0 0.0
    %2490 = vmatpush1.xpose.msra.mxu0 0.0
    %2491 = vmatprep.subr.mxu0 0.0
    %2492 = vmatpush1.xpose.msra.mxu0 0.0
    %2493 = vmatprep.subr.mxu0 0.0
    %2494 = vmatpush1.xpose.msra.mxu0 0.0
    %2495 = vmatprep.subr.mxu0 0.0
    %2496 = vmatpush1.xpose.msra.mxu0 0.0
    %2497 = vmatprep.subr.mxu0 0.0
    %2498 = vmatpush1.xpose.msra.mxu0 0.0
    %2499 = vmatprep.subr.mxu0 0.0
    %2500 = vmatpush1.xpose.msra.mxu0 0.0
    %2501 = vmatprep.subr.mxu0 0.0
    %2502 = vmatpush1.xpose.msra.mxu0 0.0
    %2503 = vmatprep.subr.mxu0 0.0
    %2504 = vmatpush1.xpose.msra.mxu0 0.0
    %2505 = vmatprep.subr.mxu0 0.0
    %2506 = vmatpush1.xpose.msra.mxu0 0.0
    %2507 = vmatprep.subr.mxu0 0.0
    %2508 = vmatpush1.xpose.msra.mxu0 0.0
    %2509 = vmatprep.subr.mxu0 0.0
    %2510 = vmatpush1.xpose.msra.mxu0 0.0
    %2511 = vmatprep.subr.mxu0 0.0
    %2512 = vmatpush1.xpose.msra.mxu0 0.0
    %2513 = vmatprep.subr.mxu0 0.0
    %2514 = vmatpush1.xpose.msra.mxu0 0.0
    %2515 = vmatprep.subr.mxu0 0.0
    %2516 = vmatpush1.xpose.msra.mxu0 0.0
    %2517 = vmatprep.subr.mxu0 0.0
    %2518 = vmatpush1.xpose.msra.mxu0 0.0
    %2519 = vmatprep.subr.mxu0 0.0
    %2520 = vmatpush1.xpose.msra.mxu0 0.0
    %2521 = vmatprep.subr.mxu0 0.0
    %2522 = vmatpush1.xpose.msra.mxu0 0.0
    %2523 = vmatprep.mubr.f32.mxu0 0.0
    %2524 = vmatmul.mubr.f32.gmra.mrb[0].mxu0 %v2454
    %v2525 = vpop.f32.mrb[0].mxu0
    %v2526 = vadd.f32 0.0, %v2525
    %v2527 = vpop.f32.mrb[0].mxu0
    %2528 = vdwg.mxu0
    %v2530 = vsel %vm302, %v2302, 0
    %v2533 = vsel %vm302, %v2375, 0
    %2535 = vmatprep.subr.mxu0 0.0
    %2536 = vmatpush1.xpose.msra.mxu0 %v2533
    %2537 = vmatprep.subr.mxu0 0.0
    %2538 = vmatpush1.xpose.msra.mxu0 0.0
    %2539 = vmatprep.subr.mxu0 0.0
    %2540 = vmatpush1.xpose.msra.mxu0 0.0
    %2541 = vmatprep.subr.mxu0 0.0
    %2542 = vmatpush1.xpose.msra.mxu0 0.0
    %2543 = vmatprep.subr.mxu0 0.0
    %2544 = vmatpush1.xpose.msra.mxu0 0.0
    %2545 = vmatprep.subr.mxu0 0.0
    %2546 = vmatpush1.xpose.msra.mxu0 0.0
    %2547 = vmatprep.subr.mxu0 0.0
    %2548 = vmatpush1.xpose.msra.mxu0 0.0
    %2549 = vmatprep.subr.mxu0 0.0
    %2550 = vmatpush1.xpose.msra.mxu0 0.0
    %2551 = vmatprep.subr.mxu0 0.0
    %2552 = vmatpush1.xpose.msra.mxu0 0.0
    %2553 = vmatprep.subr.mxu0 0.0
    %2554 = vmatpush1.xpose.msra.mxu0 0.0
    %2555 = vmatprep.subr.mxu0 0.0
    %2556 = vmatpush1.xpose.msra.mxu0 0.0
    %2557 = vmatprep.subr.mxu0 0.0
    %2558 = vmatpush1.xpose.msra.mxu0 0.0
    %2559 = vmatprep.subr.mxu0 0.0
    %2560 = vmatpush1.xpose.msra.mxu0 0.0
    %2561 = vmatprep.subr.mxu0 0.0
    %2562 = vmatpush1.xpose.msra.mxu0 0.0
    %2563 = vmatprep.subr.mxu0 0.0
    %2564 = vmatpush1.xpose.msra.mxu0 0.0
    %2565 = vmatprep.subr.mxu0 0.0
    %2566 = vmatpush1.xpose.msra.mxu0 0.0
    %2567 = vmatprep.subr.mxu0 0.0
    %2568 = vmatpush1.xpose.msra.mxu0 0.0
    %2569 = vmatprep.subr.mxu0 0.0
    %2570 = vmatpush1.xpose.msra.mxu0 0.0
    %2571 = vmatprep.subr.mxu0 0.0
    %2572 = vmatpush1.xpose.msra.mxu0 0.0
    %2573 = vmatprep.subr.mxu0 0.0
    %2574 = vmatpush1.xpose.msra.mxu0 0.0
    %2575 = vmatprep.subr.mxu0 0.0
    %2576 = vmatpush1.xpose.msra.mxu0 0.0
    %2577 = vmatprep.subr.mxu0 0.0
    %2578 = vmatpush1.xpose.msra.mxu0 0.0
    %2579 = vmatprep.subr.mxu0 0.0
    %2580 = vmatpush1.xpose.msra.mxu0 0.0
    %2581 = vmatprep.subr.mxu0 0.0
    %2582 = vmatpush1.xpose.msra.mxu0 0.0
    %2583 = vmatprep.subr.mxu0 0.0
    %2584 = vmatpush1.xpose.msra.mxu0 0.0
    %2585 = vmatprep.subr.mxu0 0.0
    %2586 = vmatpush1.xpose.msra.mxu0 0.0
    %2587 = vmatprep.subr.mxu0 0.0
    %2588 = vmatpush1.xpose.msra.mxu0 0.0
    %2589 = vmatprep.subr.mxu0 0.0
    %2590 = vmatpush1.xpose.msra.mxu0 0.0
    %2591 = vmatprep.subr.mxu0 0.0
    %2592 = vmatpush1.xpose.msra.mxu0 0.0
    %2593 = vmatprep.subr.mxu0 0.0
    %2594 = vmatpush1.xpose.msra.mxu0 0.0
    %2595 = vmatprep.subr.mxu0 0.0
    %2596 = vmatpush1.xpose.msra.mxu0 0.0
    %2597 = vmatprep.subr.mxu0 0.0
    %2598 = vmatpush1.xpose.msra.mxu0 0.0
    %2599 = vmatprep.mubr.f32.mxu0 0.0
    %2600 = vmatmul.mubr.f32.gmra.mrb[0].mxu0 %v2530
    %v2601 = vpop.f32.mrb[0].mxu0
    %v2602 = vadd.f32 0.0, %v2601
    %v2603 = vpop.f32.mrb[0].mxu0
    %2604 = vdwg.mxu0
    %v2605 = vsel %vm302, %v2526, -inf
    %2606 = vmax.xlane.f32.xlu0 %v2605
    %v2607 = vpop.xlane.xlu0 %2606
    %v2608 = vsel %vm302, %v2602, -inf
    %2609 = vmax.xlane.f32.xlu0 %v2608
    %v2610 = vpop.xlane.xlu0 %2609
    %v2611 = vsub.f32 %v2526, %v2607
    %v2612 = vsub.f32 %v2602, %v2610
    %v2613 = vmul.f32 %v2611, 1.442695
    %v2614 = vpow.pop %v2613
    %v2615 = vmul.f32 %v2612, 1.442695
    %v2616 = vpow.pop %v2615
    %v2617 = vsel %vm302, %v2614, 0.0
    %2618 = vadd.xlane.f32.xlu0 %v2617
    %v2619 = vpop.xlane.xlu0 %2618
    %v2620 = vsel %vm302, %v2616, 0.0
    %2621 = vadd.xlane.f32.xlu0 %v2620
    %v2622 = vpop.xlane.xlu0 %2621
    %v2623 = vrcp.pop %v2619
    %v2624 = vrcp.pop %v2622
    %v2625 = vmul.f32 %v2614, %v2623
    %v2626 = vmul.f32 %v2616, %v2624
    %v2628 = vsel %vm302, %v2625, 0
    %2630 = vmatprep.subr.mxu0 0.0
    %2631 = vmatpush1.msra.mxu0 %v2445
    %2632 = vmatprep.subr.mxu0 0.0
    %2633 = vmatpush1.msra.mxu0 0.0
    %2634 = vmatprep.subr.mxu0 0.0
    %2635 = vmatpush1.msra.mxu0 0.0
    %2636 = vmatprep.subr.mxu0 0.0
    %2637 = vmatpush1.msra.mxu0 0.0
    %2638 = vmatprep.subr.mxu0 0.0
    %2639 = vmatpush1.msra.mxu0 0.0
    %2640 = vmatprep.subr.mxu0 0.0
    %2641 = vmatpush1.msra.mxu0 0.0
    %2642 = vmatprep.subr.mxu0 0.0
    %2643 = vmatpush1.msra.mxu0 0.0
    %2644 = vmatprep.subr.mxu0 0.0
    %2645 = vmatpush1.msra.mxu0 0.0
    %2646 = vmatprep.subr.mxu0 0.0
    %2647 = vmatpush1.msra.mxu0 0.0
    %2648 = vmatprep.subr.mxu0 0.0
    %2649 = vmatpush1.msra.mxu0 0.0
    %2650 = vmatprep.subr.mxu0 0.0
    %2651 = vmatpush1.msra.mxu0 0.0
    %2652 = vmatprep.subr.mxu0 0.0
    %2653 = vmatpush1.msra.mxu0 0.0
    %2654 = vmatprep.subr.mxu0 0.0
    %2655 = vmatpush1.msra.mxu0 0.0
    %2656 = vmatprep.subr.mxu0 0.0
    %2657 = vmatpush1.msra.mxu0 0.0
    %2658 = vmatprep.subr.mxu0 0.0
    %2659 = vmatpush1.msra.mxu0 0.0
    %2660 = vmatprep.subr.mxu0 0.0
    %2661 = vmatpush1.msra.mxu0 0.0
    %2662 = vmatprep.subr.mxu0 0.0
    %2663 = vmatpush1.msra.mxu0 0.0
    %2664 = vmatprep.subr.mxu0 0.0
    %2665 = vmatpush1.msra.mxu0 0.0
    %2666 = vmatprep.subr.mxu0 0.0
    %2667 = vmatpush1.msra.mxu0 0.0
    %2668 = vmatprep.subr.mxu0 0.0
    %2669 = vmatpush1.msra.mxu0 0.0
    %2670 = vmatprep.subr.mxu0 0.0
    %2671 = vmatpush1.msra.mxu0 0.0
    %2672 = vmatprep.subr.mxu0 0.0
    %2673 = vmatpush1.msra.mxu0 0.0
    %2674 = vmatprep.subr.mxu0 0.0
    %2675 = vmatpush1.msra.mxu0 0.0
    %2676 = vmatprep.subr.mxu0 0.0
    %2677 = vmatpush1.msra.mxu0 0.0
    %2678 = vmatprep.subr.mxu0 0.0
    %2679 = vmatpush1.msra.mxu0 0.0
    %2680 = vmatprep.subr.mxu0 0.0
    %2681 = vmatpush1.msra.mxu0 0.0
    %2682 = vmatprep.subr.mxu0 0.0
    %2683 = vmatpush1.msra.mxu0 0.0
    %2684 = vmatprep.subr.mxu0 0.0
    %2685 = vmatpush1.msra.mxu0 0.0
    %2686 = vmatprep.subr.mxu0 0.0
    %2687 = vmatpush1.msra.mxu0 0.0
    %2688 = vmatprep.subr.mxu0 0.0
    %2689 = vmatpush1.msra.mxu0 0.0
    %2690 = vmatprep.subr.mxu0 0.0
    %2691 = vmatpush1.msra.mxu0 0.0
    %2692 = vmatprep.subr.mxu0 0.0
    %2693 = vmatpush1.msra.mxu0 0.0
    %2694 = vmatprep.mubr.f32.mxu0 0.0
    %2695 = vmatmul.mubr.f32.gmra.mrb[0].mxu0 %v2628
    %v2696 = vpop.f32.mrb[0].mxu0
    %v2697 = vadd.f32 0.0, %v2696
    %v2698 = vpop.f32.mrb[0].mxu0
    %2699 = vdwg.mxu0
    %v2701 = vsel %vm302, %v2626, 0
    %2703 = vmatprep.subr.mxu0 0.0
    %2704 = vmatpush1.msra.mxu0 %v2450
    %2705 = vmatprep.subr.mxu0 0.0
    %2706 = vmatpush1.msra.mxu0 0.0
    %2707 = vmatprep.subr.mxu0 0.0
    %2708 = vmatpush1.msra.mxu0 0.0
    %2709 = vmatprep.subr.mxu0 0.0
    %2710 = vmatpush1.msra.mxu0 0.0
    %2711 = vmatprep.subr.mxu0 0.0
    %2712 = vmatpush1.msra.mxu0 0.0
    %2713 = vmatprep.subr.mxu0 0.0
    %2714 = vmatpush1.msra.mxu0 0.0
    %2715 = vmatprep.subr.mxu0 0.0
    %2716 = vmatpush1.msra.mxu0 0.0
    %2717 = vmatprep.subr.mxu0 0.0
    %2718 = vmatpush1.msra.mxu0 0.0
    %2719 = vmatprep.subr.mxu0 0.0
    %2720 = vmatpush1.msra.mxu0 0.0
    %2721 = vmatprep.subr.mxu0 0.0
    %2722 = vmatpush1.msra.mxu0 0.0
    %2723 = vmatprep.subr.mxu0 0.0
    %2724 = vmatpush1.msra.mxu0 0.0
    %2725 = vmatprep.subr.mxu0 0.0
    %2726 = vmatpush1.msra.mxu0 0.0
    %2727 = vmatprep.subr.mxu0 0.0
    %2728 = vmatpush1.msra.mxu0 0.0
    %2729 = vmatprep.subr.mxu0 0.0
    %2730 = vmatpush1.msra.mxu0 0.0
    %2731 = vmatprep.subr.mxu0 0.0
    %2732 = vmatpush1.msra.mxu0 0.0
    %2733 = vmatprep.subr.mxu0 0.0
    %2734 = vmatpush1.msra.mxu0 0.0
    %2735 = vmatprep.subr.mxu0 0.0
    %2736 = vmatpush1.msra.mxu0 0.0
    %2737 = vmatprep.subr.mxu0 0.0
    %2738 = vmatpush1.msra.mxu0 0.0
    %2739 = vmatprep.subr.mxu0 0.0
    %2740 = vmatpush1.msra.mxu0 0.0
    %2741 = vmatprep.subr.mxu0 0.0
    %2742 = vmatpush1.msra.mxu0 0.0
    %2743 = vmatprep.subr.mxu0 0.0
    %2744 = vmatpush1.msra.mxu0 0.0
    %2745 = vmatprep.subr.mxu0 0.0
    %2746 = vmatpush1.msra.mxu0 0.0
    %2747 = vmatprep.subr.mxu0 0.0
    %2748 = vmatpush1.msra.mxu0 0.0
    %2749 = vmatprep.subr.mxu0 0.0
    %2750 = vmatpush1.msra.mxu0 0.0
    %2751 = vmatprep.subr.mxu0 0.0
    %2752 = vmatpush1.msra.mxu0 0.0
    %2753 = vmatprep.subr.mxu0 0.0
    %2754 = vmatpush1.msra.mxu0 0.0
    %2755 = vmatprep.subr.mxu0 0.0
    %2756 = vmatpush1.msra.mxu0 0.0
    %2757 = vmatprep.subr.mxu0 0.0
    %2758 = vmatpush1.msra.mxu0 0.0
    %2759 = vmatprep.subr.mxu0 0.0
    %2760 = vmatpush1.msra.mxu0 0.0
    %2761 = vmatprep.subr.mxu0 0.0
    %2762 = vmatpush1.msra.mxu0 0.0
    %2763 = vmatprep.subr.mxu0 0.0
    %2764 = vmatpush1.msra.mxu0 0.0
    %2765 = vmatprep.subr.mxu0 0.0
    %2766 = vmatpush1.msra.mxu0 0.0
    %2767 = vmatprep.mubr.f32.mxu0 0.0
    %2768 = vmatmul.mubr.f32.gmra.mrb[0].mxu0 %v2701
    %v2769 = vpop.f32.mrb[0].mxu0
    %v2770 = vadd.f32 0.0, %v2769
    %v2771 = vpop.f32.mrb[0].mxu0
    %2772 = vdwg.mxu0
    %2773 = vrot.lane.b32.xlu0 %v2301, 120
    %v2774 = vpop.permute.xlu0 %2773
    %2775 = vrot.lane.b32.xlu0 %v2370, 120
    %v2776 = vpop.permute.xlu0 %2775
    %v2777 = vsel %vm302, %v2774, 0
    %v2779 = vsel %vm302, %v2776, 0
    %2781 = vmatprep.subr.mxu0 0.0
    %2782 = vmatpush1.xpose.msra.mxu0 %v2779
    %2783 = vmatprep.subr.mxu0 0.0
    %2784 = vmatpush1.xpose.msra.mxu0 0.0
    %2785 = vmatprep.subr.mxu0 0.0
    %2786 = vmatpush1.xpose.msra.mxu0 0.0
    %2787 = vmatprep.subr.mxu0 0.0
    %2788 = vmatpush1.xpose.msra.mxu0 0.0
    %2789 = vmatprep.subr.mxu0 0.0
    %2790 = vmatpush1.xpose.msra.mxu0 0.0
    %2791 = vmatprep.subr.mxu0 0.0
    %2792 = vmatpush1.xpose.msra.mxu0 0.0
    %2793 = vmatprep.subr.mxu0 0.0
    %2794 = vmatpush1.xpose.msra.mxu0 0.0
    %2795 = vmatprep.subr.mxu0 0.0
    %2796 = vmatpush1.xpose.msra.mxu0 0.0
    %2797 = vmatprep.subr.mxu0 0.0
    %2798 = vmatpush1.xpose.msra.mxu0 0.0
    %2799 = vmatprep.subr.mxu0 0.0
    %2800 = vmatpush1.xpose.msra.mxu0 0.0
    %2801 = vmatprep.subr.mxu0 0.0
    %2802 = vmatpush1.xpose.msra.mxu0 0.0
    %2803 = vmatprep.subr.mxu0 0.0
    %2804 = vmatpush1.xpose.msra.mxu0 0.0
    %2805 = vmatprep.subr.mxu0 0.0
    %2806 = vmatpush1.xpose.msra.mxu0 0.0
    %2807 = vmatprep.subr.mxu0 0.0
    %2808 = vmatpush1.xpose.msra.mxu0 0.0
    %2809 = vmatprep.subr.mxu0 0.0
    %2810 = vmatpush1.xpose.msra.mxu0 0.0
    %2811 = vmatprep.subr.mxu0 0.0
    %2812 = vmatpush1.xpose.msra.mxu0 0.0
    %2813 = vmatprep.subr.mxu0 0.0
    %2814 = vmatpush1.xpose.msra.mxu0 0.0
    %2815 = vmatprep.subr.mxu0 0.0
    %2816 = vmatpush1.xpose.msra.mxu0 0.0
    %2817 = vmatprep.subr.mxu0 0.0
    %2818 = vmatpush1.xpose.msra.mxu0 0.0
    %2819 = vmatprep.subr.mxu0 0.0
    %2820 = vmatpush1.xpose.msra.mxu0 0.0
    %2821 = vmatprep.subr.mxu0 0.0
    %2822 = vmatpush1.xpose.msra.mxu0 0.0
    %2823 = vmatprep.subr.mxu0 0.0
    %2824 = vmatpush1.xpose.msra.mxu0 0.0
    %2825 = vmatprep.subr.mxu0 0.0
    %2826 = vmatpush1.xpose.msra.mxu0 0.0
    %2827 = vmatprep.subr.mxu0 0.0
    %2828 = vmatpush1.xpose.msra.mxu0 0.0
    %2829 = vmatprep.subr.mxu0 0.0
    %2830 = vmatpush1.xpose.msra.mxu0 0.0
    %2831 = vmatprep.subr.mxu0 0.0
    %2832 = vmatpush1.xpose.msra.mxu0 0.0
    %2833 = vmatprep.subr.mxu0 0.0
    %2834 = vmatpush1.xpose.msra.mxu0 0.0
    %2835 = vmatprep.subr.mxu0 0.0
    %2836 = vmatpush1.xpose.msra.mxu0 0.0
    %2837 = vmatprep.subr.mxu0 0.0
    %2838 = vmatpush1.xpose.msra.mxu0 0.0
    %2839 = vmatprep.subr.mxu0 0.0
    %2840 = vmatpush1.xpose.msra.mxu0 0.0
    %2841 = vmatprep.subr.mxu0 0.0
    %2842 = vmatpush1.xpose.msra.mxu0 0.0
    %2843 = vmatprep.subr.mxu0 0.0
    %2844 = vmatpush1.xpose.msra.mxu0 0.0
    %2845 = vmatprep.mubr.f32.mxu0 0.0
    %2846 = vmatmul.mubr.f32.gmra.mrb[0].mxu0 %v2777
    %v2847 = vpop.f32.mrb[0].mxu0
    %v2848 = vadd.f32 0.0, %v2847
    %v2849 = vpop.f32.mrb[0].mxu0
    %2850 = vdwg.mxu0
    %2851 = vrot.lane.b32.xlu0 %v2302, 120
    %v2852 = vpop.permute.xlu0 %2851
    %2853 = vrot.lane.b32.xlu0 %v2375, 120
    %v2854 = vpop.permute.xlu0 %2853
    %v2855 = vsel %vm302, %v2852, 0
    %v2857 = vsel %vm302, %v2854, 0
    %2859 = vmatprep.subr.mxu0 0.0
    %2860 = vmatpush1.xpose.msra.mxu0 %v2857
    %2861 = vmatprep.subr.mxu0 0.0
    %2862 = vmatpush1.xpose.msra.mxu0 0.0
    %2863 = vmatprep.subr.mxu0 0.0
    %2864 = vmatpush1.xpose.msra.mxu0 0.0
    %2865 = vmatprep.subr.mxu0 0.0
    %2866 = vmatpush1.xpose.msra.mxu0 0.0
    %2867 = vmatprep.subr.mxu0 0.0
    %2868 = vmatpush1.xpose.msra.mxu0 0.0
    %2869 = vmatprep.subr.mxu0 0.0
    %2870 = vmatpush1.xpose.msra.mxu0 0.0
    %2871 = vmatprep.subr.mxu0 0.0
    %2872 = vmatpush1.xpose.msra.mxu0 0.0
    %2873 = vmatprep.subr.mxu0 0.0
    %2874 = vmatpush1.xpose.msra.mxu0 0.0
    %2875 = vmatprep.subr.mxu0 0.0
    %2876 = vmatpush1.xpose.msra.mxu0 0.0
    %2877 = vmatprep.subr.mxu0 0.0
    %2878 = vmatpush1.xpose.msra.mxu0 0.0
    %2879 = vmatprep.subr.mxu0 0.0
    %2880 = vmatpush1.xpose.msra.mxu0 0.0
    %2881 = vmatprep.subr.mxu0 0.0
    %2882 = vmatpush1.xpose.msra.mxu0 0.0
    %2883 = vmatprep.subr.mxu0 0.0
    %2884 = vmatpush1.xpose.msra.mxu0 0.0
    %2885 = vmatprep.subr.mxu0 0.0
    %2886 = vmatpush1.xpose.msra.mxu0 0.0
    %2887 = vmatprep.subr.mxu0 0.0
    %2888 = vmatpush1.xpose.msra.mxu0 0.0
    %2889 = vmatprep.subr.mxu0 0.0
    %2890 = vmatpush1.xpose.msra.mxu0 0.0
    %2891 = vmatprep.subr.mxu0 0.0
    %2892 = vmatpush1.xpose.msra.mxu0 0.0
    %2893 = vmatprep.subr.mxu0 0.0
    %2894 = vmatpush1.xpose.msra.mxu0 0.0
    %2895 = vmatprep.subr.mxu0 0.0
    %2896 = vmatpush1.xpose.msra.mxu0 0.0
    %2897 = vmatprep.subr.mxu0 0.0
    %2898 = vmatpush1.xpose.msra.mxu0 0.0
    %2899 = vmatprep.subr.mxu0 0.0
    %2900 = vmatpush1.xpose.msra.mxu0 0.0
    %2901 = vmatprep.subr.mxu0 0.0
    %2902 = vmatpush1.xpose.msra.mxu0 0.0
    %2903 = vmatprep.subr.mxu0 0.0
    %2904 = vmatpush1.xpose.msra.mxu0 0.0
    %2905 = vmatprep.subr.mxu0 0.0
    %2906 = vmatpush1.xpose.msra.mxu0 0.0
    %2907 = vmatprep.subr.mxu0 0.0
    %2908 = vmatpush1.xpose.msra.mxu0 0.0
    %2909 = vmatprep.subr.mxu0 0.0
    %2910 = vmatpush1.xpose.msra.mxu0 0.0
    %2911 = vmatprep.subr.mxu0 0.0
    %2912 = vmatpush1.xpose.msra.mxu0 0.0
    %2913 = vmatprep.subr.mxu0 0.0
    %2914 = vmatpush1.xpose.msra.mxu0 0.0
    %2915 = vmatprep.subr.mxu0 0.0
    %2916 = vmatpush1.xpose.msra.mxu0 0.0
    %2917 = vmatprep.subr.mxu0 0.0
    %2918 = vmatpush1.xpose.msra.mxu0 0.0
    %2919 = vmatprep.subr.mxu0 0.0
    %2920 = vmatpush1.xpose.msra.mxu0 0.0
    %2921 = vmatprep.subr.mxu0 0.0
    %2922 = vmatpush1.xpose.msra.mxu0 0.0
    %2923 = vmatprep.mubr.f32.mxu0 0.0
    %2924 = vmatmul.mubr.f32.gmra.mrb[0].mxu0 %v2855
    %v2925 = vpop.f32.mrb[0].mxu0
    %v2926 = vadd.f32 0.0, %v2925
    %v2927 = vpop.f32.mrb[0].mxu0
    %2928 = vdwg.mxu0
    %v2929 = vsel %vm302, %v2848, -inf
    %2930 = vmax.xlane.f32.xlu0 %v2929
    %v2931 = vpop.xlane.xlu0 %2930
    %v2932 = vsel %vm302, %v2926, -inf
    %2933 = vmax.xlane.f32.xlu0 %v2932
    %v2934 = vpop.xlane.xlu0 %2933
    %v2935 = vsub.f32 %v2848, %v2931
    %v2936 = vsub.f32 %v2926, %v2934
    %v2937 = vmul.f32 %v2935, 1.442695
    %v2938 = vpow.pop %v2937
    %v2939 = vmul.f32 %v2936, 1.442695
    %v2940 = vpow.pop %v2939
    %v2941 = vsel %vm302, %v2938, 0.0
    %2942 = vadd.xlane.f32.xlu0 %v2941
    %v2943 = vpop.xlane.xlu0 %2942
    %v2944 = vsel %vm302, %v2940, 0.0
    %2945 = vadd.xlane.f32.xlu0 %v2944
    %v2946 = vpop.xlane.xlu0 %2945
    %v2947 = vrcp.pop %v2943
    %v2948 = vrcp.pop %v2946
    %v2949 = vmul.f32 %v2938, %v2947
    %v2950 = vmul.f32 %v2940, %v2948
    %2952 = vrot.lane.b32.xlu0 %v2445, 120
    %v2953 = vpop.permute.xlu0 %2952
    %v2956 = vsel %vm302, %v2949, 0
    %2958 = vmatprep.subr.mxu0 0.0
    %2959 = vmatpush1.msra.mxu0 %v2953
    %2960 = vmatprep.subr.mxu0 0.0
    %2961 = vmatpush1.msra.mxu0 0.0
    %2962 = vmatprep.subr.mxu0 0.0
    %2963 = vmatpush1.msra.mxu0 0.0
    %2964 = vmatprep.subr.mxu0 0.0
    %2965 = vmatpush1.msra.mxu0 0.0
    %2966 = vmatprep.subr.mxu0 0.0
    %2967 = vmatpush1.msra.mxu0 0.0
    %2968 = vmatprep.subr.mxu0 0.0
    %2969 = vmatpush1.msra.mxu0 0.0
    %2970 = vmatprep.subr.mxu0 0.0
    %2971 = vmatpush1.msra.mxu0 0.0
    %2972 = vmatprep.subr.mxu0 0.0
    %2973 = vmatpush1.msra.mxu0 0.0
    %2974 = vmatprep.subr.mxu0 0.0
    %2975 = vmatpush1.msra.mxu0 0.0
    %2976 = vmatprep.subr.mxu0 0.0
    %2977 = vmatpush1.msra.mxu0 0.0
    %2978 = vmatprep.subr.mxu0 0.0
    %2979 = vmatpush1.msra.mxu0 0.0
    %2980 = vmatprep.subr.mxu0 0.0
    %2981 = vmatpush1.msra.mxu0 0.0
    %2982 = vmatprep.subr.mxu0 0.0
    %2983 = vmatpush1.msra.mxu0 0.0
    %2984 = vmatprep.subr.mxu0 0.0
    %2985 = vmatpush1.msra.mxu0 0.0
    %2986 = vmatprep.subr.mxu0 0.0
    %2987 = vmatpush1.msra.mxu0 0.0
    %2988 = vmatprep.subr.mxu0 0.0
    %2989 = vmatpush1.msra.mxu0 0.0
    %2990 = vmatprep.subr.mxu0 0.0
    %2991 = vmatpush1.msra.mxu0 0.0
    %2992 = vmatprep.subr.mxu0 0.0
    %2993 = vmatpush1.msra.mxu0 0.0
    %2994 = vmatprep.subr.mxu0 0.0
    %2995 = vmatpush1.msra.mxu0 0.0
    %2996 = vmatprep.subr.mxu0 0.0
    %2997 = vmatpush1.msra.mxu0 0.0
    %2998 = vmatprep.subr.mxu0 0.0
    %2999 = vmatpush1.msra.mxu0 0.0
    %3000 = vmatprep.subr.mxu0 0.0
    %3001 = vmatpush1.msra.mxu0 0.0
    %3002 = vmatprep.subr.mxu0 0.0
    %3003 = vmatpush1.msra.mxu0 0.0
    %3004 = vmatprep.subr.mxu0 0.0
    %3005 = vmatpush1.msra.mxu0 0.0
    %3006 = vmatprep.subr.mxu0 0.0
    %3007 = vmatpush1.msra.mxu0 0.0
    %3008 = vmatprep.subr.mxu0 0.0
    %3009 = vmatpush1.msra.mxu0 0.0
    %3010 = vmatprep.subr.mxu0 0.0
    %3011 = vmatpush1.msra.mxu0 0.0
    %3012 = vmatprep.subr.mxu0 0.0
    %3013 = vmatpush1.msra.mxu0 0.0
    %3014 = vmatprep.subr.mxu0 0.0
    %3015 = vmatpush1.msra.mxu0 0.0
    %3016 = vmatprep.subr.mxu0 0.0
    %3017 = vmatpush1.msra.mxu0 0.0
    %3018 = vmatprep.subr.mxu0 0.0
    %3019 = vmatpush1.msra.mxu0 0.0
    %3020 = vmatprep.subr.mxu0 0.0
    %3021 = vmatpush1.msra.mxu0 0.0
    %3022 = vmatprep.mubr.f32.mxu0 0.0
    %3023 = vmatmul.mubr.f32.gmra.mrb[0].mxu0 %v2956
    %v3024 = vpop.f32.mrb[0].mxu0
    %v3025 = vadd.f32 0.0, %v3024
    %v3026 = vpop.f32.mrb[0].mxu0
    %3027 = vdwg.mxu0
    %3029 = vrot.lane.b32.xlu0 %v2450, 120
    %v3030 = vpop.permute.xlu0 %3029
    %v3033 = vsel %vm302, %v2950, 0
    %3035 = vmatprep.subr.mxu0 0.0
    %3036 = vmatpush1.msra.mxu0 %v3030
    %3037 = vmatprep.subr.mxu0 0.0
    %3038 = vmatpush1.msra.mxu0 0.0
    %3039 = vmatprep.subr.mxu0 0.0
    %3040 = vmatpush1.msra.mxu0 0.0
    %3041 = vmatprep.subr.mxu0 0.0
    %3042 = vmatpush1.msra.mxu0 0.0
    %3043 = vmatprep.subr.mxu0 0.0
    %3044 = vmatpush1.msra.mxu0 0.0
    %3045 = vmatprep.subr.mxu0 0.0
    %3046 = vmatpush1.msra.mxu0 0.0
    %3047 = vmatprep.subr.mxu0 0.0
    %3048 = vmatpush1.msra.mxu0 0.0
    %3049 = vmatprep.subr.mxu0 0.0
    %3050 = vmatpush1.msra.mxu0 0.0
    %3051 = vmatprep.subr.mxu0 0.0
    %3052 = vmatpush1.msra.mxu0 0.0
    %3053 = vmatprep.subr.mxu0 0.0
    %3054 = vmatpush1.msra.mxu0 0.0
    %3055 = vmatprep.subr.mxu0 0.0
    %3056 = vmatpush1.msra.mxu0 0.0
    %3057 = vmatprep.subr.mxu0 0.0
    %3058 = vmatpush1.msra.mxu0 0.0
    %3059 = vmatprep.subr.mxu0 0.0
    %3060 = vmatpush1.msra.mxu0 0.0
    %3061 = vmatprep.subr.mxu0 0.0
    %3062 = vmatpush1.msra.mxu0 0.0
    %3063 = vmatprep.subr.mxu0 0.0
    %3064 = vmatpush1.msra.mxu0 0.0
    %3065 = vmatprep.subr.mxu0 0.0
    %3066 = vmatpush1.msra.mxu0 0.0
    %3067 = vmatprep.subr.mxu0 0.0
    %3068 = vmatpush1.msra.mxu0 0.0
    %3069 = vmatprep.subr.mxu0 0.0
    %3070 = vmatpush1.msra.mxu0 0.0
    %3071 = vmatprep.subr.mxu0 0.0
    %3072 = vmatpush1.msra.mxu0 0.0
    %3073 = vmatprep.subr.mxu0 0.0
    %3074 = vmatpush1.msra.mxu0 0.0
    %3075 = vmatprep.subr.mxu0 0.0
    %3076 = vmatpush1.msra.mxu0 0.0
    %3077 = vmatprep.subr.mxu0 0.0
    %3078 = vmatpush1.msra.mxu0 0.0
    %3079 = vmatprep.subr.mxu0 0.0
    %3080 = vmatpush1.msra.mxu0 0.0
    %3081 = vmatprep.subr.mxu0 0.0
    %3082 = vmatpush1.msra.mxu0 0.0
    %3083 = vmatprep.subr.mxu0 0.0
    %3084 = vmatpush1.msra.mxu0 0.0
    %3085 = vmatprep.subr.mxu0 0.0
    %3086 = vmatpush1.msra.mxu0 0.0
    %3087 = vmatprep.subr.mxu0 0.0
    %3088 = vmatpush1.msra.mxu0 0.0
    %3089 = vmatprep.subr.mxu0 0.0
    %3090 = vmatpush1.msra.mxu0 0.0
    %3091 = vmatprep.subr.mxu0 0.0
    %3092 = vmatpush1.msra.mxu0 0.0
    %3093 = vmatprep.subr.mxu0 0.0
    %3094 = vmatpush1.msra.mxu0 0.0
    %3095 = vmatprep.subr.mxu0 0.0
    %3096 = vmatpush1.msra.mxu0 0.0
    %3097 = vmatprep.subr.mxu0 0.0
    %3098 = vmatpush1.msra.mxu0 0.0
    %3099 = vmatprep.mubr.f32.mxu0 0.0
    %3100 = vmatmul.mubr.f32.gmra.mrb[0].mxu0 %v3033
    %v3101 = vpop.f32.mrb[0].mxu0
    %v3102 = vadd.f32 0.0, %v3101
    %v3103 = vpop.f32.mrb[0].mxu0
    %3104 = vdwg.mxu0
    %v3106 = vsel %vm302, %v3025, 0
    %v3109 = vsel %vm302, %v3102, 0
    %3111 = vmatprep.subr.mxu0 0.0
    %3112 = vmatpush1.msra.mxu0 %v49
    %3113 = vmatprep.subr.mxu0 0.0
    %3114 = vmatpush1.msra.mxu0 0.0
    %3115 = vmatprep.subr.mxu0 0.0
    %3116 = vmatpush1.msra.mxu0 0.0
    %3117 = vmatprep.subr.mxu0 0.0
    %3118 = vmatpush1.msra.mxu0 0.0
    %3119 = vmatprep.subr.mxu0 0.0
    %3120 = vmatpush1.msra.mxu0 0.0
    %3121 = vmatprep.subr.mxu0 0.0
    %3122 = vmatpush1.msra.mxu0 0.0
    %3123 = vmatprep.subr.mxu0 0.0
    %3124 = vmatpush1.msra.mxu0 0.0
    %3125 = vmatprep.subr.mxu0 0.0
    %3126 = vmatpush1.msra.mxu0 0.0
    %3127 = vmatprep.subr.mxu0 0.0
    %3128 = vmatpush1.msra.mxu0 0.0
    %3129 = vmatprep.subr.mxu0 0.0
    %3130 = vmatpush1.msra.mxu0 0.0
    %3131 = vmatprep.subr.mxu0 0.0
    %3132 = vmatpush1.msra.mxu0 0.0
    %3133 = vmatprep.subr.mxu0 0.0
    %3134 = vmatpush1.msra.mxu0 0.0
    %3135 = vmatprep.subr.mxu0 0.0
    %3136 = vmatpush1.msra.mxu0 0.0
    %3137 = vmatprep.subr.mxu0 0.0
    %3138 = vmatpush1.msra.mxu0 0.0
    %3139 = vmatprep.subr.mxu0 0.0
    %3140 = vmatpush1.msra.mxu0 0.0
    %3141 = vmatprep.subr.mxu0 0.0
    %3142 = vmatpush1.msra.mxu0 0.0
    %3143 = vmatprep.subr.mxu0 0.0
    %3144 = vmatpush1.msra.mxu0 0.0
    %3145 = vmatprep.subr.mxu0 0.0
    %3146 = vmatpush1.msra.mxu0 0.0
    %3147 = vmatprep.subr.mxu0 0.0
    %3148 = vmatpush1.msra.mxu0 0.0
    %3149 = vmatprep.subr.mxu0 0.0
    %3150 = vmatpush1.msra.mxu0 0.0
    %3151 = vmatprep.subr.mxu0 0.0
    %3152 = vmatpush1.msra.mxu0 0.0
    %3153 = vmatprep.subr.mxu0 0.0
    %3154 = vmatpush1.msra.mxu0 0.0
    %3155 = vmatprep.subr.mxu0 0.0
    %3156 = vmatpush1.msra.mxu0 0.0
    %3157 = vmatprep.subr.mxu0 0.0
    %3158 = vmatpush1.msra.mxu0 0.0
    %3159 = vmatprep.subr.mxu0 0.0
    %3160 = vmatpush1.msra.mxu0 0.0
    %3161 = vmatprep.subr.mxu0 0.0
    %3162 = vmatpush1.msra.mxu0 0.0
    %3163 = vmatprep.subr.mxu0 0.0
    %3164 = vmatpush1.msra.mxu0 0.0
    %3165 = vmatprep.subr.mxu0 0.0
    %3166 = vmatpush1.msra.mxu0 0.0
    %3167 = vmatprep.subr.mxu0 0.0
    %3168 = vmatpush1.msra.mxu0 0.0
    %3169 = vmatprep.subr.mxu0 0.0
    %3170 = vmatpush1.msra.mxu0 0.0
    %3171 = vmatprep.subr.mxu0 0.0
    %3172 = vmatpush1.msra.mxu0 0.0
    %3173 = vmatprep.subr.mxu0 0.0
    %3174 = vmatpush1.msra.mxu0 0.0
    %3175 = vmatprep.mubr.f32.mxu0 0.0
    %3176 = vmatmul.mubr.f32.gmra.mrb[0].mxu0 %v3106
    %v3177 = vpop.f32.mrb[0].mxu0
    %v3178 = vadd.f32 0.0, %v3177
    %v3179 = vpop.f32.mrb[0].mxu0
    %3180 = vmatprep.mubr.f32.mxu0 0.0
    %3181 = vmatmul.mubr.f32.gmra.mrb[0].mxu0 %v3109
    %v3182 = vpop.f32.mrb[0].mxu0
    %v3183 = vadd.f32 0.0, %v3182
    %v3184 = vpop.f32.mrb[0].mxu0
    %3185 = vdwg.mxu0
    %v3187 = vsel %vm302, %v2697, 0
    %v3190 = vsel %vm302, %v2770, 0
    %3192 = vmatprep.subr.mxu0 0.0
    %3193 = vmatpush1.msra.mxu0 %v48
    %3194 = vmatprep.subr.mxu0 0.0
    %3195 = vmatpush1.msra.mxu0 0.0
    %3196 = vmatprep.subr.mxu0 0.0
    %3197 = vmatpush1.msra.mxu0 0.0
    %3198 = vmatprep.subr.mxu0 0.0
    %3199 = vmatpush1.msra.mxu0 0.0
    %3200 = vmatprep.subr.mxu0 0.0
    %3201 = vmatpush1.msra.mxu0 0.0
    %3202 = vmatprep.subr.mxu0 0.0
    %3203 = vmatpush1.msra.mxu0 0.0
    %3204 = vmatprep.subr.mxu0 0.0
    %3205 = vmatpush1.msra.mxu0 0.0
    %3206 = vmatprep.subr.mxu0 0.0
    %3207 = vmatpush1.msra.mxu0 0.0
    %3208 = vmatprep.subr.mxu0 0.0
    %3209 = vmatpush1.msra.mxu0 0.0
    %3210 = vmatprep.subr.mxu0 0.0
    %3211 = vmatpush1.msra.mxu0 0.0
    %3212 = vmatprep.subr.mxu0 0.0
    %3213 = vmatpush1.msra.mxu0 0.0
    %3214 = vmatprep.subr.mxu0 0.0
    %3215 = vmatpush1.msra.mxu0 0.0
    %3216 = vmatprep.subr.mxu0 0.0
    %3217 = vmatpush1.msra.mxu0 0.0
    %3218 = vmatprep.subr.mxu0 0.0
    %3219 = vmatpush1.msra.mxu0 0.0
    %3220 = vmatprep.subr.mxu0 0.0
    %3221 = vmatpush1.msra.mxu0 0.0
    %3222 = vmatprep.subr.mxu0 0.0
    %3223 = vmatpush1.msra.mxu0 0.0
    %3224 = vmatprep.subr.mxu0 0.0
    %3225 = vmatpush1.msra.mxu0 0.0
    %3226 = vmatprep.subr.mxu0 0.0
    %3227 = vmatpush1.msra.mxu0 0.0
    %3228 = vmatprep.subr.mxu0 0.0
    %3229 = vmatpush1.msra.mxu0 0.0
    %3230 = vmatprep.subr.mxu0 0.0
    %3231 = vmatpush1.msra.mxu0 0.0
    %3232 = vmatprep.subr.mxu0 0.0
    %3233 = vmatpush1.msra.mxu0 0.0
    %3234 = vmatprep.subr.mxu0 0.0
    %3235 = vmatpush1.msra.mxu0 0.0
    %3236 = vmatprep.subr.mxu0 0.0
    %3237 = vmatpush1.msra.mxu0 0.0
    %3238 = vmatprep.subr.mxu0 0.0
    %3239 = vmatpush1.msra.mxu0 0.0
    %3240 = vmatprep.subr.mxu0 0.0
    %3241 = vmatpush1.msra.mxu0 0.0
    %3242 = vmatprep.subr.mxu0 0.0
    %3243 = vmatpush1.msra.mxu0 0.0
    %3244 = vmatprep.subr.mxu0 0.0
    %3245 = vmatpush1.msra.mxu0 0.0
    %3246 = vmatprep.subr.mxu0 0.0
    %3247 = vmatpush1.msra.mxu0 0.0
    %3248 = vmatprep.subr.mxu0 0.0
    %3249 = vmatpush1.msra.mxu0 0.0
    %3250 = vmatprep.subr.mxu0 0.0
    %3251 = vmatpush1.msra.mxu0 0.0
    %3252 = vmatprep.subr.mxu0 0.0
    %3253 = vmatpush1.msra.mxu0 0.0
    %3254 = vmatprep.subr.mxu0 0.0
    %3255 = vmatpush1.msra.mxu0 0.0
    %3256 = vmatprep.mubr.f32.mxu0 0.0
    %3257 = vmatmul.mubr.f32.gmra.mrb[0].mxu0 %v3187
    %v3258 = vpop.f32.mrb[0].mxu0
    %v3259 = vadd.f32 %v3178, %v3258
    %v3260 = vpop.f32.mrb[0].mxu0
    %3261 = vmatprep.mubr.f32.mxu0 0.0
    %3262 = vmatmul.mubr.f32.gmra.mrb[0].mxu0 %v3190
    %v3263 = vpop.f32.mrb[0].mxu0
    %v3264 = vadd.f32 %v3183, %v3263
    %v3265 = vpop.f32.mrb[0].mxu0
    %3266 = vdwg.mxu0
    %3267 = vrot.lane.b32.xlu0 %v2301, 112
    %v3268 = vpop.permute.xlu0 %3267
    %3269 = vrot.lane.b32.xlu0 %v2370, 112
    %v3270 = vpop.permute.xlu0 %3269
    %v3271 = vsel %vm302, %v3268, 0
    %v3273 = vsel %vm302, %v3270, 0
    %3275 = vmatprep.subr.mxu0 0.0
    %3276 = vmatpush1.xpose.msra.mxu0 %v3273
    %3277 = vmatprep.subr.mxu0 0.0
    %3278 = vmatpush1.xpose.msra.mxu0 0.0
    %3279 = vmatprep.subr.mxu0 0.0
    %3280 = vmatpush1.xpose.msra.mxu0 0.0
    %3281 = vmatprep.subr.mxu0 0.0
    %3282 = vmatpush1.xpose.msra.mxu0 0.0
    %3283 = vmatprep.subr.mxu0 0.0
    %3284 = vmatpush1.xpose.msra.mxu0 0.0
    %3285 = vmatprep.subr.mxu0 0.0
    %3286 = vmatpush1.xpose.msra.mxu0 0.0
    %3287 = vmatprep.subr.mxu0 0.0
    %3288 = vmatpush1.xpose.msra.mxu0 0.0
    %3289 = vmatprep.subr.mxu0 0.0
    %3290 = vmatpush1.xpose.msra.mxu0 0.0
    %3291 = vmatprep.subr.mxu0 0.0
    %3292 = vmatpush1.xpose.msra.mxu0 0.0
    %3293 = vmatprep.subr.mxu0 0.0
    %3294 = vmatpush1.xpose.msra.mxu0 0.0
    %3295 = vmatprep.subr.mxu0 0.0
    %3296 = vmatpush1.xpose.msra.mxu0 0.0
    %3297 = vmatprep.subr.mxu0 0.0
    %3298 = vmatpush1.xpose.msra.mxu0 0.0
    %3299 = vmatprep.subr.mxu0 0.0
    %3300 = vmatpush1.xpose.msra.mxu0 0.0
    %3301 = vmatprep.subr.mxu0 0.0
    %3302 = vmatpush1.xpose.msra.mxu0 0.0
    %3303 = vmatprep.subr.mxu0 0.0
    %3304 = vmatpush1.xpose.msra.mxu0 0.0
    %3305 = vmatprep.subr.mxu0 0.0
    %3306 = vmatpush1.xpose.msra.mxu0 0.0
    %3307 = vmatprep.subr.mxu0 0.0
    %3308 = vmatpush1.xpose.msra.mxu0 0.0
    %3309 = vmatprep.subr.mxu0 0.0
    %3310 = vmatpush1.xpose.msra.mxu0 0.0
    %3311 = vmatprep.subr.mxu0 0.0
    %3312 = vmatpush1.xpose.msra.mxu0 0.0
    %3313 = vmatprep.subr.mxu0 0.0
    %3314 = vmatpush1.xpose.msra.mxu0 0.0
    %3315 = vmatprep.subr.mxu0 0.0
    %3316 = vmatpush1.xpose.msra.mxu0 0.0
    %3317 = vmatprep.subr.mxu0 0.0
    %3318 = vmatpush1.xpose.msra.mxu0 0.0
    %3319 = vmatprep.subr.mxu0 0.0
    %3320 = vmatpush1.xpose.msra.mxu0 0.0
    %3321 = vmatprep.subr.mxu0 0.0
    %3322 = vmatpush1.xpose.msra.mxu0 0.0
    %3323 = vmatprep.subr.mxu0 0.0
    %3324 = vmatpush1.xpose.msra.mxu0 0.0
    %3325 = vmatprep.subr.mxu0 0.0
    %3326 = vmatpush1.xpose.msra.mxu0 0.0
    %3327 = vmatprep.subr.mxu0 0.0
    %3328 = vmatpush1.xpose.msra.mxu0 0.0
    %3329 = vmatprep.subr.mxu0 0.0
    %3330 = vmatpush1.xpose.msra.mxu0 0.0
    %3331 = vmatprep.subr.mxu0 0.0
    %3332 = vmatpush1.xpose.msra.mxu0 0.0
    %3333 = vmatprep.subr.mxu0 0.0
    %3334 = vmatpush1.xpose.msra.mxu0 0.0
    %3335 = vmatprep.subr.mxu0 0.0
    %3336 = vmatpush1.xpose.msra.mxu0 0.0
    %3337 = vmatprep.subr.mxu0 0.0
    %3338 = vmatpush1.xpose.msra.mxu0 0.0
    %3339 = vmatprep.mubr.f32.mxu0 0.0
    %3340 = vmatmul.mubr.f32.gmra.mrb[0].mxu0 %v3271
    %v3341 = vpop.f32.mrb[0].mxu0
    %v3342 = vadd.f32 0.0, %v3341
    %v3343 = vpop.f32.mrb[0].mxu0
    %3344 = vdwg.mxu0
    %3345 = vrot.lane.b32.xlu0 %v2302, 112
    %v3346 = vpop.permute.xlu0 %3345
    %3347 = vrot.lane.b32.xlu0 %v2375, 112
    %v3348 = vpop.permute.xlu0 %3347
    %v3349 = vsel %vm302, %v3346, 0
    %v3351 = vsel %vm302, %v3348, 0
    %3353 = vmatprep.subr.mxu0 0.0
    %3354 = vmatpush1.xpose.msra.mxu0 %v3351
    %3355 = vmatprep.subr.mxu0 0.0
    %3356 = vmatpush1.xpose.msra.mxu0 0.0
    %3357 = vmatprep.subr.mxu0 0.0
    %3358 = vmatpush1.xpose.msra.mxu0 0.0
    %3359 = vmatprep.subr.mxu0 0.0
    %3360 = vmatpush1.xpose.msra.mxu0 0.0
    %3361 = vmatprep.subr.mxu0 0.0
    %3362 = vmatpush1.xpose.msra.mxu0 0.0
    %3363 = vmatprep.subr.mxu0 0.0
    %3364 = vmatpush1.xpose.msra.mxu0 0.0
    %3365 = vmatprep.subr.mxu0 0.0
    %3366 = vmatpush1.xpose.msra.mxu0 0.0
    %3367 = vmatprep.subr.mxu0 0.0
    %3368 = vmatpush1.xpose.msra.mxu0 0.0
    %3369 = vmatprep.subr.mxu0 0.0
    %3370 = vmatpush1.xpose.msra.mxu0 0.0
    %3371 = vmatprep.subr.mxu0 0.0
    %3372 = vmatpush1.xpose.msra.mxu0 0.0
    %3373 = vmatprep.subr.mxu0 0.0
    %3374 = vmatpush1.xpose.msra.mxu0 0.0
    %3375 = vmatprep.subr.mxu0 0.0
    %3376 = vmatpush1.xpose.msra.mxu0 0.0
    %3377 = vmatprep.subr.mxu0 0.0
    %3378 = vmatpush1.xpose.msra.mxu0 0.0
    %3379 = vmatprep.subr.mxu0 0.0
    %3380 = vmatpush1.xpose.msra.mxu0 0.0
    %3381 = vmatprep.subr.mxu0 0.0
    %3382 = vmatpush1.xpose.msra.mxu0 0.0
    %3383 = vmatprep.subr.mxu0 0.0
    %3384 = vmatpush1.xpose.msra.mxu0 0.0
    %3385 = vmatprep.subr.mxu0 0.0
    %3386 = vmatpush1.xpose.msra.mxu0 0.0
    %3387 = vmatprep.subr.mxu0 0.0
    %3388 = vmatpush1.xpose.msra.mxu0 0.0
    %3389 = vmatprep.subr.mxu0 0.0
    %3390 = vmatpush1.xpose.msra.mxu0 0.0
    %3391 = vmatprep.subr.mxu0 0.0
    %3392 = vmatpush1.xpose.msra.mxu0 0.0
    %3393 = vmatprep.subr.mxu0 0.0
    %3394 = vmatpush1.xpose.msra.mxu0 0.0
    %3395 = vmatprep.subr.mxu0 0.0
    %3396 = vmatpush1.xpose.msra.mxu0 0.0
    %3397 = vmatprep.subr.mxu0 0.0
    %3398 = vmatpush1.xpose.msra.mxu0 0.0
    %3399 = vmatprep.subr.mxu0 0.0
    %3400 = vmatpush1.xpose.msra.mxu0 0.0
    %3401 = vmatprep.subr.mxu0 0.0
    %3402 = vmatpush1.xpose.msra.mxu0 0.0
    %3403 = vmatprep.subr.mxu0 0.0
    %3404 = vmatpush1.xpose.msra.mxu0 0.0
    %3405 = vmatprep.subr.mxu0 0.0
    %3406 = vmatpush1.xpose.msra.mxu0 0.0
    %3407 = vmatprep.subr.mxu0 0.0
    %3408 = vmatpush1.xpose.msra.mxu0 0.0
    %3409 = vmatprep.subr.mxu0 0.0
    %3410 = vmatpush1.xpose.msra.mxu0 0.0
    %3411 = vmatprep.subr.mxu0 0.0
    %3412 = vmatpush1.xpose.msra.mxu0 0.0
    %3413 = vmatprep.subr.mxu0 0.0
    %3414 = vmatpush1.xpose.msra.mxu0 0.0
    %3415 = vmatprep.subr.mxu0 0.0
    %3416 = vmatpush1.xpose.msra.mxu0 0.0
    %3417 = vmatprep.mubr.f32.mxu0 0.0
    %3418 = vmatmul.mubr.f32.gmra.mrb[0].mxu0 %v3349
    %v3419 = vpop.f32.mrb[0].mxu0
    %v3420 = vadd.f32 0.0, %v3419
    %v3421 = vpop.f32.mrb[0].mxu0
    %3422 = vdwg.mxu0
    %v3423 = vsel %vm302, %v3342, -inf
    %3424 = vmax.xlane.f32.xlu0 %v3423
    %v3425 = vpop.xlane.xlu0 %3424
    %v3426 = vsel %vm302, %v3420, -inf
    %3427 = vmax.xlane.f32.xlu0 %v3426
    %v3428 = vpop.xlane.xlu0 %3427
    %v3429 = vsub.f32 %v3342, %v3425
    %v3430 = vsub.f32 %v3420, %v3428
    %v3431 = vmul.f32 %v3429, 1.442695
    %v3432 = vpow.pop %v3431
    %v3433 = vmul.f32 %v3430, 1.442695
    %v3434 = vpow.pop %v3433
    %v3435 = vsel %vm302, %v3432, 0.0
    %3436 = vadd.xlane.f32.xlu0 %v3435
    %v3437 = vpop.xlane.xlu0 %3436
    %v3438 = vsel %vm302, %v3434, 0.0
    %3439 = vadd.xlane.f32.xlu0 %v3438
    %v3440 = vpop.xlane.xlu0 %3439
    %v3441 = vrcp.pop %v3437
    %v3442 = vrcp.pop %v3440
    %v3443 = vmul.f32 %v3432, %v3441
    %v3444 = vmul.f32 %v3434, %v3442
    %3445 = vrot.lane.b32.xlu0 %v2445, 112
    %v3446 = vpop.permute.xlu0 %3445
    %v3449 = vsel %vm302, %v3443, 0
    %3451 = vmatprep.subr.mxu0 0.0
    %3452 = vmatpush1.msra.mxu0 %v3446
    %3453 = vmatprep.subr.mxu0 0.0
    %3454 = vmatpush1.msra.mxu0 0.0
    %3455 = vmatprep.subr.mxu0 0.0
    %3456 = vmatpush1.msra.mxu0 0.0
    %3457 = vmatprep.subr.mxu0 0.0
    %3458 = vmatpush1.msra.mxu0 0.0
    %3459 = vmatprep.subr.mxu0 0.0
    %3460 = vmatpush1.msra.mxu0 0.0
    %3461 = vmatprep.subr.mxu0 0.0
    %3462 = vmatpush1.msra.mxu0 0.0
    %3463 = vmatprep.subr.mxu0 0.0
    %3464 = vmatpush1.msra.mxu0 0.0
    %3465 = vmatprep.subr.mxu0 0.0
    %3466 = vmatpush1.msra.mxu0 0.0
    %3467 = vmatprep.subr.mxu0 0.0
    %3468 = vmatpush1.msra.mxu0 0.0
    %3469 = vmatprep.subr.mxu0 0.0
    %3470 = vmatpush1.msra.mxu0 0.0
    %3471 = vmatprep.subr.mxu0 0.0
    %3472 = vmatpush1.msra.mxu0 0.0
    %3473 = vmatprep.subr.mxu0 0.0
    %3474 = vmatpush1.msra.mxu0 0.0
    %3475 = vmatprep.subr.mxu0 0.0
    %3476 = vmatpush1.msra.mxu0 0.0
    %3477 = vmatprep.subr.mxu0 0.0
    %3478 = vmatpush1.msra.mxu0 0.0
    %3479 = vmatprep.subr.mxu0 0.0
    %3480 = vmatpush1.msra.mxu0 0.0
    %3481 = vmatprep.subr.mxu0 0.0
    %3482 = vmatpush1.msra.mxu0 0.0
    %3483 = vmatprep.subr.mxu0 0.0
    %3484 = vmatpush1.msra.mxu0 0.0
    %3485 = vmatprep.subr.mxu0 0.0
    %3486 = vmatpush1.msra.mxu0 0.0
    %3487 = vmatprep.subr.mxu0 0.0
    %3488 = vmatpush1.msra.mxu0 0.0
    %3489 = vmatprep.subr.mxu0 0.0
    %3490 = vmatpush1.msra.mxu0 0.0
    %3491 = vmatprep.subr.mxu0 0.0
    %3492 = vmatpush1.msra.mxu0 0.0
    %3493 = vmatprep.subr.mxu0 0.0
    %3494 = vmatpush1.msra.mxu0 0.0
    %3495 = vmatprep.subr.mxu0 0.0
    %3496 = vmatpush1.msra.mxu0 0.0
    %3497 = vmatprep.subr.mxu0 0.0
    %3498 = vmatpush1.msra.mxu0 0.0
    %3499 = vmatprep.subr.mxu0 0.0
    %3500 = vmatpush1.msra.mxu0 0.0
    %3501 = vmatprep.subr.mxu0 0.0
    %3502 = vmatpush1.msra.mxu0 0.0
    %3503 = vmatprep.subr.mxu0 0.0
    %3504 = vmatpush1.msra.mxu0 0.0
    %3505 = vmatprep.subr.mxu0 0.0
    %3506 = vmatpush1.msra.mxu0 0.0
    %3507 = vmatprep.subr.mxu0 0.0
    %3508 = vmatpush1.msra.mxu0 0.0
    %3509 = vmatprep.subr.mxu0 0.0
    %3510 = vmatpush1.msra.mxu0 0.0
    %3511 = vmatprep.subr.mxu0 0.0
    %3512 = vmatpush1.msra.mxu0 0.0
    %3513 = vmatprep.subr.mxu0 0.0
    %3514 = vmatpush1.msra.mxu0 0.0
    %3515 = vmatprep.mubr.f32.mxu0 0.0
    %3516 = vmatmul.mubr.f32.gmra.mrb[0].mxu0 %v3449
    %v3517 = vpop.f32.mrb[0].mxu0
    %v3518 = vadd.f32 0.0, %v3517
    %v3519 = vpop.f32.mrb[0].mxu0
    %3520 = vdwg.mxu0
    %3521 = vrot.lane.b32.xlu0 %v2450, 112
    %v3522 = vpop.permute.xlu0 %3521
    %v3525 = vsel %vm302, %v3444, 0
    %3527 = vmatprep.subr.mxu0 0.0
    %3528 = vmatpush1.msra.mxu0 %v3522
    %3529 = vmatprep.subr.mxu0 0.0
    %3530 = vmatpush1.msra.mxu0 0.0
    %3531 = vmatprep.subr.mxu0 0.0
    %3532 = vmatpush1.msra.mxu0 0.0
    %3533 = vmatprep.subr.mxu0 0.0
    %3534 = vmatpush1.msra.mxu0 0.0
    %3535 = vmatprep.subr.mxu0 0.0
    %3536 = vmatpush1.msra.mxu0 0.0
    %3537 = vmatprep.subr.mxu0 0.0
    %3538 = vmatpush1.msra.mxu0 0.0
    %3539 = vmatprep.subr.mxu0 0.0
    %3540 = vmatpush1.msra.mxu0 0.0
    %3541 = vmatprep.subr.mxu0 0.0
    %3542 = vmatpush1.msra.mxu0 0.0
    %3543 = vmatprep.subr.mxu0 0.0
    %3544 = vmatpush1.msra.mxu0 0.0
    %3545 = vmatprep.subr.mxu0 0.0
    %3546 = vmatpush1.msra.mxu0 0.0
    %3547 = vmatprep.subr.mxu0 0.0
    %3548 = vmatpush1.msra.mxu0 0.0
    %3549 = vmatprep.subr.mxu0 0.0
    %3550 = vmatpush1.msra.mxu0 0.0
    %3551 = vmatprep.subr.mxu0 0.0
    %3552 = vmatpush1.msra.mxu0 0.0
    %3553 = vmatprep.subr.mxu0 0.0
    %3554 = vmatpush1.msra.mxu0 0.0
    %3555 = vmatprep.subr.mxu0 0.0
    %3556 = vmatpush1.msra.mxu0 0.0
    %3557 = vmatprep.subr.mxu0 0.0
    %3558 = vmatpush1.msra.mxu0 0.0
    %3559 = vmatprep.subr.mxu0 0.0
    %3560 = vmatpush1.msra.mxu0 0.0
    %3561 = vmatprep.subr.mxu0 0.0
    %3562 = vmatpush1.msra.mxu0 0.0
    %3563 = vmatprep.subr.mxu0 0.0
    %3564 = vmatpush1.msra.mxu0 0.0
    %3565 = vmatprep.subr.mxu0 0.0
    %3566 = vmatpush1.msra.mxu0 0.0
    %3567 = vmatprep.subr.mxu0 0.0
    %3568 = vmatpush1.msra.mxu0 0.0
    %3569 = vmatprep.subr.mxu0 0.0
    %3570 = vmatpush1.msra.mxu0 0.0
    %3571 = vmatprep.subr.mxu0 0.0
    %3572 = vmatpush1.msra.mxu0 0.0
    %3573 = vmatprep.subr.mxu0 0.0
    %3574 = vmatpush1.msra.mxu0 0.0
    %3575 = vmatprep.subr.mxu0 0.0
    %3576 = vmatpush1.msra.mxu0 0.0
    %3577 = vmatprep.subr.mxu0 0.0
    %3578 = vmatpush1.msra.mxu0 0.0
    %3579 = vmatprep.subr.mxu0 0.0
    %3580 = vmatpush1.msra.mxu0 0.0
    %3581 = vmatprep.subr.mxu0 0.0
    %3582 = vmatpush1.msra.mxu0 0.0
    %3583 = vmatprep.subr.mxu0 0.0
    %3584 = vmatpush1.msra.mxu0 0.0
    %3585 = vmatprep.subr.mxu0 0.0
    %3586 = vmatpush1.msra.mxu0 0.0
    %3587 = vmatprep.subr.mxu0 0.0
    %3588 = vmatpush1.msra.mxu0 0.0
    %3589 = vmatprep.subr.mxu0 0.0
    %3590 = vmatpush1.msra.mxu0 0.0
    %3591 = vmatprep.mubr.f32.mxu0 0.0
    %3592 = vmatmul.mubr.f32.gmra.mrb[0].mxu0 %v3525
    %v3593 = vpop.f32.mrb[0].mxu0
    %v3594 = vadd.f32 0.0, %v3593
    %v3595 = vpop.f32.mrb[0].mxu0
    %3596 = vdwg.mxu0
    %v3598 = vsel %vm302, %v3518, 0
    %v3601 = vsel %vm302, %v3594, 0
    %3603 = vmatprep.subr.mxu0 0.0
    %3604 = vmatpush1.msra.mxu0 %v50
    %3605 = vmatprep.subr.mxu0 0.0
    %3606 = vmatpush1.msra.mxu0 0.0
    %3607 = vmatprep.subr.mxu0 0.0
    %3608 = vmatpush1.msra.mxu0 0.0
    %3609 = vmatprep.subr.mxu0 0.0
    %3610 = vmatpush1.msra.mxu0 0.0
    %3611 = vmatprep.subr.mxu0 0.0
    %3612 = vmatpush1.msra.mxu0 0.0
    %3613 = vmatprep.subr.mxu0 0.0
    %3614 = vmatpush1.msra.mxu0 0.0
    %3615 = vmatprep.subr.mxu0 0.0
    %3616 = vmatpush1.msra.mxu0 0.0
    %3617 = vmatprep.subr.mxu0 0.0
    %3618 = vmatpush1.msra.mxu0 0.0
    %3619 = vmatprep.subr.mxu0 0.0
    %3620 = vmatpush1.msra.mxu0 0.0
    %3621 = vmatprep.subr.mxu0 0.0
    %3622 = vmatpush1.msra.mxu0 0.0
    %3623 = vmatprep.subr.mxu0 0.0
    %3624 = vmatpush1.msra.mxu0 0.0
    %3625 = vmatprep.subr.mxu0 0.0
    %3626 = vmatpush1.msra.mxu0 0.0
    %3627 = vmatprep.subr.mxu0 0.0
    %3628 = vmatpush1.msra.mxu0 0.0
    %3629 = vmatprep.subr.mxu0 0.0
    %3630 = vmatpush1.msra.mxu0 0.0
    %3631 = vmatprep.subr.mxu0 0.0
    %3632 = vmatpush1.msra.mxu0 0.0
    %3633 = vmatprep.subr.mxu0 0.0
    %3634 = vmatpush1.msra.mxu0 0.0
    %3635 = vmatprep.subr.mxu0 0.0
    %3636 = vmatpush1.msra.mxu0 0.0
    %3637 = vmatprep.subr.mxu0 0.0
    %3638 = vmatpush1.msra.mxu0 0.0
    %3639 = vmatprep.subr.mxu0 0.0
    %3640 = vmatpush1.msra.mxu0 0.0
    %3641 = vmatprep.subr.mxu0 0.0
    %3642 = vmatpush1.msra.mxu0 0.0
    %3643 = vmatprep.subr.mxu0 0.0
    %3644 = vmatpush1.msra.mxu0 0.0
    %3645 = vmatprep.subr.mxu0 0.0
    %3646 = vmatpush1.msra.mxu0 0.0
    %3647 = vmatprep.subr.mxu0 0.0
    %3648 = vmatpush1.msra.mxu0 0.0
    %3649 = vmatprep.subr.mxu0 0.0
    %3650 = vmatpush1.msra.mxu0 0.0
    %3651 = vmatprep.subr.mxu0 0.0
    %3652 = vmatpush1.msra.mxu0 0.0
    %3653 = vmatprep.subr.mxu0 0.0
    %3654 = vmatpush1.msra.mxu0 0.0
    %3655 = vmatprep.subr.mxu0 0.0
    %3656 = vmatpush1.msra.mxu0 0.0
    %3657 = vmatprep.subr.mxu0 0.0
    %3658 = vmatpush1.msra.mxu0 0.0
    %3659 = vmatprep.subr.mxu0 0.0
    %3660 = vmatpush1.msra.mxu0 0.0
    %3661 = vmatprep.subr.mxu0 0.0
    %3662 = vmatpush1.msra.mxu0 0.0
    %3663 = vmatprep.subr.mxu0 0.0
    %3664 = vmatpush1.msra.mxu0 0.0
    %3665 = vmatprep.subr.mxu0 0.0
    %3666 = vmatpush1.msra.mxu0 0.0
    %3667 = vmatprep.mubr.f32.mxu0 0.0
    %3668 = vmatmul.mubr.f32.gmra.mrb[0].mxu0 %v3598
    %v3669 = vpop.f32.mrb[0].mxu0
    %v3670 = vadd.f32 0.0, %v3669
    %v3671 = vpop.f32.mrb[0].mxu0
    %3672 = vmatprep.mubr.f32.mxu0 0.0
    %3673 = vmatmul.mubr.f32.gmra.mrb[0].mxu0 %v3601
    %v3674 = vpop.f32.mrb[0].mxu0
    %v3675 = vadd.f32 0.0, %v3674
    %v3676 = vpop.f32.mrb[0].mxu0
    %3677 = vdwg.mxu0
    %v3678 = vadd.f32 %v3259, %v3670
    %v3679 = vadd.f32 %v3264, %v3675
    %3680 = vrot.lane.b32.xlu0 %v2301, 104
    %v3681 = vpop.permute.xlu0 %3680
    %3682 = vrot.lane.b32.xlu0 %v2370, 104
    %v3683 = vpop.permute.xlu0 %3682
    %v3684 = vsel %vm302, %v3681, 0
    %v3686 = vsel %vm302, %v3683, 0
    %3688 = vmatprep.subr.mxu0 0.0
    %3689 = vmatpush1.xpose.msra.mxu0 %v3686
    %3690 = vmatprep.subr.mxu0 0.0
    %3691 = vmatpush1.xpose.msra.mxu0 0.0
    %3692 = vmatprep.subr.mxu0 0.0
    %3693 = vmatpush1.xpose.msra.mxu0 0.0
    %3694 = vmatprep.subr.mxu0 0.0
    %3695 = vmatpush1.xpose.msra.mxu0 0.0
    %3696 = vmatprep.subr.mxu0 0.0
    %3697 = vmatpush1.xpose.msra.mxu0 0.0
    %3698 = vmatprep.subr.mxu0 0.0
    %3699 = vmatpush1.xpose.msra.mxu0 0.0
    %3700 = vmatprep.subr.mxu0 0.0
    %3701 = vmatpush1.xpose.msra.mxu0 0.0
    %3702 = vmatprep.subr.mxu0 0.0
    %3703 = vmatpush1.xpose.msra.mxu0 0.0
    %3704 = vmatprep.subr.mxu0 0.0
    %3705 = vmatpush1.xpose.msra.mxu0 0.0
    %3706 = vmatprep.subr.mxu0 0.0
    %3707 = vmatpush1.xpose.msra.mxu0 0.0
    %3708 = vmatprep.subr.mxu0 0.0
    %3709 = vmatpush1.xpose.msra.mxu0 0.0
    %3710 = vmatprep.subr.mxu0 0.0
    %3711 = vmatpush1.xpose.msra.mxu0 0.0
    %3712 = vmatprep.subr.mxu0 0.0
    %3713 = vmatpush1.xpose.msra.mxu0 0.0
    %3714 = vmatprep.subr.mxu0 0.0
    %3715 = vmatpush1.xpose.msra.mxu0 0.0
    %3716 = vmatprep.subr.mxu0 0.0
    %3717 = vmatpush1.xpose.msra.mxu0 0.0
    %3718 = vmatprep.subr.mxu0 0.0
    %3719 = vmatpush1.xpose.msra.mxu0 0.0
    %3720 = vmatprep.subr.mxu0 0.0
    %3721 = vmatpush1.xpose.msra.mxu0 0.0
    %3722 = vmatprep.subr.mxu0 0.0
    %3723 = vmatpush1.xpose.msra.mxu0 0.0
    %3724 = vmatprep.subr.mxu0 0.0
    %3725 = vmatpush1.xpose.msra.mxu0 0.0
    %3726 = vmatprep.subr.mxu0 0.0
    %3727 = vmatpush1.xpose.msra.mxu0 0.0
    %3728 = vmatprep.subr.mxu0 0.0
    %3729 = vmatpush1.xpose.msra.mxu0 0.0
    %3730 = vmatprep.subr.mxu0 0.0
    %3731 = vmatpush1.xpose.msra.mxu0 0.0
    %3732 = vmatprep.subr.mxu0 0.0
    %3733 = vmatpush1.xpose.msra.mxu0 0.0
    %3734 = vmatprep.subr.mxu0 0.0
    %3735 = vmatpush1.xpose.msra.mxu0 0.0
    %3736 = vmatprep.subr.mxu0 0.0
    %3737 = vmatpush1.xpose.msra.mxu0 0.0
    %3738 = vmatprep.subr.mxu0 0.0
    %3739 = vmatpush1.xpose.msra.mxu0 0.0
    %3740 = vmatprep.subr.mxu0 0.0
    %3741 = vmatpush1.xpose.msra.mxu0 0.0
    %3742 = vmatprep.subr.mxu0 0.0
    %3743 = vmatpush1.xpose.msra.mxu0 0.0
    %3744 = vmatprep.subr.mxu0 0.0
    %3745 = vmatpush1.xpose.msra.mxu0 0.0
    %3746 = vmatprep.subr.mxu0 0.0
    %3747 = vmatpush1.xpose.msra.mxu0 0.0
    %3748 = vmatprep.subr.mxu0 0.0
    %3749 = vmatpush1.xpose.msra.mxu0 0.0
    %3750 = vmatprep.subr.mxu0 0.0
    %3751 = vmatpush1.xpose.msra.mxu0 0.0
    %3752 = vmatprep.mubr.f32.mxu0 0.0
    %3753 = vmatmul.mubr.f32.gmra.mrb[0].mxu0 %v3684
    %v3754 = vpop.f32.mrb[0].mxu0
    %v3755 = vadd.f32 0.0, %v3754
    %v3756 = vpop.f32.mrb[0].mxu0
    %3757 = vdwg.mxu0
    %3758 = vrot.lane.b32.xlu0 %v2302, 104
    %v3759 = vpop.permute.xlu0 %3758
    %3760 = vrot.lane.b32.xlu0 %v2375, 104
    %v3761 = vpop.permute.xlu0 %3760
    %v3762 = vsel %vm302, %v3759, 0
    %v3764 = vsel %vm302, %v3761, 0
    %3766 = vmatprep.subr.mxu0 0.0
    %3767 = vmatpush1.xpose.msra.mxu0 %v3764
    %3768 = vmatprep.subr.mxu0 0.0
    %3769 = vmatpush1.xpose.msra.mxu0 0.0
    %3770 = vmatprep.subr.mxu0 0.0
    %3771 = vmatpush1.xpose.msra.mxu0 0.0
    %3772 = vmatprep.subr.mxu0 0.0
    %3773 = vmatpush1.xpose.msra.mxu0 0.0
    %3774 = vmatprep.subr.mxu0 0.0
    %3775 = vmatpush1.xpose.msra.mxu0 0.0
    %3776 = vmatprep.subr.mxu0 0.0
    %3777 = vmatpush1.xpose.msra.mxu0 0.0
    %3778 = vmatprep.subr.mxu0 0.0
    %3779 = vmatpush1.xpose.msra.mxu0 0.0
    %3780 = vmatprep.subr.mxu0 0.0
    %3781 = vmatpush1.xpose.msra.mxu0 0.0
    %3782 = vmatprep.subr.mxu0 0.0
    %3783 = vmatpush1.xpose.msra.mxu0 0.0
    %3784 = vmatprep.subr.mxu0 0.0
    %3785 = vmatpush1.xpose.msra.mxu0 0.0
    %3786 = vmatprep.subr.mxu0 0.0
    %3787 = vmatpush1.xpose.msra.mxu0 0.0
    %3788 = vmatprep.subr.mxu0 0.0
    %3789 = vmatpush1.xpose.msra.mxu0 0.0
    %3790 = vmatprep.subr.mxu0 0.0
    %3791 = vmatpush1.xpose.msra.mxu0 0.0
    %3792 = vmatprep.subr.mxu0 0.0
    %3793 = vmatpush1.xpose.msra.mxu0 0.0
    %3794 = vmatprep.subr.mxu0 0.0
    %3795 = vmatpush1.xpose.msra.mxu0 0.0
    %3796 = vmatprep.subr.mxu0 0.0
    %3797 = vmatpush1.xpose.msra.mxu0 0.0
    %3798 = vmatprep.subr.mxu0 0.0
    %3799 = vmatpush1.xpose.msra.mxu0 0.0
    %3800 = vmatprep.subr.mxu0 0.0
    %3801 = vmatpush1.xpose.msra.mxu0 0.0
    %3802 = vmatprep.subr.mxu0 0.0
    %3803 = vmatpush1.xpose.msra.mxu0 0.0
    %3804 = vmatprep.subr.mxu0 0.0
    %3805 = vmatpush1.xpose.msra.mxu0 0.0
    %3806 = vmatprep.subr.mxu0 0.0
    %3807 = vmatpush1.xpose.msra.mxu0 0.0
    %3808 = vmatprep.subr.mxu0 0.0
    %3809 = vmatpush1.xpose.msra.mxu0 0.0
    %3810 = vmatprep.subr.mxu0 0.0
    %3811 = vmatpush1.xpose.msra.mxu0 0.0
    %3812 = vmatprep.subr.mxu0 0.0
    %3813 = vmatpush1.xpose.msra.mxu0 0.0
    %3814 = vmatprep.subr.mxu0 0.0
    %3815 = vmatpush1.xpose.msra.mxu0 0.0
    %3816 = vmatprep.subr.mxu0 0.0
    %3817 = vmatpush1.xpose.msra.mxu0 0.0
    %3818 = vmatprep.subr.mxu0 0.0
    %3819 = vmatpush1.xpose.msra.mxu0 0.0
    %3820 = vmatprep.subr.mxu0 0.0
    %3821 = vmatpush1.xpose.msra.mxu0 0.0
    %3822 = vmatprep.subr.mxu0 0.0
    %3823 = vmatpush1.xpose.msra.mxu0 0.0
    %3824 = vmatprep.subr.mxu0 0.0
    %3825 = vmatpush1.xpose.msra.mxu0 0.0
    %3826 = vmatprep.subr.mxu0 0.0
    %3827 = vmatpush1.xpose.msra.mxu0 0.0
    %3828 = vmatprep.subr.mxu0 0.0
    %3829 = vmatpush1.xpose.msra.mxu0 0.0
    %3830 = vmatprep.mubr.f32.mxu0 0.0
    %3831 = vmatmul.mubr.f32.gmra.mrb[0].mxu0 %v3762
    %v3832 = vpop.f32.mrb[0].mxu0
    %v3833 = vadd.f32 0.0, %v3832
    %v3834 = vpop.f32.mrb[0].mxu0
    %3835 = vdwg.mxu0
    %v3836 = vsel %vm302, %v3755, -inf
    %3837 = vmax.xlane.f32.xlu0 %v3836
    %v3838 = vpop.xlane.xlu0 %3837
    %v3839 = vsel %vm302, %v3833, -inf
    %3840 = vmax.xlane.f32.xlu0 %v3839
    %v3841 = vpop.xlane.xlu0 %3840
    %v3842 = vsub.f32 %v3755, %v3838
    %v3843 = vsub.f32 %v3833, %v3841
    %v3844 = vmul.f32 %v3842, 1.442695
    %v3845 = vpow.pop %v3844
    %v3846 = vmul.f32 %v3843, 1.442695
    %v3847 = vpow.pop %v3846
    %v3848 = vsel %vm302, %v3845, 0.0
    %3849 = vadd.xlane.f32.xlu0 %v3848
    %v3850 = vpop.xlane.xlu0 %3849
    %v3851 = vsel %vm302, %v3847, 0.0
    %3852 = vadd.xlane.f32.xlu0 %v3851
    %v3853 = vpop.xlane.xlu0 %3852
    %v3854 = vrcp.pop %v3850
    %v3855 = vrcp.pop %v3853
    %v3856 = vmul.f32 %v3845, %v3854
    %v3857 = vmul.f32 %v3847, %v3855
    %3858 = vrot.lane.b32.xlu0 %v2445, 104
    %v3859 = vpop.permute.xlu0 %3858
    %v3862 = vsel %vm302, %v3856, 0
    %3864 = vmatprep.subr.mxu0 0.0
    %3865 = vmatpush1.msra.mxu0 %v3859
    %3866 = vmatprep.subr.mxu0 0.0
    %3867 = vmatpush1.msra.mxu0 0.0
    %3868 = vmatprep.subr.mxu0 0.0
    %3869 = vmatpush1.msra.mxu0 0.0
    %3870 = vmatprep.subr.mxu0 0.0
    %3871 = vmatpush1.msra.mxu0 0.0
    %3872 = vmatprep.subr.mxu0 0.0
    %3873 = vmatpush1.msra.mxu0 0.0
    %3874 = vmatprep.subr.mxu0 0.0
    %3875 = vmatpush1.msra.mxu0 0.0
    %3876 = vmatprep.subr.mxu0 0.0
    %3877 = vmatpush1.msra.mxu0 0.0
    %3878 = vmatprep.subr.mxu0 0.0
    %3879 = vmatpush1.msra.mxu0 0.0
    %3880 = vmatprep.subr.mxu0 0.0
    %3881 = vmatpush1.msra.mxu0 0.0
    %3882 = vmatprep.subr.mxu0 0.0
    %3883 = vmatpush1.msra.mxu0 0.0
    %3884 = vmatprep.subr.mxu0 0.0
    %3885 = vmatpush1.msra.mxu0 0.0
    %3886 = vmatprep.subr.mxu0 0.0
    %3887 = vmatpush1.msra.mxu0 0.0
    %3888 = vmatprep.subr.mxu0 0.0
    %3889 = vmatpush1.msra.mxu0 0.0
    %3890 = vmatprep.subr.mxu0 0.0
    %3891 = vmatpush1.msra.mxu0 0.0
    %3892 = vmatprep.subr.mxu0 0.0
    %3893 = vmatpush1.msra.mxu0 0.0
    %3894 = vmatprep.subr.mxu0 0.0
    %3895 = vmatpush1.msra.mxu0 0.0
    %3896 = vmatprep.subr.mxu0 0.0
    %3897 = vmatpush1.msra.mxu0 0.0
    %3898 = vmatprep.subr.mxu0 0.0
    %3899 = vmatpush1.msra.mxu0 0.0
    %3900 = vmatprep.subr.mxu0 0.0
    %3901 = vmatpush1.msra.mxu0 0.0
    %3902 = vmatprep.subr.mxu0 0.0
    %3903 = vmatpush1.msra.mxu0 0.0
    %3904 = vmatprep.subr.mxu0 0.0
    %3905 = vmatpush1.msra.mxu0 0.0
    %3906 = vmatprep.subr.mxu0 0.0
    %3907 = vmatpush1.msra.mxu0 0.0
    %3908 = vmatprep.subr.mxu0 0.0
    %3909 = vmatpush1.msra.mxu0 0.0
    %3910 = vmatprep.subr.mxu0 0.0
    %3911 = vmatpush1.msra.mxu0 0.0
    %3912 = vmatprep.subr.mxu0 0.0
    %3913 = vmatpush1.msra.mxu0 0.0
    %3914 = vmatprep.subr.mxu0 0.0
    %3915 = vmatpush1.msra.mxu0 0.0
    %3916 = vmatprep.subr.mxu0 0.0
    %3917 = vmatpush1.msra.mxu0 0.0
    %3918 = vmatprep.subr.mxu0 0.0
    %3919 = vmatpush1.msra.mxu0 0.0
    %3920 = vmatprep.subr.mxu0 0.0
    %3921 = vmatpush1.msra.mxu0 0.0
    %3922 = vmatprep.subr.mxu0 0.0
    %3923 = vmatpush1.msra.mxu0 0.0
    %3924 = vmatprep.subr.mxu0 0.0
    %3925 = vmatpush1.msra.mxu0 0.0
    %3926 = vmatprep.subr.mxu0 0.0
    %3927 = vmatpush1.msra.mxu0 0.0
    %3928 = vmatprep.mubr.f32.mxu0 0.0
    %3929 = vmatmul.mubr.f32.gmra.mrb[0].mxu0 %v3862
    %v3930 = vpop.f32.mrb[0].mxu0
    %v3931 = vadd.f32 0.0, %v3930
    %v3932 = vpop.f32.mrb[0].mxu0
    %3933 = vdwg.mxu0
    %3934 = vrot.lane.b32.xlu0 %v2450, 104
    %v3935 = vpop.permute.xlu0 %3934
    %v3938 = vsel %vm302, %v3857, 0
    %3940 = vmatprep.subr.mxu0 0.0
    %3941 = vmatpush1.msra.mxu0 %v3935
    %3942 = vmatprep.subr.mxu0 0.0
    %3943 = vmatpush1.msra.mxu0 0.0
    %3944 = vmatprep.subr.mxu0 0.0
    %3945 = vmatpush1.msra.mxu0 0.0
    %3946 = vmatprep.subr.mxu0 0.0
    %3947 = vmatpush1.msra.mxu0 0.0
    %3948 = vmatprep.subr.mxu0 0.0
    %3949 = vmatpush1.msra.mxu0 0.0
    %3950 = vmatprep.subr.mxu0 0.0
    %3951 = vmatpush1.msra.mxu0 0.0
    %3952 = vmatprep.subr.mxu0 0.0
    %3953 = vmatpush1.msra.mxu0 0.0
    %3954 = vmatprep.subr.mxu0 0.0
    %3955 = vmatpush1.msra.mxu0 0.0
    %3956 = vmatprep.subr.mxu0 0.0
    %3957 = vmatpush1.msra.mxu0 0.0
    %3958 = vmatprep.subr.mxu0 0.0
    %3959 = vmatpush1.msra.mxu0 0.0
    %3960 = vmatprep.subr.mxu0 0.0
    %3961 = vmatpush1.msra.mxu0 0.0
    %3962 = vmatprep.subr.mxu0 0.0
    %3963 = vmatpush1.msra.mxu0 0.0
    %3964 = vmatprep.subr.mxu0 0.0
    %3965 = vmatpush1.msra.mxu0 0.0
    %3966 = vmatprep.subr.mxu0 0.0
    %3967 = vmatpush1.msra.mxu0 0.0
    %3968 = vmatprep.subr.mxu0 0.0
    %3969 = vmatpush1.msra.mxu0 0.0
    %3970 = vmatprep.subr.mxu0 0.0
    %3971 = vmatpush1.msra.mxu0 0.0
    %3972 = vmatprep.subr.mxu0 0.0
    %3973 = vmatpush1.msra.mxu0 0.0
    %3974 = vmatprep.subr.mxu0 0.0
    %3975 = vmatpush1.msra.mxu0 0.0
    %3976 = vmatprep.subr.mxu0 0.0
    %3977 = vmatpush1.msra.mxu0 0.0
    %3978 = vmatprep.subr.mxu0 0.0
    %3979 = vmatpush1.msra.mxu0 0.0
    %3980 = vmatprep.subr.mxu0 0.0
    %3981 = vmatpush1.msra.mxu0 0.0
    %3982 = vmatprep.subr.mxu0 0.0
    %3983 = vmatpush1.msra.mxu0 0.0
    %3984 = vmatprep.subr.mxu0 0.0
    %3985 = vmatpush1.msra.mxu0 0.0
    %3986 = vmatprep.subr.mxu0 0.0
    %3987 = vmatpush1.msra.mxu0 0.0
    %3988 = vmatprep.subr.mxu0 0.0
    %3989 = vmatpush1.msra.mxu0 0.0
    %3990 = vmatprep.subr.mxu0 0.0
    %3991 = vmatpush1.msra.mxu0 0.0
    %3992 = vmatprep.subr.mxu0 0.0
    %3993 = vmatpush1.msra.mxu0 0.0
    %3994 = vmatprep.subr.mxu0 0.0
    %3995 = vmatpush1.msra.mxu0 0.0
    %3996 = vmatprep.subr.mxu0 0.0
    %3997 = vmatpush1.msra.mxu0 0.0
    %3998 = vmatprep.subr.mxu0 0.0
    %3999 = vmatpush1.msra.mxu0 0.0
    %4000 = vmatprep.subr.mxu0 0.0
    %4001 = vmatpush1.msra.mxu0 0.0
    %4002 = vmatprep.subr.mxu0 0.0
    %4003 = vmatpush1.msra.mxu0 0.0
    %4004 = vmatprep.mubr.f32.mxu0 0.0
    %4005 = vmatmul.mubr.f32.gmra.mrb[0].mxu0 %v3938
    %v4006 = vpop.f32.mrb[0].mxu0
    %v4007 = vadd.f32 0.0, %v4006
    %v4008 = vpop.f32.mrb[0].mxu0
    %4009 = vdwg.mxu0
    %v4011 = vsel %vm302, %v3931, 0
    %v4014 = vsel %vm302, %v4007, 0
    %4016 = vmatprep.subr.mxu0 0.0
    %4017 = vmatpush1.msra.mxu0 %v51
    %4018 = vmatprep.subr.mxu0 0.0
    %4019 = vmatpush1.msra.mxu0 0.0
    %4020 = vmatprep.subr.mxu0 0.0
    %4021 = vmatpush1.msra.mxu0 0.0
    %4022 = vmatprep.subr.mxu0 0.0
    %4023 = vmatpush1.msra.mxu0 0.0
    %4024 = vmatprep.subr.mxu0 0.0
    %4025 = vmatpush1.msra.mxu0 0.0
    %4026 = vmatprep.subr.mxu0 0.0
    %4027 = vmatpush1.msra.mxu0 0.0
    %4028 = vmatprep.subr.mxu0 0.0
    %4029 = vmatpush1.msra.mxu0 0.0
    %4030 = vmatprep.subr.mxu0 0.0
    %4031 = vmatpush1.msra.mxu0 0.0
    %4032 = vmatprep.subr.mxu0 0.0
    %4033 = vmatpush1.msra.mxu0 0.0
    %4034 = vmatprep.subr.mxu0 0.0
    %4035 = vmatpush1.msra.mxu0 0.0
    %4036 = vmatprep.subr.mxu0 0.0
    %4037 = vmatpush1.msra.mxu0 0.0
    %4038 = vmatprep.subr.mxu0 0.0
    %4039 = vmatpush1.msra.mxu0 0.0
    %4040 = vmatprep.subr.mxu0 0.0
    %4041 = vmatpush1.msra.mxu0 0.0
    %4042 = vmatprep.subr.mxu0 0.0
    %4043 = vmatpush1.msra.mxu0 0.0
    %4044 = vmatprep.subr.mxu0 0.0
    %4045 = vmatpush1.msra.mxu0 0.0
    %4046 = vmatprep.subr.mxu0 0.0
    %4047 = vmatpush1.msra.mxu0 0.0
    %4048 = vmatprep.subr.mxu0 0.0
    %4049 = vmatpush1.msra.mxu0 0.0
    %4050 = vmatprep.subr.mxu0 0.0
    %4051 = vmatpush1.msra.mxu0 0.0
    %4052 = vmatprep.subr.mxu0 0.0
    %4053 = vmatpush1.msra.mxu0 0.0
    %4054 = vmatprep.subr.mxu0 0.0
    %4055 = vmatpush1.msra.mxu0 0.0
    %4056 = vmatprep.subr.mxu0 0.0
    %4057 = vmatpush1.msra.mxu0 0.0
    %4058 = vmatprep.subr.mxu0 0.0
    %4059 = vmatpush1.msra.mxu0 0.0
    %4060 = vmatprep.subr.mxu0 0.0
    %4061 = vmatpush1.msra.mxu0 0.0
    %4062 = vmatprep.subr.mxu0 0.0
    %4063 = vmatpush1.msra.mxu0 0.0
    %4064 = vmatprep.subr.mxu0 0.0
    %4065 = vmatpush1.msra.mxu0 0.0
    %4066 = vmatprep.subr.mxu0 0.0
    %4067 = vmatpush1.msra.mxu0 0.0
    %4068 = vmatprep.subr.mxu0 0.0
    %4069 = vmatpush1.msra.mxu0 0.0
    %4070 = vmatprep.subr.mxu0 0.0
    %4071 = vmatpush1.msra.mxu0 0.0
    %4072 = vmatprep.subr.mxu0 0.0
    %4073 = vmatpush1.msra.mxu0 0.0
    %4074 = vmatprep.subr.mxu0 0.0
    %4075 = vmatpush1.msra.mxu0 0.0
    %4076 = vmatprep.subr.mxu0 0.0
    %4077 = vmatpush1.msra.mxu0 0.0
    %4078 = vmatprep.subr.mxu0 0.0
    %4079 = vmatpush1.msra.mxu0 0.0
    %4080 = vmatprep.mubr.f32.mxu0 0.0
    %4081 = vmatmul.mubr.f32.gmra.mrb[0].mxu0 %v4011
    %v4082 = vpop.f32.mrb[0].mxu0
    %v4083 = vadd.f32 0.0, %v4082
    %v4084 = vpop.f32.mrb[0].mxu0
    %4085 = vmatprep.mubr.f32.mxu0 0.0
    %4086 = vmatmul.mubr.f32.gmra.mrb[0].mxu0 %v4014
    %v4087 = vpop.f32.mrb[0].mxu0
    %v4088 = vadd.f32 0.0, %v4087
    %v4089 = vpop.f32.mrb[0].mxu0
    %4090 = vdwg.mxu0
    %v4091 = vadd.f32 %v3678, %v4083
    %v4092 = vadd.f32 %v3679, %v4088
    %v4093 = vadd.f32 %v2216, %v4091
    %v4094 = vadd.f32 %v2217, %v4092
    %v4095 = vadd.f32 %v4093, %v1948
    %v4096 = vadd.f32 %v4094, %v1948
    %v4097 = vsel %vm60, %v4095, 0.0
    %4098 = vadd.xlane.f32.xlu0 %v4097
    %v4099 = vpop.xlane.xlu0 %4098
    %v4100 = vsel %vm60, %v4096, 0.0
    %4101 = vadd.xlane.f32.xlu0 %v4100
    %v4102 = vpop.xlane.xlu0 %4101
    %v4103 = vmul.f32 %v4099, %v1957
    %v4104 = vmul.f32 %v4102, %v1957
    %v4105 = vsub.f32 %v4095, %v4103
    %v4106 = vsub.f32 %v4096, %v4104
    %v4107 = vmul.f32 %v4105, %v4105
    %v4108 = vmul.f32 %v4106, %v4106
    %v4109 = vsel %vm60, %v4107, 0.0
    %4110 = vadd.xlane.f32.xlu0 %v4109
    %v4111 = vpop.xlane.xlu0 %4110
    %v4112 = vsel %vm60, %v4108, 0.0
    %4113 = vadd.xlane.f32.xlu0 %v4112
    %v4114 = vpop.xlane.xlu0 %4113
    %v4115 = vmul.f32 %v4111, %v1957
    %v4116 = vmul.f32 %v4114, %v1957
    %v4117 = vadd.f32 %v4115, 1e-05
    %v4118 = vadd.f32 %v4116, 1e-05
    %v4119 = vrsqrt.pop %v4117
    %v4120 = vrsqrt.pop %v4118
    %v4121 = vmul.f32 %v4105, %v4119
    %v4122 = vmul.f32 %v4106, %v4120
    %v4123 = vlaneseq
    %v4124 = vshrl.u32 %v4123, 7
    %v4125 = vsub.s32 1, %v4124
    %v4126 = vrot.slane %v2219, %v4125
    %v4127 = vmul.f32 %v4121, %v4126
    %v4128 = vmul.f32 %v4122, %v4126
    %v4129 = vlaneseq
    %v4130 = vshrl.u32 %v4129, 7
    %v4131 = vsub.s32 2, %v4130
    %v4132 = vrot.slane %v2219, %v4131
    %v4133 = vadd.f32 %v4127, %v4132
    %v4134 = vadd.f32 %v4128, %v4132
    %s4135 = scalar_lea.vmem %s6, 32
    %v4136 = vld [vmem:[%s4135] sm:$0xff]
    %v4137 = vld [vmem:[%s4135 + $0x8] sm:$0xff]
    %v4138 = vld [vmem:[%s4135 + $0x10] sm:$0xff]
    %v4139 = vld [vmem:[%s4135 + $0x18] sm:$0xff]
    %s4140 = scalar_lea.vmem %s7, 1
    %v4141 = vld [vmem:[%s4140] sm:$0x1]
    %v4143 = vlaneseq
    %v4144 = vshrl.u32 %v4143, 7
    %v4145 = vsub.s32 0, %v4144
    %v4146 = vrot.slane %v4141, %v4145
    %v4149 = vsel %vm60, %v4133, 0
    %v4152 = vsel %vm60, %v4134, 0
    %4154 = vmatprep.subr.mxu0 0.0
    %4155 = vmatpush1.msra.mxu0 %v4136
    %4156 = vmatprep.subr.mxu0 0.0
    %4157 = vmatpush1.msra.mxu0 %v4137
    %4158 = vmatprep.subr.mxu0 0.0
    %4159 = vmatpush1.msra.mxu0 %v4138
    %4160 = vmatprep.subr.mxu0 0.0
    %4161 = vmatpush1.msra.mxu0 %v4139
    %4162 = vmatprep.subr.mxu0 0.0
    %4163 = vmatpush1.msra.mxu0 0.0
    %4164 = vmatprep.subr.mxu0 0.0
    %4165 = vmatpush1.msra.mxu0 0.0
    %4166 = vmatprep.subr.mxu0 0.0
    %4167 = vmatpush1.msra.mxu0 0.0
    %4168 = vmatprep.subr.mxu0 0.0
    %4169 = vmatpush1.msra.mxu0 0.0
    %4170 = vmatprep.subr.mxu0 0.0
    %4171 = vmatpush1.msra.mxu0 0.0
    %4172 = vmatprep.subr.mxu0 0.0
    %4173 = vmatpush1.msra.mxu0 0.0
    %4174 = vmatprep.subr.mxu0 0.0
    %4175 = vmatpush1.msra.mxu0 0.0
    %4176 = vmatprep.subr.mxu0 0.0
    %4177 = vmatpush1.msra.mxu0 0.0
    %4178 = vmatprep.subr.mxu0 0.0
    %4179 = vmatpush1.msra.mxu0 0.0
    %4180 = vmatprep.subr.mxu0 0.0
    %4181 = vmatpush1.msra.mxu0 0.0
    %4182 = vmatprep.subr.mxu0 0.0
    %4183 = vmatpush1.msra.mxu0 0.0
    %4184 = vmatprep.subr.mxu0 0.0
    %4185 = vmatpush1.msra.mxu0 0.0
    %4186 = vmatprep.subr.mxu0 0.0
    %4187 = vmatpush1.msra.mxu0 0.0
    %4188 = vmatprep.subr.mxu0 0.0
    %4189 = vmatpush1.msra.mxu0 0.0
    %4190 = vmatprep.subr.mxu0 0.0
    %4191 = vmatpush1.msra.mxu0 0.0
    %4192 = vmatprep.subr.mxu0 0.0
    %4193 = vmatpush1.msra.mxu0 0.0
    %4194 = vmatprep.subr.mxu0 0.0
    %4195 = vmatpush1.msra.mxu0 0.0
    %4196 = vmatprep.subr.mxu0 0.0
    %4197 = vmatpush1.msra.mxu0 0.0
    %4198 = vmatprep.subr.mxu0 0.0
    %4199 = vmatpush1.msra.mxu0 0.0
    %4200 = vmatprep.subr.mxu0 0.0
    %4201 = vmatpush1.msra.mxu0 0.0
    %4202 = vmatprep.subr.mxu0 0.0
    %4203 = vmatpush1.msra.mxu0 0.0
    %4204 = vmatprep.subr.mxu0 0.0
    %4205 = vmatpush1.msra.mxu0 0.0
    %4206 = vmatprep.subr.mxu0 0.0
    %4207 = vmatpush1.msra.mxu0 0.0
    %4208 = vmatprep.subr.mxu0 0.0
    %4209 = vmatpush1.msra.mxu0 0.0
    %4210 = vmatprep.subr.mxu0 0.0
    %4211 = vmatpush1.msra.mxu0 0.0
    %4212 = vmatprep.subr.mxu0 0.0
    %4213 = vmatpush1.msra.mxu0 0.0
    %4214 = vmatprep.subr.mxu0 0.0
    %4215 = vmatpush1.msra.mxu0 0.0
    %4216 = vmatprep.subr.mxu0 0.0
    %4217 = vmatpush1.msra.mxu0 0.0
    %4218 = vmatprep.mubr.f32.mxu0 0.0
    %4219 = vmatmul.mubr.f32.gmra.mrb[0].mxu0 %v4149
    %v4220 = vpop.f32.mrb[0].mxu0
    %v4221 = vadd.f32 %v4146, %v4220
    %v4222 = vpop.f32.mrb[0].mxu0
    %4223 = vmatprep.mubr.f32.mxu0 0.0
    %4224 = vmatmul.mubr.f32.gmra.mrb[0].mxu0 %v4152
    %v4225 = vpop.f32.mrb[0].mxu0
    %v4226 = vadd.f32 %v4146, %v4225
    %v4227 = vpop.f32.mrb[0].mxu0
    %4228 = vdwg.mxu0
    %v4229 = vmax.f32 %v4221, 0.0
    %v4230 = vmax.f32 %v4226, 0.0
    %s4231 = scalar_lea.vmem %s8, 64
    %v4232 = vld [vmem:[%s4231] sm:$0xff]
    %v4233 = vld [vmem:[%s4231 + $0x8] sm:$0xff]
    %v4234 = vld [vmem:[%s4231 + $0x10] sm:$0xff]
    %v4235 = vld [vmem:[%s4231 + $0x18] sm:$0xff]
    %v4236 = vld [vmem:[%s4231 + $0x20] sm:$0xff]
    %v4237 = vld [vmem:[%s4231 + $0x28] sm:$0xff]
    %v4238 = vld [vmem:[%s4231 + $0x30] sm:$0xff]
    %v4239 = vld [vmem:[%s4231 + $0x38] sm:$0xff]
    %v4240 = vlaneseq
    %v4241 = vshrl.u32 %v4240, 7
    %v4242 = vsub.s32 0, %v4241
    %v4243 = vrot.slane %v2219, %v4242
    %v4245 = vsel %vm2096, %v4229, 0
    %v4248 = vsel %vm2096, %v4230, 0
    %4250 = vmatprep.subr.mxu0 0.0
    %4251 = vmatpush1.msra.mxu0 %v4232
    %4252 = vmatprep.subr.mxu0 0.0
    %4253 = vmatpush1.msra.mxu0 %v4233
    %4254 = vmatprep.subr.mxu0 0.0
    %4255 = vmatpush1.msra.mxu0 %v4234
    %4256 = vmatprep.subr.mxu0 0.0
    %4257 = vmatpush1.msra.mxu0 %v4235
    %4258 = vmatprep.subr.mxu0 0.0
    %4259 = vmatpush1.msra.mxu0 %v4236
    %4260 = vmatprep.subr.mxu0 0.0
    %4261 = vmatpush1.msra.mxu0 %v4237
    %4262 = vmatprep.subr.mxu0 0.0
    %4263 = vmatpush1.msra.mxu0 %v4238
    %4264 = vmatprep.subr.mxu0 0.0
    %4265 = vmatpush1.msra.mxu0 %v4239
    %4266 = vmatprep.subr.mxu0 0.0
    %4267 = vmatpush1.msra.mxu0 0.0
    %4268 = vmatprep.subr.mxu0 0.0
    %4269 = vmatpush1.msra.mxu0 0.0
    %4270 = vmatprep.subr.mxu0 0.0
    %4271 = vmatpush1.msra.mxu0 0.0
    %4272 = vmatprep.subr.mxu0 0.0
    %4273 = vmatpush1.msra.mxu0 0.0
    %4274 = vmatprep.subr.mxu0 0.0
    %4275 = vmatpush1.msra.mxu0 0.0
    %4276 = vmatprep.subr.mxu0 0.0
    %4277 = vmatpush1.msra.mxu0 0.0
    %4278 = vmatprep.subr.mxu0 0.0
    %4279 = vmatpush1.msra.mxu0 0.0
    %4280 = vmatprep.subr.mxu0 0.0
    %4281 = vmatpush1.msra.mxu0 0.0
    %4282 = vmatprep.subr.mxu0 0.0
    %4283 = vmatpush1.msra.mxu0 0.0
    %4284 = vmatprep.subr.mxu0 0.0
    %4285 = vmatpush1.msra.mxu0 0.0
    %4286 = vmatprep.subr.mxu0 0.0
    %4287 = vmatpush1.msra.mxu0 0.0
    %4288 = vmatprep.subr.mxu0 0.0
    %4289 = vmatpush1.msra.mxu0 0.0
    %4290 = vmatprep.subr.mxu0 0.0
    %4291 = vmatpush1.msra.mxu0 0.0
    %4292 = vmatprep.subr.mxu0 0.0
    %4293 = vmatpush1.msra.mxu0 0.0
    %4294 = vmatprep.subr.mxu0 0.0
    %4295 = vmatpush1.msra.mxu0 0.0
    %4296 = vmatprep.subr.mxu0 0.0
    %4297 = vmatpush1.msra.mxu0 0.0
    %4298 = vmatprep.subr.mxu0 0.0
    %4299 = vmatpush1.msra.mxu0 0.0
    %4300 = vmatprep.subr.mxu0 0.0
    %4301 = vmatpush1.msra.mxu0 0.0
    %4302 = vmatprep.subr.mxu0 0.0
    %4303 = vmatpush1.msra.mxu0 0.0
    %4304 = vmatprep.subr.mxu0 0.0
    %4305 = vmatpush1.msra.mxu0 0.0
    %4306 = vmatprep.subr.mxu0 0.0
    %4307 = vmatpush1.msra.mxu0 0.0
    %4308 = vmatprep.subr.mxu0 0.0
    %4309 = vmatpush1.msra.mxu0 0.0
    %4310 = vmatprep.subr.mxu0 0.0
    %4311 = vmatpush1.msra.mxu0 0.0
    %4312 = vmatprep.subr.mxu0 0.0
    %4313 = vmatpush1.msra.mxu0 0.0
    %4314 = vmatprep.mubr.f32.mxu0 0.0
    %4315 = vmatmul.mubr.f32.gmra.mrb[0].mxu0 %v4245
    %v4316 = vpop.f32.mrb[0].mxu0
    %v4317 = vadd.f32 %v4243, %v4316
    %v4318 = vpop.f32.mrb[0].mxu0
    %4319 = vmatprep.mubr.f32.mxu0 0.0
    %4320 = vmatmul.mubr.f32.gmra.mrb[0].mxu0 %v4248
    %v4321 = vpop.f32.mrb[0].mxu0
    %v4322 = vadd.f32 %v4243, %v4321
    %v4323 = vpop.f32.mrb[0].mxu0
    %4324 = vdwg.mxu0
    %v4325 = vadd.f32 %v4133, %v4317
    %v4326 = vadd.f32 %v4134, %v4322
    %v4327 = vsel %vm60, %v4325, 0.0
    %4328 = vadd.xlane.f32.xlu0 %v4327
    %v4329 = vpop.xlane.xlu0 %4328
    %v4330 = vsel %vm60, %v4326, 0.0
    %4331 = vadd.xlane.f32.xlu0 %v4330
    %v4332 = vpop.xlane.xlu0 %4331
    %v4333 = vmul.f32 %v4329, %v1957
    %v4334 = vmul.f32 %v4332, %v1957
    %v4335 = vsub.f32 %v4325, %v4333
    %v4336 = vsub.f32 %v4326, %v4334
    %v4337 = vmul.f32 %v4335, %v4335
    %v4338 = vmul.f32 %v4336, %v4336
    %v4339 = vsel %vm60, %v4337, 0.0
    %4340 = vadd.xlane.f32.xlu0 %v4339
    %v4341 = vpop.xlane.xlu0 %4340
    %v4342 = vsel %vm60, %v4338, 0.0
    %4343 = vadd.xlane.f32.xlu0 %v4342
    %v4344 = vpop.xlane.xlu0 %4343
    %v4345 = vmul.f32 %v4341, %v1957
    %v4346 = vmul.f32 %v4344, %v1957
    %v4347 = vadd.f32 %v4345, 1e-05
    %v4348 = vadd.f32 %v4346, 1e-05
    %v4349 = vrsqrt.pop %v4347
    %v4350 = vrsqrt.pop %v4348
    %v4351 = vmul.f32 %v4335, %v4349
    %v4352 = vmul.f32 %v4336, %v4350
    %v4353 = vlaneseq
    %v4354 = vshrl.u32 %v4353, 7
    %v4355 = vsub.s32 3, %v4354
    %v4356 = vrot.slane %v2219, %v4355
    %v4357 = vmul.f32 %v4351, %v4356
    %v4358 = vmul.f32 %v4352, %v4356
    %v4359 = vlaneseq
    %v4360 = vshrl.u32 %v4359, 7
    %v4361 = vsub.s32 4, %v4360
    %v4362 = vrot.slane %v2219, %v4361
    %v4363 = vadd.f32 %v4357, %v4362
    %v4364 = vadd.f32 %v4358, %v4362
    %4365 = vst.msk [vmem:[#allocation2] sm:$0xff] %vm60, %v4363
    %4366 = vst.msk [vmem:[#allocation2 + $0x8] sm:$0xff] %vm60, %v4364
    // Predicated region
    $region42: #{tpu_custom_call.1} parent=1 // pred_check
      _
    $region43: #{tpu_custom_call.1} parent=1 // pred_check_branch
      %4368 = sbr.rel (0) target = $region45
    $region44: #{tpu_custom_call.1} parent=1 // pred_region
      %s4370 = ssub.s32 256, 256
      %4371 = vsyncadd [#allocation3], %s4370
      %s4372 = sshll.u32 [#allocation2], 4
      %s4373 = int_to_ptr.vmem [resolvable:$true] %s4372
      %4378 = dma.vmem_to_hbm [thread:$0]  %s4373, 256, %s10, [#allocation3], 128, 128, 8
    $region45: #{tpu_custom_call.1} parent=1 // pred_fallthru
      _
    // Predicated region
    $region46: #{tpu_custom_call.1} parent=1 // pred_check
      _
    $region47: #{tpu_custom_call.1} parent=1 // pred_check_branch
      %4380 = sbr.rel (0) target = $region49
    $region48: #{tpu_custom_call.1} parent=1 // pred_region
      %4381 = dma.done [#allocation3], 256
    $region49: #{tpu_custom_call.1} parent=1 // pred_fallthru
      _
    %4382 = vsyncpa [#allocation3], 1

</llo_original>
